<compile_context>
chip_gen: v7x
topology: tpu7x:2x2x1
jax: 0.10.0
libtpu: 0.0.40
codegen_flags: <defaults>
</compile_context>

<pallas_src>
import jax
import jax.numpy as jnp
from jax.experimental import pallas as pl
from jax.experimental.pallas import tpu as pltpu

# ---------------- problem sizes (small, consistent with the module) -------------
B = 2            # batch
S1 = 8           # MAX_SENTENCE1_LENGTH
S2 = 12          # MAX_SENTENCE2_LENGTH  (>= S1)
E = 32           # emb_size
H = 32           # hidden_size
FC = 16          # fc_dim
C = 3            # num_classes
VOCAB = 50

NDIR = 4         # interleaved streams: s1-fwd, s1-bwd, s2-fwd, s2-bwd
BP = 8           # batch rows padded to one sublane group
OUTP = 128       # lane-dense padded output width


# ------------------------------- Pallas kernel ----------------------------------
def encoder_kernel(x_ref, mask_ref, h0_ref, wih_ref, bih_ref, whh_ref, bhn_ref,
                   fc1w_ref, fc1b_ref, fc2w_ref, fc2b_ref, out_ref):
    G = NDIR * H                                   # 128: one gate slab (4 streams)

    # Input projection for ALL steps / streams / gates: one wide matmul.
    # bih already contains b_ih plus the folded r/z parts of b_hh.
    gx_all = (jnp.dot(x_ref[...], wih_ref[...], preferred_element_type=jnp.float32)
              + bih_ref[...])                      # (S2*BP, 3G)

    # Loop-invariants hoisted out of the unrolled recurrence.
    whh = whh_ref[...]                             # (G, 3G) block-diagonal recurrent weight
    bhn = jnp.broadcast_to(bhn_ref[...], (BP, G))  # n-gate hidden bias, broadcast once

    h = h0_ref[...]                                # (BP, G) = [s1f | s1b | s2f | s2b]
    for i in range(S2):                            # 12 dependent steps, static unroll
        gx = gx_all[i * BP:(i + 1) * BP, :]        # (BP, 3G), sublane-aligned slab
        gh = jnp.dot(h, whh, preferred_element_type=jnp.float32)        # (BP, 3G)
        # sigmoid via single-EUP tanh identity; r|z slabs are 128-lane aligned
        rz = 0.5 * jnp.tanh(0.5 * (gx[:, :2 * G] + gh[:, :2 * G])) + 0.5
        r, z = rz[:, :G], rz[:, G:]
        n = jnp.tanh(gx[:, 2 * G:] + r * (gh[:, 2 * G:] + bhn))
        h_new = (1.0 - z) * n + z * h
        m = mask_ref[i * BP:(i + 1) * BP, :]       # (BP, G) precomputed length mask
        h = jnp.where(m != 0.0, h_new, h)          # packed-sequence state freeze

    hn1 = h[:, :H] + h[:, H:2 * H]                 # sentence1: fwd + bwd  (torch.sum dim=0)
    hn2 = h[:, 2 * H:3 * H] + h[:, 3 * H:]         # sentence2: fwd + bwd
    feat = hn1 * hn2                               # element-wise product (BP, H)

    # fc_layer: Linear -> ReLU -> Dropout(identity in eval) -> Linear (lane-dense output)
    hfc = jnp.maximum(
        jnp.dot(feat, fc1w_ref[...], preferred_element_type=jnp.float32) + fc1b_ref[...],
        0.0)
    out_ref[...] = (jnp.dot(hfc, fc2w_ref[...], preferred_element_type=jnp.float32)
                    + fc2b_ref[...])


def rnn_encoder_element_wise(embed1, embed2, lengths1, lengths2, h01, h02, kparams):
    """embed{1,2}: (B, S, E) float32; lengths: (B,) int; h0{1,2}: (2, B, H)."""
    (wih, bih, whh, bhn, fc1w, fc1b, fc2w, fc2b) = kparams
    assert S1 <= S2
    G = NDIR * H

    # Per-step input slab: [e1 fwd | e1 time-reversed | e2 fwd | e2 time-reversed].
    # Backward streams use the time-reversed sequence; padded / out-of-length steps
    # are handled purely by the mask table, so the final backward state equals a
    # t = L-1 .. 0 scan exactly as torch's packed sequences do.
    e1p = jnp.pad(embed1, ((0, 0), (0, S2 - S1), (0, 0)))                  # (B, S2, E)
    x = jnp.concatenate([e1p, jnp.flip(e1p, axis=1),
                         embed2, jnp.flip(embed2, axis=1)], axis=-1)       # (B, S2, 4E)
    x = jnp.transpose(x, (1, 0, 2))                                        # (S2, B, 4E)
    x = jnp.pad(x, ((0, 0), (0, BP - B), (0, 0))).reshape(S2 * BP, NDIR * E)

    # Precomputed packed-sequence masks: one 128-lane slab per step.
    steps = jnp.arange(S2, dtype=jnp.int32)
    rsteps = (S2 - 1) - steps
    l1 = lengths1.astype(jnp.int32)
    l2 = lengths2.astype(jnp.int32)

    def dmask(idx, lens_):
        m = (idx[:, None] < lens_[None, :]).astype(jnp.float32)            # (S2, B)
        return jnp.broadcast_to(m[:, :, None], (S2, B, H))

    mask = jnp.concatenate([dmask(steps, l1), dmask(rsteps, l1),
                            dmask(steps, l2), dmask(rsteps, l2)], axis=-1)  # (S2, B, 4H)
    mask = jnp.pad(mask, ((0, 0), (0, BP - B), (0, 0))).reshape(S2 * BP, G)

    # Stacked initial state [s1 fwd | s1 bwd | s2 fwd | s2 bwd], rows padded to 8.
    h0 = jnp.concatenate([h01[0], h01[1], h02[0], h02[1]], axis=1)         # (B, 4H)
    h0 = jnp.pad(h0, ((0, BP - B), (0, 0)))                                # (BP, 4H)

    def full(shape):
        return pl.BlockSpec(shape, lambda i, _n=len(shape): (0,) * _n)

    out = pl.pallas_call(
        encoder_kernel,
        out_shape=jax.ShapeDtypeStruct((BP, OUTP), jnp.float32),
        grid=(1,),  # whole problem in a single program: overhead/latency bound at this size
        in_specs=[
            full((S2 * BP, NDIR * E)),       # x
            full((S2 * BP, G)),              # mask
            full((BP, G)),                   # h0
            full((NDIR * E, 3 * G)),         # wih (block-diagonal, gate-slab packed)
            full((1, 3 * G)),                # bih (+ folded r/z hidden biases)
            full((G, 3 * G)),                # whh (block-diagonal)
            full((1, G)),                    # b_hn (n-gate hidden bias)
            full((H, FC)), full((1, FC)),    # fc1
            full((FC, OUTP)), full((1, OUTP)),  # fc2 (lane-dense padded)
        ],
        out_specs=full((BP, OUTP)),
        compiler_params=pltpu.CompilerParams(dimension_semantics=("arbitrary",)),
    )(x, mask, h0, wih, bih, whh, bhn, fc1w, fc1b, fc2w, fc2b)
    return out[:B, :C]


# -------------------------- weight packing for the kernel -------------------------
def pack_kernel_params(rnn1_f, rnn1_b, rnn2_f, rnn2_b, fc1w_t, fc1b_t, fc2w_t, fc2b_t):
    """Interleaved block-diagonal weights. Stream order d = 0:s1-fwd, 1:s1-bwd,
    2:s2-fwd, 3:s2-bwd (matches the kernel state layout). Gate columns packed as
    [r(4H) | z(4H) | n(4H)] -> 128-lane aligned slabs."""
    dirs = (rnn1_f, rnn1_b, rnn2_f, rnn2_b)
    G = NDIR * H
    wih = jnp.zeros((NDIR * E, 3 * G), jnp.float32)
    whh = jnp.zeros((G, 3 * G), jnp.float32)
    bih = jnp.zeros((3 * G,), jnp.float32)
    bhn = jnp.zeros((G,), jnp.float32)
    for d, (w_ih, w_hh, b_ih, b_hh) in enumerate(dirs):
        for g in range(3):
            cs = g * G + d * H
            wih = wih.at[d * E:(d + 1) * E, cs:cs + H].set(w_ih[g * H:(g + 1) * H, :].T)
            whh = whh.at[d * H:(d + 1) * H, cs:cs + H].set(w_hh[g * H:(g + 1) * H, :].T)
            b = b_ih[g * H:(g + 1) * H]
            if g < 2:                        # fold b_hr / b_hz into the input-side bias
                b = b + b_hh[g * H:(g + 1) * H]
            bih = bih.at[cs:cs + H].set(b)
        bhn = bhn.at[d * H:(d + 1) * H].set(b_hh[2 * H:3 * H])   # n-gate hidden bias

    fc2w = jnp.zeros((FC, OUTP), jnp.float32).at[:, :C].set(fc2w_t.T)
    fc2b = jnp.zeros((1, OUTP), jnp.float32).at[0, :C].set(fc2b_t)
    return (wih, bih[None, :], whh, bhn[None, :],
            fc1w_t.T, fc1b_t[None, :], fc2w, fc2b)


# ------------------------------ pure-JAX reference -------------------------------
def _sigmoid(x):
    return 1.0 / (1.0 + jnp.exp(-x))


def gru_cell_ref(x, h, w_ih, w_hh, b_ih, b_hh):
    # torch GRU cell, weights in torch layout: w_ih (3H, E), w_hh (3H, H), gate order r,z,n
    gx = x @ w_ih.T + b_ih
    gh = h @ w_hh.T + b_hh
    r = _sigmoid(gx[:H] + gh[:H])
    z = _sigmoid(gx[H:2 * H] + gh[H:2 * H])
    n = jnp.tanh(gx[2 * H:] + r * gh[2 * H:])
    return (1.0 - z) * n + z * h


def bidir_final_hidden_ref(embed, lengths, h0, params_f, params_b):
    # embed: (B, S, E); h0: (2, B, H). Packed-sequence semantics per sample.
    outs = []
    for b in range(embed.shape[0]):
        L = int(lengths[b])
        hf = h0[0, b]
        for t in range(L):
            hf = gru_cell_ref(embed[b, t], hf, *params_f)
        hb = h0[1, b]
        for t in range(L - 1, -1, -1):
            hb = gru_cell_ref(embed[b, t], hb, *params_b)
        outs.append(hf + hb)          # torch.sum over direction dim
    return jnp.stack(outs)            # (B, H)


def reference_forward(embed1, embed2, lengths1, lengths2, h01, h02, tp):
    hn1 = bidir_final_hidden_ref(embed1, lengths1, h01, tp["rnn1_f"], tp["rnn1_b"])
    hn2 = bidir_final_hidden_ref(embed2, lengths2, h02, tp["rnn2_f"], tp["rnn2_b"])
    feat = hn1 * hn2
    hfc = jnp.maximum(feat @ tp["fc1w"].T + tp["fc1b"], 0.0)
    return hfc @ tp["fc2w"].T + tp["fc2b"]


# ------------------------------------ main ---------------------------------------
if __name__ == "__main__":
    key = jax.random.PRNGKey(0)
    ks = iter(jax.random.split(key, 28))
    nk = lambda: next(ks)

    # "pretrained" embedding table (stand-in for id2vector), deterministic.
    emb_table = jax.random.normal(nk(), (VOCAB, E), jnp.float32) * 0.1

    def gru_dir_params(scale=0.1):
        return (jax.random.normal(nk(), (3 * H, E), jnp.float32) * scale,   # w_ih
                jax.random.normal(nk(), (3 * H, H), jnp.float32) * scale,   # w_hh
                jax.random.normal(nk(), (3 * H,), jnp.float32) * scale,     # b_ih
                jax.random.normal(nk(), (3 * H,), jnp.float32) * scale)     # b_hh

    rnn1_f = gru_dir_params()
    rnn1_b = gru_dir_params()
    rnn2_f = gru_dir_params()
    rnn2_b = gru_dir_params()

    fc1w = jax.random.normal(nk(), (FC, H), jnp.float32) * 0.1   # torch Linear (Out, In)
    fc1b = jax.random.normal(nk(), (FC,), jnp.float32) * 0.1
    fc2w = jax.random.normal(nk(), (C, FC), jnp.float32) * 0.1
    fc2b = jax.random.normal(nk(), (C,), jnp.float32) * 0.1

    # init_hidden(): torch.randn each forward — modeled as explicit deterministic h0.
    h0_1 = jax.random.normal(nk(), (2, B, H), jnp.float32)
    h0_2 = jax.random.normal(nk(), (2, B, H), jnp.float32)

    # Token ids, lengths, embedding lookup (glue, plain JAX gather).
    x1 = jax.random.randint(nk(), (B, S1), 0, VOCAB)
    x2 = jax.random.randint(nk(), (B, S2), 0, VOCAB)
    lengths1 = jnp.array([S1, 5], jnp.int32)
    lengths2 = jnp.array([S2, 7], jnp.int32)
    embed1 = emb_table[x1]                                    # (B, S1, E)
    embed2 = emb_table[x2]                                    # (B, S2, E)

    # Kernel-layout params (interleaved block-diagonal packing).
    kparams = pack_kernel_params(rnn1_f, rnn1_b, rnn2_f, rnn2_b,
                                 fc1w, fc1b, fc2w, fc2b)

    logits = rnn_encoder_element_wise(embed1, embed2, lengths1, lengths2,
                                      h0_1, h0_2, kparams)
    logits = jax.block_until_ready(logits)

    torch_params = {"rnn1_f": rnn1_f, "rnn1_b": rnn1_b,
                    "rnn2_f": rnn2_f, "rnn2_b": rnn2_b,
                    "fc1w": fc1w, "fc1b": fc1b, "fc2w": fc2w, "fc2b": fc2b}
    ref = reference_forward(embed1, embed2, lengths1, lengths2, h0_1, h0_2, torch_params)

    assert logits.shape == (B, C)
    assert jnp.allclose(logits, ref, atol=1e-3, rtol=1e-3), (logits, ref)

    # TODO(synk): Dropout in fc_layer is inference-mode identity (training RNG mask not modeled).
    print("KERNEL_OK")
</pallas_src>

<mosaic_0001>
module attributes {stable_mosaic.version = 11 : i64} {
  func.func @encoder_kernel(%arg0: i32, %arg1: memref<96x128xf32, #tpu.memory_space<vmem>>, %arg2: memref<96x128xf32, #tpu.memory_space<vmem>>, %arg3: memref<8x128xf32, #tpu.memory_space<vmem>>, %arg4: memref<128x384xf32, #tpu.memory_space<vmem>>, %arg5: memref<1x384xf32, #tpu.memory_space<vmem>>, %arg6: memref<128x384xf32, #tpu.memory_space<vmem>>, %arg7: memref<1x128xf32, #tpu.memory_space<vmem>>, %arg8: memref<32x16xf32, #tpu.memory_space<vmem>>, %arg9: memref<1x16xf32, #tpu.memory_space<vmem>>, %arg10: memref<16x128xf32, #tpu.memory_space<vmem>>, %arg11: memref<1x128xf32, #tpu.memory_space<vmem>>, %arg12: memref<8x128xf32, #tpu.memory_space<vmem>>) attributes {dimension_semantics = [#tpu.dimension_semantics<arbitrary>], iteration_bounds = array<i64: 1>, scalar_prefetch = 0 : i64, scratch_operands = 0 : i64, tpu.core_type = #tpu.core_type<tc>, window_params = [{pipeline_mode = #tpu.pipeline_mode<synchronous>, transform_indices = @transform_0, window_bounds = array<i64: 96, 128>}, {pipeline_mode = #tpu.pipeline_mode<synchronous>, transform_indices = @transform_1, window_bounds = array<i64: 96, 128>}, {pipeline_mode = #tpu.pipeline_mode<synchronous>, transform_indices = @transform_2, window_bounds = array<i64: 8, 128>}, {pipeline_mode = #tpu.pipeline_mode<synchronous>, transform_indices = @transform_3, window_bounds = array<i64: 128, 384>}, {pipeline_mode = #tpu.pipeline_mode<synchronous>, transform_indices = @transform_4, window_bounds = array<i64: 1, 384>}, {pipeline_mode = #tpu.pipeline_mode<synchronous>, transform_indices = @transform_5, window_bounds = array<i64: 128, 384>}, {pipeline_mode = #tpu.pipeline_mode<synchronous>, transform_indices = @transform_6, window_bounds = array<i64: 1, 128>}, {pipeline_mode = #tpu.pipeline_mode<synchronous>, transform_indices = @transform_7, window_bounds = array<i64: 32, 16>}, {pipeline_mode = #tpu.pipeline_mode<synchronous>, transform_indices = @transform_8, window_bounds = array<i64: 1, 16>}, {pipeline_mode = #tpu.pipeline_mode<synchronous>, transform_indices = @transform_9, window_bounds = array<i64: 16, 128>}, {pipeline_mode = #tpu.pipeline_mode<synchronous>, transform_indices = @transform_10, window_bounds = array<i64: 1, 128>}, {pipeline_mode = #tpu.pipeline_mode<synchronous>, transform_indices = @transform_11, window_bounds = array<i64: 8, 128>}]} {
    %c0 = arith.constant 0 : index
    %c0_0 = arith.constant 0 : index
    %0 = vector.load %arg1[%c0, %c0_0] : memref<96x128xf32, #tpu.memory_space<vmem>>, vector<96x128xf32>
    %c0_1 = arith.constant 0 : index
    %c0_2 = arith.constant 0 : index
    %1 = vector.load %arg4[%c0_1, %c0_2] : memref<128x384xf32, #tpu.memory_space<vmem>>, vector<128x384xf32>
    %cst = arith.constant dense<0.000000e+00> : vector<96x384xf32>
    %2 = tpu.matmul %0, %1, %cst {dimension_numbers = #tpu.dot_dimension_numbers<[1], [0], [0], [1], [0, 0, 1, 1], [], []>} : vector<96x128xf32>, vector<128x384xf32>, vector<96x384xf32> -> vector<96x384xf32>
    %c0_3 = arith.constant 0 : index
    %c0_4 = arith.constant 0 : index
    %3 = vector.load %arg5[%c0_3, %c0_4] : memref<1x384xf32, #tpu.memory_space<vmem>>, vector<1x384xf32>
    %4 = vector.broadcast %3 : vector<1x384xf32> to vector<96x384xf32>
    %5 = arith.addf %2, %4 : vector<96x384xf32>
    %c0_5 = arith.constant 0 : index
    %c0_6 = arith.constant 0 : index
    %6 = vector.load %arg6[%c0_5, %c0_6] : memref<128x384xf32, #tpu.memory_space<vmem>>, vector<128x384xf32>
    %c0_7 = arith.constant 0 : index
    %c0_8 = arith.constant 0 : index
    %7 = vector.load %arg7[%c0_7, %c0_8] : memref<1x128xf32, #tpu.memory_space<vmem>>, vector<1x128xf32>
    %8 = vector.shape_cast %7 : vector<1x128xf32> to vector<1x128xf32>
    %9 = vector.broadcast %8 : vector<1x128xf32> to vector<8x128xf32>
    %c0_9 = arith.constant 0 : index
    %c0_10 = arith.constant 0 : index
    %10 = vector.load %arg3[%c0_9, %c0_10] : memref<8x128xf32, #tpu.memory_space<vmem>>, vector<8x128xf32>
    %11 = vector.extract_strided_slice %5 {offsets = [0, 0], sizes = [8, 384], strides = [1, 1]} : vector<96x384xf32> to vector<8x384xf32>
    %cst_11 = arith.constant dense<0.000000e+00> : vector<8x384xf32>
    %12 = tpu.matmul %10, %6, %cst_11 {dimension_numbers = #tpu.dot_dimension_numbers<[1], [0], [0], [1], [0, 0, 1, 1], [], []>} : vector<8x128xf32>, vector<128x384xf32>, vector<8x384xf32> -> vector<8x384xf32>
    %13 = vector.extract_strided_slice %11 {offsets = [0, 0], sizes = [8, 256], strides = [1, 1]} : vector<8x384xf32> to vector<8x256xf32>
    %14 = vector.extract_strided_slice %12 {offsets = [0, 0], sizes = [8, 256], strides = [1, 1]} : vector<8x384xf32> to vector<8x256xf32>
    %15 = arith.addf %13, %14 : vector<8x256xf32>
    %cst_12 = arith.constant 5.000000e-01 : f32
    %16 = vector.broadcast %cst_12 : f32 to vector<8x256xf32>
    %17 = arith.mulf %16, %15 : vector<8x256xf32>
    %18 = math.tanh %17 : vector<8x256xf32>
    %cst_13 = arith.constant 5.000000e-01 : f32
    %19 = vector.broadcast %cst_13 : f32 to vector<8x256xf32>
    %20 = arith.mulf %19, %18 : vector<8x256xf32>
    %cst_14 = arith.constant 5.000000e-01 : f32
    %21 = vector.broadcast %cst_14 : f32 to vector<8x256xf32>
    %22 = arith.addf %20, %21 : vector<8x256xf32>
    %23 = vector.extract_strided_slice %22 {offsets = [0, 0], sizes = [8, 128], strides = [1, 1]} : vector<8x256xf32> to vector<8x128xf32>
    %24 = vector.extract_strided_slice %22 {offsets = [0, 128], sizes = [8, 128], strides = [1, 1]} : vector<8x256xf32> to vector<8x128xf32>
    %25 = vector.extract_strided_slice %11 {offsets = [0, 256], sizes = [8, 128], strides = [1, 1]} : vector<8x384xf32> to vector<8x128xf32>
    %26 = vector.extract_strided_slice %12 {offsets = [0, 256], sizes = [8, 128], strides = [1, 1]} : vector<8x384xf32> to vector<8x128xf32>
    %27 = arith.addf %26, %9 : vector<8x128xf32>
    %28 = arith.mulf %23, %27 : vector<8x128xf32>
    %29 = arith.addf %25, %28 : vector<8x128xf32>
    %30 = math.tanh %29 : vector<8x128xf32>
    %cst_15 = arith.constant 1.000000e+00 : f32
    %31 = vector.broadcast %cst_15 : f32 to vector<8x128xf32>
    %32 = arith.subf %31, %24 : vector<8x128xf32>
    %33 = arith.mulf %32, %30 : vector<8x128xf32>
    %34 = arith.mulf %24, %10 : vector<8x128xf32>
    %35 = arith.addf %33, %34 : vector<8x128xf32>
    %c0_16 = arith.constant 0 : index
    %c0_17 = arith.constant 0 : index
    %36 = vector.load %arg2[%c0_16, %c0_17] : memref<96x128xf32, #tpu.memory_space<vmem>>, vector<8x128xf32>
    %cst_18 = arith.constant 0.000000e+00 : f32
    %37 = vector.broadcast %cst_18 : f32 to vector<8x128xf32>
    %38 = arith.cmpf one, %36, %37 : vector<8x128xf32>
    %39 = arith.select %38, %35, %10 : vector<8x128xi1>, vector<8x128xf32>
    %40 = vector.extract_strided_slice %5 {offsets = [8, 0], sizes = [8, 384], strides = [1, 1]} : vector<96x384xf32> to vector<8x384xf32>
    %cst_19 = arith.constant dense<0.000000e+00> : vector<8x384xf32>
    %41 = tpu.matmul %39, %6, %cst_19 {dimension_numbers = #tpu.dot_dimension_numbers<[1], [0], [0], [1], [0, 0, 1, 1], [], []>} : vector<8x128xf32>, vector<128x384xf32>, vector<8x384xf32> -> vector<8x384xf32>
    %42 = vector.extract_strided_slice %40 {offsets = [0, 0], sizes = [8, 256], strides = [1, 1]} : vector<8x384xf32> to vector<8x256xf32>
    %43 = vector.extract_strided_slice %41 {offsets = [0, 0], sizes = [8, 256], strides = [1, 1]} : vector<8x384xf32> to vector<8x256xf32>
    %44 = arith.addf %42, %43 : vector<8x256xf32>
    %cst_20 = arith.constant 5.000000e-01 : f32
    %45 = vector.broadcast %cst_20 : f32 to vector<8x256xf32>
    %46 = arith.mulf %45, %44 : vector<8x256xf32>
    %47 = math.tanh %46 : vector<8x256xf32>
    %cst_21 = arith.constant 5.000000e-01 : f32
    %48 = vector.broadcast %cst_21 : f32 to vector<8x256xf32>
    %49 = arith.mulf %48, %47 : vector<8x256xf32>
    %cst_22 = arith.constant 5.000000e-01 : f32
    %50 = vector.broadcast %cst_22 : f32 to vector<8x256xf32>
    %51 = arith.addf %49, %50 : vector<8x256xf32>
    %52 = vector.extract_strided_slice %51 {offsets = [0, 0], sizes = [8, 128], strides = [1, 1]} : vector<8x256xf32> to vector<8x128xf32>
    %53 = vector.extract_strided_slice %51 {offsets = [0, 128], sizes = [8, 128], strides = [1, 1]} : vector<8x256xf32> to vector<8x128xf32>
    %54 = vector.extract_strided_slice %40 {offsets = [0, 256], sizes = [8, 128], strides = [1, 1]} : vector<8x384xf32> to vector<8x128xf32>
    %55 = vector.extract_strided_slice %41 {offsets = [0, 256], sizes = [8, 128], strides = [1, 1]} : vector<8x384xf32> to vector<8x128xf32>
    %56 = arith.addf %55, %9 : vector<8x128xf32>
    %57 = arith.mulf %52, %56 : vector<8x128xf32>
    %58 = arith.addf %54, %57 : vector<8x128xf32>
    %59 = math.tanh %58 : vector<8x128xf32>
    %cst_23 = arith.constant 1.000000e+00 : f32
    %60 = vector.broadcast %cst_23 : f32 to vector<8x128xf32>
    %61 = arith.subf %60, %53 : vector<8x128xf32>
    %62 = arith.mulf %61, %59 : vector<8x128xf32>
    %63 = arith.mulf %53, %39 : vector<8x128xf32>
    %64 = arith.addf %62, %63 : vector<8x128xf32>
    %c8 = arith.constant 8 : index
    %c0_24 = arith.constant 0 : index
    %65 = vector.load %arg2[%c8, %c0_24] : memref<96x128xf32, #tpu.memory_space<vmem>>, vector<8x128xf32>
    %cst_25 = arith.constant 0.000000e+00 : f32
    %66 = vector.broadcast %cst_25 : f32 to vector<8x128xf32>
    %67 = arith.cmpf one, %65, %66 : vector<8x128xf32>
    %68 = arith.select %67, %64, %39 : vector<8x128xi1>, vector<8x128xf32>
    %69 = vector.extract_strided_slice %5 {offsets = [16, 0], sizes = [8, 384], strides = [1, 1]} : vector<96x384xf32> to vector<8x384xf32>
    %cst_26 = arith.constant dense<0.000000e+00> : vector<8x384xf32>
    %70 = tpu.matmul %68, %6, %cst_26 {dimension_numbers = #tpu.dot_dimension_numbers<[1], [0], [0], [1], [0, 0, 1, 1], [], []>} : vector<8x128xf32>, vector<128x384xf32>, vector<8x384xf32> -> vector<8x384xf32>
    %71 = vector.extract_strided_slice %69 {offsets = [0, 0], sizes = [8, 256], strides = [1, 1]} : vector<8x384xf32> to vector<8x256xf32>
    %72 = vector.extract_strided_slice %70 {offsets = [0, 0], sizes = [8, 256], strides = [1, 1]} : vector<8x384xf32> to vector<8x256xf32>
    %73 = arith.addf %71, %72 : vector<8x256xf32>
    %cst_27 = arith.constant 5.000000e-01 : f32
    %74 = vector.broadcast %cst_27 : f32 to vector<8x256xf32>
    %75 = arith.mulf %74, %73 : vector<8x256xf32>
    %76 = math.tanh %75 : vector<8x256xf32>
    %cst_28 = arith.constant 5.000000e-01 : f32
    %77 = vector.broadcast %cst_28 : f32 to vector<8x256xf32>
    %78 = arith.mulf %77, %76 : vector<8x256xf32>
    %cst_29 = arith.constant 5.000000e-01 : f32
    %79 = vector.broadcast %cst_29 : f32 to vector<8x256xf32>
    %80 = arith.addf %78, %79 : vector<8x256xf32>
    %81 = vector.extract_strided_slice %80 {offsets = [0, 0], sizes = [8, 128], strides = [1, 1]} : vector<8x256xf32> to vector<8x128xf32>
    %82 = vector.extract_strided_slice %80 {offsets = [0, 128], sizes = [8, 128], strides = [1, 1]} : vector<8x256xf32> to vector<8x128xf32>
    %83 = vector.extract_strided_slice %69 {offsets = [0, 256], sizes = [8, 128], strides = [1, 1]} : vector<8x384xf32> to vector<8x128xf32>
    %84 = vector.extract_strided_slice %70 {offsets = [0, 256], sizes = [8, 128], strides = [1, 1]} : vector<8x384xf32> to vector<8x128xf32>
    %85 = arith.addf %84, %9 : vector<8x128xf32>
    %86 = arith.mulf %81, %85 : vector<8x128xf32>
    %87 = arith.addf %83, %86 : vector<8x128xf32>
    %88 = math.tanh %87 : vector<8x128xf32>
    %cst_30 = arith.constant 1.000000e+00 : f32
    %89 = vector.broadcast %cst_30 : f32 to vector<8x128xf32>
    %90 = arith.subf %89, %82 : vector<8x128xf32>
    %91 = arith.mulf %90, %88 : vector<8x128xf32>
    %92 = arith.mulf %82, %68 : vector<8x128xf32>
    %93 = arith.addf %91, %92 : vector<8x128xf32>
    %c16 = arith.constant 16 : index
    %c0_31 = arith.constant 0 : index
    %94 = vector.load %arg2[%c16, %c0_31] : memref<96x128xf32, #tpu.memory_space<vmem>>, vector<8x128xf32>
    %cst_32 = arith.constant 0.000000e+00 : f32
    %95 = vector.broadcast %cst_32 : f32 to vector<8x128xf32>
    %96 = arith.cmpf one, %94, %95 : vector<8x128xf32>
    %97 = arith.select %96, %93, %68 : vector<8x128xi1>, vector<8x128xf32>
    %98 = vector.extract_strided_slice %5 {offsets = [24, 0], sizes = [8, 384], strides = [1, 1]} : vector<96x384xf32> to vector<8x384xf32>
    %cst_33 = arith.constant dense<0.000000e+00> : vector<8x384xf32>
    %99 = tpu.matmul %97, %6, %cst_33 {dimension_numbers = #tpu.dot_dimension_numbers<[1], [0], [0], [1], [0, 0, 1, 1], [], []>} : vector<8x128xf32>, vector<128x384xf32>, vector<8x384xf32> -> vector<8x384xf32>
    %100 = vector.extract_strided_slice %98 {offsets = [0, 0], sizes = [8, 256], strides = [1, 1]} : vector<8x384xf32> to vector<8x256xf32>
    %101 = vector.extract_strided_slice %99 {offsets = [0, 0], sizes = [8, 256], strides = [1, 1]} : vector<8x384xf32> to vector<8x256xf32>
    %102 = arith.addf %100, %101 : vector<8x256xf32>
    %cst_34 = arith.constant 5.000000e-01 : f32
    %103 = vector.broadcast %cst_34 : f32 to vector<8x256xf32>
    %104 = arith.mulf %103, %102 : vector<8x256xf32>
    %105 = math.tanh %104 : vector<8x256xf32>
    %cst_35 = arith.constant 5.000000e-01 : f32
    %106 = vector.broadcast %cst_35 : f32 to vector<8x256xf32>
    %107 = arith.mulf %106, %105 : vector<8x256xf32>
    %cst_36 = arith.constant 5.000000e-01 : f32
    %108 = vector.broadcast %cst_36 : f32 to vector<8x256xf32>
    %109 = arith.addf %107, %108 : vector<8x256xf32>
    %110 = vector.extract_strided_slice %109 {offsets = [0, 0], sizes = [8, 128], strides = [1, 1]} : vector<8x256xf32> to vector<8x128xf32>
    %111 = vector.extract_strided_slice %109 {offsets = [0, 128], sizes = [8, 128], strides = [1, 1]} : vector<8x256xf32> to vector<8x128xf32>
    %112 = vector.extract_strided_slice %98 {offsets = [0, 256], sizes = [8, 128], strides = [1, 1]} : vector<8x384xf32> to vector<8x128xf32>
    %113 = vector.extract_strided_slice %99 {offsets = [0, 256], sizes = [8, 128], strides = [1, 1]} : vector<8x384xf32> to vector<8x128xf32>
    %114 = arith.addf %113, %9 : vector<8x128xf32>
    %115 = arith.mulf %110, %114 : vector<8x128xf32>
    %116 = arith.addf %112, %115 : vector<8x128xf32>
    %117 = math.tanh %116 : vector<8x128xf32>
    %cst_37 = arith.constant 1.000000e+00 : f32
    %118 = vector.broadcast %cst_37 : f32 to vector<8x128xf32>
    %119 = arith.subf %118, %111 : vector<8x128xf32>
    %120 = arith.mulf %119, %117 : vector<8x128xf32>
    %121 = arith.mulf %111, %97 : vector<8x128xf32>
    %122 = arith.addf %120, %121 : vector<8x128xf32>
    %c24 = arith.constant 24 : index
    %c0_38 = arith.constant 0 : index
    %123 = vector.load %arg2[%c24, %c0_38] : memref<96x128xf32, #tpu.memory_space<vmem>>, vector<8x128xf32>
    %cst_39 = arith.constant 0.000000e+00 : f32
    %124 = vector.broadcast %cst_39 : f32 to vector<8x128xf32>
    %125 = arith.cmpf one, %123, %124 : vector<8x128xf32>
    %126 = arith.select %125, %122, %97 : vector<8x128xi1>, vector<8x128xf32>
    %127 = vector.extract_strided_slice %5 {offsets = [32, 0], sizes = [8, 384], strides = [1, 1]} : vector<96x384xf32> to vector<8x384xf32>
    %cst_40 = arith.constant dense<0.000000e+00> : vector<8x384xf32>
    %128 = tpu.matmul %126, %6, %cst_40 {dimension_numbers = #tpu.dot_dimension_numbers<[1], [0], [0], [1], [0, 0, 1, 1], [], []>} : vector<8x128xf32>, vector<128x384xf32>, vector<8x384xf32> -> vector<8x384xf32>
    %129 = vector.extract_strided_slice %127 {offsets = [0, 0], sizes = [8, 256], strides = [1, 1]} : vector<8x384xf32> to vector<8x256xf32>
    %130 = vector.extract_strided_slice %128 {offsets = [0, 0], sizes = [8, 256], strides = [1, 1]} : vector<8x384xf32> to vector<8x256xf32>
    %131 = arith.addf %129, %130 : vector<8x256xf32>
    %cst_41 = arith.constant 5.000000e-01 : f32
    %132 = vector.broadcast %cst_41 : f32 to vector<8x256xf32>
    %133 = arith.mulf %132, %131 : vector<8x256xf32>
    %134 = math.tanh %133 : vector<8x256xf32>
    %cst_42 = arith.constant 5.000000e-01 : f32
    %135 = vector.broadcast %cst_42 : f32 to vector<8x256xf32>
    %136 = arith.mulf %135, %134 : vector<8x256xf32>
    %cst_43 = arith.constant 5.000000e-01 : f32
    %137 = vector.broadcast %cst_43 : f32 to vector<8x256xf32>
    %138 = arith.addf %136, %137 : vector<8x256xf32>
    %139 = vector.extract_strided_slice %138 {offsets = [0, 0], sizes = [8, 128], strides = [1, 1]} : vector<8x256xf32> to vector<8x128xf32>
    %140 = vector.extract_strided_slice %138 {offsets = [0, 128], sizes = [8, 128], strides = [1, 1]} : vector<8x256xf32> to vector<8x128xf32>
    %141 = vector.extract_strided_slice %127 {offsets = [0, 256], sizes = [8, 128], strides = [1, 1]} : vector<8x384xf32> to vector<8x128xf32>
    %142 = vector.extract_strided_slice %128 {offsets = [0, 256], sizes = [8, 128], strides = [1, 1]} : vector<8x384xf32> to vector<8x128xf32>
    %143 = arith.addf %142, %9 : vector<8x128xf32>
    %144 = arith.mulf %139, %143 : vector<8x128xf32>
    %145 = arith.addf %141, %144 : vector<8x128xf32>
    %146 = math.tanh %145 : vector<8x128xf32>
    %cst_44 = arith.constant 1.000000e+00 : f32
    %147 = vector.broadcast %cst_44 : f32 to vector<8x128xf32>
    %148 = arith.subf %147, %140 : vector<8x128xf32>
    %149 = arith.mulf %148, %146 : vector<8x128xf32>
    %150 = arith.mulf %140, %126 : vector<8x128xf32>
    %151 = arith.addf %149, %150 : vector<8x128xf32>
    %c32 = arith.constant 32 : index
    %c0_45 = arith.constant 0 : index
    %152 = vector.load %arg2[%c32, %c0_45] : memref<96x128xf32, #tpu.memory_space<vmem>>, vector<8x128xf32>
    %cst_46 = arith.constant 0.000000e+00 : f32
    %153 = vector.broadcast %cst_46 : f32 to vector<8x128xf32>
    %154 = arith.cmpf one, %152, %153 : vector<8x128xf32>
    %155 = arith.select %154, %151, %126 : vector<8x128xi1>, vector<8x128xf32>
    %156 = vector.extract_strided_slice %5 {offsets = [40, 0], sizes = [8, 384], strides = [1, 1]} : vector<96x384xf32> to vector<8x384xf32>
    %cst_47 = arith.constant dense<0.000000e+00> : vector<8x384xf32>
    %157 = tpu.matmul %155, %6, %cst_47 {dimension_numbers = #tpu.dot_dimension_numbers<[1], [0], [0], [1], [0, 0, 1, 1], [], []>} : vector<8x128xf32>, vector<128x384xf32>, vector<8x384xf32> -> vector<8x384xf32>
    %158 = vector.extract_strided_slice %156 {offsets = [0, 0], sizes = [8, 256], strides = [1, 1]} : vector<8x384xf32> to vector<8x256xf32>
    %159 = vector.extract_strided_slice %157 {offsets = [0, 0], sizes = [8, 256], strides = [1, 1]} : vector<8x384xf32> to vector<8x256xf32>
    %160 = arith.addf %158, %159 : vector<8x256xf32>
    %cst_48 = arith.constant 5.000000e-01 : f32
    %161 = vector.broadcast %cst_48 : f32 to vector<8x256xf32>
    %162 = arith.mulf %161, %160 : vector<8x256xf32>
    %163 = math.tanh %162 : vector<8x256xf32>
    %cst_49 = arith.constant 5.000000e-01 : f32
    %164 = vector.broadcast %cst_49 : f32 to vector<8x256xf32>
    %165 = arith.mulf %164, %163 : vector<8x256xf32>
    %cst_50 = arith.constant 5.000000e-01 : f32
    %166 = vector.broadcast %cst_50 : f32 to vector<8x256xf32>
    %167 = arith.addf %165, %166 : vector<8x256xf32>
    %168 = vector.extract_strided_slice %167 {offsets = [0, 0], sizes = [8, 128], strides = [1, 1]} : vector<8x256xf32> to vector<8x128xf32>
    %169 = vector.extract_strided_slice %167 {offsets = [0, 128], sizes = [8, 128], strides = [1, 1]} : vector<8x256xf32> to vector<8x128xf32>
    %170 = vector.extract_strided_slice %156 {offsets = [0, 256], sizes = [8, 128], strides = [1, 1]} : vector<8x384xf32> to vector<8x128xf32>
    %171 = vector.extract_strided_slice %157 {offsets = [0, 256], sizes = [8, 128], strides = [1, 1]} : vector<8x384xf32> to vector<8x128xf32>
    %172 = arith.addf %171, %9 : vector<8x128xf32>
    %173 = arith.mulf %168, %172 : vector<8x128xf32>
    %174 = arith.addf %170, %173 : vector<8x128xf32>
    %175 = math.tanh %174 : vector<8x128xf32>
    %cst_51 = arith.constant 1.000000e+00 : f32
    %176 = vector.broadcast %cst_51 : f32 to vector<8x128xf32>
    %177 = arith.subf %176, %169 : vector<8x128xf32>
    %178 = arith.mulf %177, %175 : vector<8x128xf32>
    %179 = arith.mulf %169, %155 : vector<8x128xf32>
    %180 = arith.addf %178, %179 : vector<8x128xf32>
    %c40 = arith.constant 40 : index
    %c0_52 = arith.constant 0 : index
    %181 = vector.load %arg2[%c40, %c0_52] : memref<96x128xf32, #tpu.memory_space<vmem>>, vector<8x128xf32>
    %cst_53 = arith.constant 0.000000e+00 : f32
    %182 = vector.broadcast %cst_53 : f32 to vector<8x128xf32>
    %183 = arith.cmpf one, %181, %182 : vector<8x128xf32>
    %184 = arith.select %183, %180, %155 : vector<8x128xi1>, vector<8x128xf32>
    %185 = vector.extract_strided_slice %5 {offsets = [48, 0], sizes = [8, 384], strides = [1, 1]} : vector<96x384xf32> to vector<8x384xf32>
    %cst_54 = arith.constant dense<0.000000e+00> : vector<8x384xf32>
    %186 = tpu.matmul %184, %6, %cst_54 {dimension_numbers = #tpu.dot_dimension_numbers<[1], [0], [0], [1], [0, 0, 1, 1], [], []>} : vector<8x128xf32>, vector<128x384xf32>, vector<8x384xf32> -> vector<8x384xf32>
    %187 = vector.extract_strided_slice %185 {offsets = [0, 0], sizes = [8, 256], strides = [1, 1]} : vector<8x384xf32> to vector<8x256xf32>
    %188 = vector.extract_strided_slice %186 {offsets = [0, 0], sizes = [8, 256], strides = [1, 1]} : vector<8x384xf32> to vector<8x256xf32>
    %189 = arith.addf %187, %188 : vector<8x256xf32>
    %cst_55 = arith.constant 5.000000e-01 : f32
    %190 = vector.broadcast %cst_55 : f32 to vector<8x256xf32>
    %191 = arith.mulf %190, %189 : vector<8x256xf32>
    %192 = math.tanh %191 : vector<8x256xf32>
    %cst_56 = arith.constant 5.000000e-01 : f32
    %193 = vector.broadcast %cst_56 : f32 to vector<8x256xf32>
    %194 = arith.mulf %193, %192 : vector<8x256xf32>
    %cst_57 = arith.constant 5.000000e-01 : f32
    %195 = vector.broadcast %cst_57 : f32 to vector<8x256xf32>
    %196 = arith.addf %194, %195 : vector<8x256xf32>
    %197 = vector.extract_strided_slice %196 {offsets = [0, 0], sizes = [8, 128], strides = [1, 1]} : vector<8x256xf32> to vector<8x128xf32>
    %198 = vector.extract_strided_slice %196 {offsets = [0, 128], sizes = [8, 128], strides = [1, 1]} : vector<8x256xf32> to vector<8x128xf32>
    %199 = vector.extract_strided_slice %185 {offsets = [0, 256], sizes = [8, 128], strides = [1, 1]} : vector<8x384xf32> to vector<8x128xf32>
    %200 = vector.extract_strided_slice %186 {offsets = [0, 256], sizes = [8, 128], strides = [1, 1]} : vector<8x384xf32> to vector<8x128xf32>
    %201 = arith.addf %200, %9 : vector<8x128xf32>
    %202 = arith.mulf %197, %201 : vector<8x128xf32>
    %203 = arith.addf %199, %202 : vector<8x128xf32>
    %204 = math.tanh %203 : vector<8x128xf32>
    %cst_58 = arith.constant 1.000000e+00 : f32
    %205 = vector.broadcast %cst_58 : f32 to vector<8x128xf32>
    %206 = arith.subf %205, %198 : vector<8x128xf32>
    %207 = arith.mulf %206, %204 : vector<8x128xf32>
    %208 = arith.mulf %198, %184 : vector<8x128xf32>
    %209 = arith.addf %207, %208 : vector<8x128xf32>
    %c48 = arith.constant 48 : index
    %c0_59 = arith.constant 0 : index
    %210 = vector.load %arg2[%c48, %c0_59] : memref<96x128xf32, #tpu.memory_space<vmem>>, vector<8x128xf32>
    %cst_60 = arith.constant 0.000000e+00 : f32
    %211 = vector.broadcast %cst_60 : f32 to vector<8x128xf32>
    %212 = arith.cmpf one, %210, %211 : vector<8x128xf32>
    %213 = arith.select %212, %209, %184 : vector<8x128xi1>, vector<8x128xf32>
    %214 = vector.extract_strided_slice %5 {offsets = [56, 0], sizes = [8, 384], strides = [1, 1]} : vector<96x384xf32> to vector<8x384xf32>
    %cst_61 = arith.constant dense<0.000000e+00> : vector<8x384xf32>
    %215 = tpu.matmul %213, %6, %cst_61 {dimension_numbers = #tpu.dot_dimension_numbers<[1], [0], [0], [1], [0, 0, 1, 1], [], []>} : vector<8x128xf32>, vector<128x384xf32>, vector<8x384xf32> -> vector<8x384xf32>
    %216 = vector.extract_strided_slice %214 {offsets = [0, 0], sizes = [8, 256], strides = [1, 1]} : vector<8x384xf32> to vector<8x256xf32>
    %217 = vector.extract_strided_slice %215 {offsets = [0, 0], sizes = [8, 256], strides = [1, 1]} : vector<8x384xf32> to vector<8x256xf32>
    %218 = arith.addf %216, %217 : vector<8x256xf32>
    %cst_62 = arith.constant 5.000000e-01 : f32
    %219 = vector.broadcast %cst_62 : f32 to vector<8x256xf32>
    %220 = arith.mulf %219, %218 : vector<8x256xf32>
    %221 = math.tanh %220 : vector<8x256xf32>
    %cst_63 = arith.constant 5.000000e-01 : f32
    %222 = vector.broadcast %cst_63 : f32 to vector<8x256xf32>
    %223 = arith.mulf %222, %221 : vector<8x256xf32>
    %cst_64 = arith.constant 5.000000e-01 : f32
    %224 = vector.broadcast %cst_64 : f32 to vector<8x256xf32>
    %225 = arith.addf %223, %224 : vector<8x256xf32>
    %226 = vector.extract_strided_slice %225 {offsets = [0, 0], sizes = [8, 128], strides = [1, 1]} : vector<8x256xf32> to vector<8x128xf32>
    %227 = vector.extract_strided_slice %225 {offsets = [0, 128], sizes = [8, 128], strides = [1, 1]} : vector<8x256xf32> to vector<8x128xf32>
    %228 = vector.extract_strided_slice %214 {offsets = [0, 256], sizes = [8, 128], strides = [1, 1]} : vector<8x384xf32> to vector<8x128xf32>
    %229 = vector.extract_strided_slice %215 {offsets = [0, 256], sizes = [8, 128], strides = [1, 1]} : vector<8x384xf32> to vector<8x128xf32>
    %230 = arith.addf %229, %9 : vector<8x128xf32>
    %231 = arith.mulf %226, %230 : vector<8x128xf32>
    %232 = arith.addf %228, %231 : vector<8x128xf32>
    %233 = math.tanh %232 : vector<8x128xf32>
    %cst_65 = arith.constant 1.000000e+00 : f32
    %234 = vector.broadcast %cst_65 : f32 to vector<8x128xf32>
    %235 = arith.subf %234, %227 : vector<8x128xf32>
    %236 = arith.mulf %235, %233 : vector<8x128xf32>
    %237 = arith.mulf %227, %213 : vector<8x128xf32>
    %238 = arith.addf %236, %237 : vector<8x128xf32>
    %c56 = arith.constant 56 : index
    %c0_66 = arith.constant 0 : index
    %239 = vector.load %arg2[%c56, %c0_66] : memref<96x128xf32, #tpu.memory_space<vmem>>, vector<8x128xf32>
    %cst_67 = arith.constant 0.000000e+00 : f32
    %240 = vector.broadcast %cst_67 : f32 to vector<8x128xf32>
    %241 = arith.cmpf one, %239, %240 : vector<8x128xf32>
    %242 = arith.select %241, %238, %213 : vector<8x128xi1>, vector<8x128xf32>
    %243 = vector.extract_strided_slice %5 {offsets = [64, 0], sizes = [8, 384], strides = [1, 1]} : vector<96x384xf32> to vector<8x384xf32>
    %cst_68 = arith.constant dense<0.000000e+00> : vector<8x384xf32>
    %244 = tpu.matmul %242, %6, %cst_68 {dimension_numbers = #tpu.dot_dimension_numbers<[1], [0], [0], [1], [0, 0, 1, 1], [], []>} : vector<8x128xf32>, vector<128x384xf32>, vector<8x384xf32> -> vector<8x384xf32>
    %245 = vector.extract_strided_slice %243 {offsets = [0, 0], sizes = [8, 256], strides = [1, 1]} : vector<8x384xf32> to vector<8x256xf32>
    %246 = vector.extract_strided_slice %244 {offsets = [0, 0], sizes = [8, 256], strides = [1, 1]} : vector<8x384xf32> to vector<8x256xf32>
    %247 = arith.addf %245, %246 : vector<8x256xf32>
    %cst_69 = arith.constant 5.000000e-01 : f32
    %248 = vector.broadcast %cst_69 : f32 to vector<8x256xf32>
    %249 = arith.mulf %248, %247 : vector<8x256xf32>
    %250 = math.tanh %249 : vector<8x256xf32>
    %cst_70 = arith.constant 5.000000e-01 : f32
    %251 = vector.broadcast %cst_70 : f32 to vector<8x256xf32>
    %252 = arith.mulf %251, %250 : vector<8x256xf32>
    %cst_71 = arith.constant 5.000000e-01 : f32
    %253 = vector.broadcast %cst_71 : f32 to vector<8x256xf32>
    %254 = arith.addf %252, %253 : vector<8x256xf32>
    %255 = vector.extract_strided_slice %254 {offsets = [0, 0], sizes = [8, 128], strides = [1, 1]} : vector<8x256xf32> to vector<8x128xf32>
    %256 = vector.extract_strided_slice %254 {offsets = [0, 128], sizes = [8, 128], strides = [1, 1]} : vector<8x256xf32> to vector<8x128xf32>
    %257 = vector.extract_strided_slice %243 {offsets = [0, 256], sizes = [8, 128], strides = [1, 1]} : vector<8x384xf32> to vector<8x128xf32>
    %258 = vector.extract_strided_slice %244 {offsets = [0, 256], sizes = [8, 128], strides = [1, 1]} : vector<8x384xf32> to vector<8x128xf32>
    %259 = arith.addf %258, %9 : vector<8x128xf32>
    %260 = arith.mulf %255, %259 : vector<8x128xf32>
    %261 = arith.addf %257, %260 : vector<8x128xf32>
    %262 = math.tanh %261 : vector<8x128xf32>
    %cst_72 = arith.constant 1.000000e+00 : f32
    %263 = vector.broadcast %cst_72 : f32 to vector<8x128xf32>
    %264 = arith.subf %263, %256 : vector<8x128xf32>
    %265 = arith.mulf %264, %262 : vector<8x128xf32>
    %266 = arith.mulf %256, %242 : vector<8x128xf32>
    %267 = arith.addf %265, %266 : vector<8x128xf32>
    %c64 = arith.constant 64 : index
    %c0_73 = arith.constant 0 : index
    %268 = vector.load %arg2[%c64, %c0_73] : memref<96x128xf32, #tpu.memory_space<vmem>>, vector<8x128xf32>
    %cst_74 = arith.constant 0.000000e+00 : f32
    %269 = vector.broadcast %cst_74 : f32 to vector<8x128xf32>
    %270 = arith.cmpf one, %268, %269 : vector<8x128xf32>
    %271 = arith.select %270, %267, %242 : vector<8x128xi1>, vector<8x128xf32>
    %272 = vector.extract_strided_slice %5 {offsets = [72, 0], sizes = [8, 384], strides = [1, 1]} : vector<96x384xf32> to vector<8x384xf32>
    %cst_75 = arith.constant dense<0.000000e+00> : vector<8x384xf32>
    %273 = tpu.matmul %271, %6, %cst_75 {dimension_numbers = #tpu.dot_dimension_numbers<[1], [0], [0], [1], [0, 0, 1, 1], [], []>} : vector<8x128xf32>, vector<128x384xf32>, vector<8x384xf32> -> vector<8x384xf32>
    %274 = vector.extract_strided_slice %272 {offsets = [0, 0], sizes = [8, 256], strides = [1, 1]} : vector<8x384xf32> to vector<8x256xf32>
    %275 = vector.extract_strided_slice %273 {offsets = [0, 0], sizes = [8, 256], strides = [1, 1]} : vector<8x384xf32> to vector<8x256xf32>
    %276 = arith.addf %274, %275 : vector<8x256xf32>
    %cst_76 = arith.constant 5.000000e-01 : f32
    %277 = vector.broadcast %cst_76 : f32 to vector<8x256xf32>
    %278 = arith.mulf %277, %276 : vector<8x256xf32>
    %279 = math.tanh %278 : vector<8x256xf32>
    %cst_77 = arith.constant 5.000000e-01 : f32
    %280 = vector.broadcast %cst_77 : f32 to vector<8x256xf32>
    %281 = arith.mulf %280, %279 : vector<8x256xf32>
    %cst_78 = arith.constant 5.000000e-01 : f32
    %282 = vector.broadcast %cst_78 : f32 to vector<8x256xf32>
    %283 = arith.addf %281, %282 : vector<8x256xf32>
    %284 = vector.extract_strided_slice %283 {offsets = [0, 0], sizes = [8, 128], strides = [1, 1]} : vector<8x256xf32> to vector<8x128xf32>
    %285 = vector.extract_strided_slice %283 {offsets = [0, 128], sizes = [8, 128], strides = [1, 1]} : vector<8x256xf32> to vector<8x128xf32>
    %286 = vector.extract_strided_slice %272 {offsets = [0, 256], sizes = [8, 128], strides = [1, 1]} : vector<8x384xf32> to vector<8x128xf32>
    %287 = vector.extract_strided_slice %273 {offsets = [0, 256], sizes = [8, 128], strides = [1, 1]} : vector<8x384xf32> to vector<8x128xf32>
    %288 = arith.addf %287, %9 : vector<8x128xf32>
    %289 = arith.mulf %284, %288 : vector<8x128xf32>
    %290 = arith.addf %286, %289 : vector<8x128xf32>
    %291 = math.tanh %290 : vector<8x128xf32>
    %cst_79 = arith.constant 1.000000e+00 : f32
    %292 = vector.broadcast %cst_79 : f32 to vector<8x128xf32>
    %293 = arith.subf %292, %285 : vector<8x128xf32>
    %294 = arith.mulf %293, %291 : vector<8x128xf32>
    %295 = arith.mulf %285, %271 : vector<8x128xf32>
    %296 = arith.addf %294, %295 : vector<8x128xf32>
    %c72 = arith.constant 72 : index
    %c0_80 = arith.constant 0 : index
    %297 = vector.load %arg2[%c72, %c0_80] : memref<96x128xf32, #tpu.memory_space<vmem>>, vector<8x128xf32>
    %cst_81 = arith.constant 0.000000e+00 : f32
    %298 = vector.broadcast %cst_81 : f32 to vector<8x128xf32>
    %299 = arith.cmpf one, %297, %298 : vector<8x128xf32>
    %300 = arith.select %299, %296, %271 : vector<8x128xi1>, vector<8x128xf32>
    %301 = vector.extract_strided_slice %5 {offsets = [80, 0], sizes = [8, 384], strides = [1, 1]} : vector<96x384xf32> to vector<8x384xf32>
    %cst_82 = arith.constant dense<0.000000e+00> : vector<8x384xf32>
    %302 = tpu.matmul %300, %6, %cst_82 {dimension_numbers = #tpu.dot_dimension_numbers<[1], [0], [0], [1], [0, 0, 1, 1], [], []>} : vector<8x128xf32>, vector<128x384xf32>, vector<8x384xf32> -> vector<8x384xf32>
    %303 = vector.extract_strided_slice %301 {offsets = [0, 0], sizes = [8, 256], strides = [1, 1]} : vector<8x384xf32> to vector<8x256xf32>
    %304 = vector.extract_strided_slice %302 {offsets = [0, 0], sizes = [8, 256], strides = [1, 1]} : vector<8x384xf32> to vector<8x256xf32>
    %305 = arith.addf %303, %304 : vector<8x256xf32>
    %cst_83 = arith.constant 5.000000e-01 : f32
    %306 = vector.broadcast %cst_83 : f32 to vector<8x256xf32>
    %307 = arith.mulf %306, %305 : vector<8x256xf32>
    %308 = math.tanh %307 : vector<8x256xf32>
    %cst_84 = arith.constant 5.000000e-01 : f32
    %309 = vector.broadcast %cst_84 : f32 to vector<8x256xf32>
    %310 = arith.mulf %309, %308 : vector<8x256xf32>
    %cst_85 = arith.constant 5.000000e-01 : f32
    %311 = vector.broadcast %cst_85 : f32 to vector<8x256xf32>
    %312 = arith.addf %310, %311 : vector<8x256xf32>
    %313 = vector.extract_strided_slice %312 {offsets = [0, 0], sizes = [8, 128], strides = [1, 1]} : vector<8x256xf32> to vector<8x128xf32>
    %314 = vector.extract_strided_slice %312 {offsets = [0, 128], sizes = [8, 128], strides = [1, 1]} : vector<8x256xf32> to vector<8x128xf32>
    %315 = vector.extract_strided_slice %301 {offsets = [0, 256], sizes = [8, 128], strides = [1, 1]} : vector<8x384xf32> to vector<8x128xf32>
    %316 = vector.extract_strided_slice %302 {offsets = [0, 256], sizes = [8, 128], strides = [1, 1]} : vector<8x384xf32> to vector<8x128xf32>
    %317 = arith.addf %316, %9 : vector<8x128xf32>
    %318 = arith.mulf %313, %317 : vector<8x128xf32>
    %319 = arith.addf %315, %318 : vector<8x128xf32>
    %320 = math.tanh %319 : vector<8x128xf32>
    %cst_86 = arith.constant 1.000000e+00 : f32
    %321 = vector.broadcast %cst_86 : f32 to vector<8x128xf32>
    %322 = arith.subf %321, %314 : vector<8x128xf32>
    %323 = arith.mulf %322, %320 : vector<8x128xf32>
    %324 = arith.mulf %314, %300 : vector<8x128xf32>
    %325 = arith.addf %323, %324 : vector<8x128xf32>
    %c80 = arith.constant 80 : index
    %c0_87 = arith.constant 0 : index
    %326 = vector.load %arg2[%c80, %c0_87] : memref<96x128xf32, #tpu.memory_space<vmem>>, vector<8x128xf32>
    %cst_88 = arith.constant 0.000000e+00 : f32
    %327 = vector.broadcast %cst_88 : f32 to vector<8x128xf32>
    %328 = arith.cmpf one, %326, %327 : vector<8x128xf32>
    %329 = arith.select %328, %325, %300 : vector<8x128xi1>, vector<8x128xf32>
    %330 = vector.extract_strided_slice %5 {offsets = [88, 0], sizes = [8, 384], strides = [1, 1]} : vector<96x384xf32> to vector<8x384xf32>
    %cst_89 = arith.constant dense<0.000000e+00> : vector<8x384xf32>
    %331 = tpu.matmul %329, %6, %cst_89 {dimension_numbers = #tpu.dot_dimension_numbers<[1], [0], [0], [1], [0, 0, 1, 1], [], []>} : vector<8x128xf32>, vector<128x384xf32>, vector<8x384xf32> -> vector<8x384xf32>
    %332 = vector.extract_strided_slice %330 {offsets = [0, 0], sizes = [8, 256], strides = [1, 1]} : vector<8x384xf32> to vector<8x256xf32>
    %333 = vector.extract_strided_slice %331 {offsets = [0, 0], sizes = [8, 256], strides = [1, 1]} : vector<8x384xf32> to vector<8x256xf32>
    %334 = arith.addf %332, %333 : vector<8x256xf32>
    %cst_90 = arith.constant 5.000000e-01 : f32
    %335 = vector.broadcast %cst_90 : f32 to vector<8x256xf32>
    %336 = arith.mulf %335, %334 : vector<8x256xf32>
    %337 = math.tanh %336 : vector<8x256xf32>
    %cst_91 = arith.constant 5.000000e-01 : f32
    %338 = vector.broadcast %cst_91 : f32 to vector<8x256xf32>
    %339 = arith.mulf %338, %337 : vector<8x256xf32>
    %cst_92 = arith.constant 5.000000e-01 : f32
    %340 = vector.broadcast %cst_92 : f32 to vector<8x256xf32>
    %341 = arith.addf %339, %340 : vector<8x256xf32>
    %342 = vector.extract_strided_slice %341 {offsets = [0, 0], sizes = [8, 128], strides = [1, 1]} : vector<8x256xf32> to vector<8x128xf32>
    %343 = vector.extract_strided_slice %341 {offsets = [0, 128], sizes = [8, 128], strides = [1, 1]} : vector<8x256xf32> to vector<8x128xf32>
    %344 = vector.extract_strided_slice %330 {offsets = [0, 256], sizes = [8, 128], strides = [1, 1]} : vector<8x384xf32> to vector<8x128xf32>
    %345 = vector.extract_strided_slice %331 {offsets = [0, 256], sizes = [8, 128], strides = [1, 1]} : vector<8x384xf32> to vector<8x128xf32>
    %346 = arith.addf %345, %9 : vector<8x128xf32>
    %347 = arith.mulf %342, %346 : vector<8x128xf32>
    %348 = arith.addf %344, %347 : vector<8x128xf32>
    %349 = math.tanh %348 : vector<8x128xf32>
    %cst_93 = arith.constant 1.000000e+00 : f32
    %350 = vector.broadcast %cst_93 : f32 to vector<8x128xf32>
    %351 = arith.subf %350, %343 : vector<8x128xf32>
    %352 = arith.mulf %351, %349 : vector<8x128xf32>
    %353 = arith.mulf %343, %329 : vector<8x128xf32>
    %354 = arith.addf %352, %353 : vector<8x128xf32>
    %c88 = arith.constant 88 : index
    %c0_94 = arith.constant 0 : index
    %355 = vector.load %arg2[%c88, %c0_94] : memref<96x128xf32, #tpu.memory_space<vmem>>, vector<8x128xf32>
    %cst_95 = arith.constant 0.000000e+00 : f32
    %356 = vector.broadcast %cst_95 : f32 to vector<8x128xf32>
    %357 = arith.cmpf one, %355, %356 : vector<8x128xf32>
    %358 = arith.select %357, %354, %329 : vector<8x128xi1>, vector<8x128xf32>
    %359 = vector.extract_strided_slice %358 {offsets = [0, 0], sizes = [8, 32], strides = [1, 1]} : vector<8x128xf32> to vector<8x32xf32>
    %360 = vector.extract_strided_slice %358 {offsets = [0, 32], sizes = [8, 32], strides = [1, 1]} : vector<8x128xf32> to vector<8x32xf32>
    %361 = arith.addf %359, %360 : vector<8x32xf32>
    %362 = vector.extract_strided_slice %358 {offsets = [0, 64], sizes = [8, 32], strides = [1, 1]} : vector<8x128xf32> to vector<8x32xf32>
    %363 = vector.extract_strided_slice %358 {offsets = [0, 96], sizes = [8, 32], strides = [1, 1]} : vector<8x128xf32> to vector<8x32xf32>
    %364 = arith.addf %362, %363 : vector<8x32xf32>
    %365 = arith.mulf %361, %364 : vector<8x32xf32>
    %c0_96 = arith.constant 0 : index
    %c0_97 = arith.constant 0 : index
    %366 = vector.load %arg8[%c0_96, %c0_97] : memref<32x16xf32, #tpu.memory_space<vmem>>, vector<32x16xf32>
    %cst_98 = arith.constant dense<0.000000e+00> : vector<8x16xf32>
    %367 = tpu.matmul %365, %366, %cst_98 {dimension_numbers = #tpu.dot_dimension_numbers<[1], [0], [0], [1], [0, 0, 1, 1], [], []>} : vector<8x32xf32>, vector<32x16xf32>, vector<8x16xf32> -> vector<8x16xf32>
    %c0_99 = arith.constant 0 : index
    %c0_100 = arith.constant 0 : index
    %368 = vector.load %arg9[%c0_99, %c0_100] : memref<1x16xf32, #tpu.memory_space<vmem>>, vector<1x16xf32>
    %369 = vector.broadcast %368 : vector<1x16xf32> to vector<8x16xf32>
    %370 = arith.addf %367, %369 : vector<8x16xf32>
    %cst_101 = arith.constant 0.000000e+00 : f32
    %371 = vector.broadcast %cst_101 : f32 to vector<8x16xf32>
    %372 = arith.maximumf %370, %371 : vector<8x16xf32>
    %c0_102 = arith.constant 0 : index
    %c0_103 = arith.constant 0 : index
    %373 = vector.load %arg10[%c0_102, %c0_103] : memref<16x128xf32, #tpu.memory_space<vmem>>, vector<16x128xf32>
    %cst_104 = arith.constant dense<0.000000e+00> : vector<8x128xf32>
    %374 = tpu.matmul %372, %373, %cst_104 {dimension_numbers = #tpu.dot_dimension_numbers<[1], [0], [0], [1], [0, 0, 1, 1], [], []>} : vector<8x16xf32>, vector<16x128xf32>, vector<8x128xf32> -> vector<8x128xf32>
    %c0_105 = arith.constant 0 : index
    %c0_106 = arith.constant 0 : index
    %375 = vector.load %arg11[%c0_105, %c0_106] : memref<1x128xf32, #tpu.memory_space<vmem>>, vector<1x128xf32>
    %376 = vector.broadcast %375 : vector<1x128xf32> to vector<8x128xf32>
    %377 = arith.addf %374, %376 : vector<8x128xf32>
    %c0_107 = arith.constant 0 : index
    %c0_108 = arith.constant 0 : index
    %378 = vector.load %arg12[%c0_107, %c0_108] : memref<8x128xf32, #tpu.memory_space<vmem>>, vector<8x128xf32>
    tpu.vector_store %arg12[%c0_107, %c0_108], %377 {strides = array<i32>} : memref<8x128xf32, #tpu.memory_space<vmem>>, vector<8x128xf32>,
    return
  }
  func.func @transform_0(%arg0: i32) -> (i32, i32) {
    %c0_i32 = arith.constant 0 : i32
    %c0_i32_0 = arith.constant 0 : i32
    %c0_i32_1 = arith.constant 0 : i32
    return %c0_i32, %c0_i32_0 : i32, i32
  }
  func.func @transform_1(%arg0: i32) -> (i32, i32) {
    %c0_i32 = arith.constant 0 : i32
    %c0_i32_0 = arith.constant 0 : i32
    %c0_i32_1 = arith.constant 0 : i32
    return %c0_i32, %c0_i32_0 : i32, i32
  }
  func.func @transform_2(%arg0: i32) -> (i32, i32) {
    %c0_i32 = arith.constant 0 : i32
    %c0_i32_0 = arith.constant 0 : i32
    %c0_i32_1 = arith.constant 0 : i32
    return %c0_i32, %c0_i32_0 : i32, i32
  }
  func.func @transform_3(%arg0: i32) -> (i32, i32) {
    %c0_i32 = arith.constant 0 : i32
    %c0_i32_0 = arith.constant 0 : i32
    %c0_i32_1 = arith.constant 0 : i32
    return %c0_i32, %c0_i32_0 : i32, i32
  }
  func.func @transform_4(%arg0: i32) -> (i32, i32) {
    %c0_i32 = arith.constant 0 : i32
    %c0_i32_0 = arith.constant 0 : i32
    %c0_i32_1 = arith.constant 0 : i32
    return %c0_i32, %c0_i32_0 : i32, i32
  }
  func.func @transform_5(%arg0: i32) -> (i32, i32) {
    %c0_i32 = arith.constant 0 : i32
    %c0_i32_0 = arith.constant 0 : i32
    %c0_i32_1 = arith.constant 0 : i32
    return %c0_i32, %c0_i32_0 : i32, i32
  }
  func.func @transform_6(%arg0: i32) -> (i32, i32) {
    %c0_i32 = arith.constant 0 : i32
    %c0_i32_0 = arith.constant 0 : i32
    %c0_i32_1 = arith.constant 0 : i32
    return %c0_i32, %c0_i32_0 : i32, i32
  }
  func.func @transform_7(%arg0: i32) -> (i32, i32) {
    %c0_i32 = arith.constant 0 : i32
    %c0_i32_0 = arith.constant 0 : i32
    %c0_i32_1 = arith.constant 0 : i32
    return %c0_i32, %c0_i32_0 : i32, i32
  }
  func.func @transform_8(%arg0: i32) -> (i32, i32) {
    %c0_i32 = arith.constant 0 : i32
    %c0_i32_0 = arith.constant 0 : i32
    %c0_i32_1 = arith.constant 0 : i32
    return %c0_i32, %c0_i32_0 : i32, i32
  }
  func.func @transform_9(%arg0: i32) -> (i32, i32) {
    %c0_i32 = arith.constant 0 : i32
    %c0_i32_0 = arith.constant 0 : i32
    %c0_i32_1 = arith.constant 0 : i32
    return %c0_i32, %c0_i32_0 : i32, i32
  }
  func.func @transform_10(%arg0: i32) -> (i32, i32) {
    %c0_i32 = arith.constant 0 : i32
    %c0_i32_0 = arith.constant 0 : i32
    %c0_i32_1 = arith.constant 0 : i32
    return %c0_i32, %c0_i32_0 : i32, i32
  }
  func.func @transform_11(%arg0: i32) -> (i32, i32) {
    %c0_i32 = arith.constant 0 : i32
    %c0_i32_0 = arith.constant 0 : i32
    %c0_i32_1 = arith.constant 0 : i32
    return %c0_i32, %c0_i32_0 : i32, i32
  }
}

</mosaic_0001>

<llo_original>
// kernel: tpu_custom_call.1
$region0: #{tpu_custom_call.1}
  #allocation0 [shape = 'u32[]', space=smem, size = 0x4, offset = 0x4, fixed_abs, tag = 'smem constant byte address 0x4 - core index']
  #allocation1 [shape = 'u32[144,128]{1,0:T(1,128)}', space=vmem, size = 0x12000, scoped, tag = 'internal scratch']
  %s0 = inlined_call_operand.hbm [shape: f32[96,128], index: 0, kind: input, shape index: {}]
  %s1 = inlined_call_operand.hbm [shape: f32[96,128], index: 1, kind: input, shape index: {}]
  %s2 = inlined_call_operand.vmem [shape: f32[8,128], index: 2, kind: input, shape index: {}]
  %s3 = inlined_call_operand.hbm [shape: f32[128,384], index: 3, kind: input, shape index: {}]
  %s4 = inlined_call_operand.vmem [shape: f32[1,384], index: 4, kind: input, shape index: {}]
  %s5 = inlined_call_operand.hbm [shape: f32[128,384], index: 5, kind: input, shape index: {}]
  %s6 = inlined_call_operand.vmem [shape: f32[1,128], index: 6, kind: input, shape index: {}]
  %s7 = inlined_call_operand.vmem [shape: f32[32,16], index: 7, kind: input, shape index: {}]
  %s8 = inlined_call_operand.vmem [shape: f32[1,16], index: 8, kind: input, shape index: {}]
  %s9 = inlined_call_operand.vmem [shape: f32[16,128], index: 9, kind: input, shape index: {}]
  %s10 = inlined_call_operand.vmem [shape: f32[1,128], index: 10, kind: input, shape index: {}]
  %s11 = inlined_call_operand.hbm [shape: f32[8,128], index: 11, kind: output, shape index: {}]
  %s12 = sld [smem:[#allocation0]]
  $region70: #{tpu_custom_call.1} parent=0
    _
  %s14 = ssub.s32 1, %s12
  %s15 = scalar_select 0, %s14, %s12
  $region1: #{tpu_custom_call.1} parent=0
    #allocation2 [shape = 'u8[49152]{0}', space=vmem, size = 0xc000, scoped, tag = 'input window, operand 0, single buffered']
    #allocation3 [shape = 's32[1]{0}', space=sflag, size = 0x4, scoped, tag = 'scoped memory for tpu_custom_call.1']
    #allocation4 [shape = 's32[1]{0}', space=sflag, size = 0x4, scoped, tag = 'scoped memory for tpu_custom_call.1']
    #allocation5 [shape = 'u8[49152]{0}', space=vmem, size = 0xc000, scoped, tag = 'input window, operand 1, single buffered']
    #allocation6 [shape = 's32[1]{0}', space=sflag, size = 0x4, scoped, tag = 'scoped memory for tpu_custom_call.1']
    #allocation7 [shape = 'u8[196608]{0}', space=vmem, size = 0x30000, scoped, tag = 'input window, operand 3, single buffered']
    #allocation8 [shape = 'u8[196608]{0}', space=vmem, size = 0x30000, scoped, tag = 'input window, operand 5, single buffered']
    #allocation9 [shape = 's32[1]{0}', space=sflag, size = 0x4, scoped, tag = 'scoped memory for tpu_custom_call.1']
    #allocation10 [shape = 'u8[4096]{0}', space=vmem, size = 0x1000, scoped, tag = 'output window, operand 0, single buffered']
    %16 = vsyncpa [#allocation3], 0
    %17 = vsyncpa [#allocation6], 0
    %18 = vsyncpa [#allocation9], 0
    %19 = vsyncpa [#allocation4], 0
    // Predicated region
    $region2: #{tpu_custom_call.1} parent=1 // pred_check
      _
    $region3: #{tpu_custom_call.1} parent=1 // pred_check_branch
      %21 = sbr.rel (0) target = $region5
    $region4: #{tpu_custom_call.1} parent=1 // pred_region
      %s23 = ssub.s32 1536, 1536
      %24 = vsyncadd [#allocation3], %s23
      %s25 = sshll.u32 [#allocation2], 4
      %s26 = int_to_ptr.vmem [resolvable:$true] %s25
      %31 = dma.hbm_to_vmem [thread:$0]  %s0, 1536, %s26, [#allocation3], 128, 128, 8
    $region5: #{tpu_custom_call.1} parent=1 // pred_fallthru
      _
    // Predicated region
    $region6: #{tpu_custom_call.1} parent=1 // pred_check
      _
    $region7: #{tpu_custom_call.1} parent=1 // pred_check_branch
      %33 = sbr.rel (0) target = $region9
    $region8: #{tpu_custom_call.1} parent=1 // pred_region
      %s35 = ssub.s32 1536, 1536
      %36 = vsyncadd [#allocation6], %s35
      %s37 = sshll.u32 [#allocation5], 4
      %s38 = int_to_ptr.vmem [resolvable:$true] %s37
      %43 = dma.hbm_to_vmem [thread:$0]  %s1, 1536, %s38, [#allocation6], 128, 128, 8
    $region9: #{tpu_custom_call.1} parent=1 // pred_fallthru
      _
    // Predicated region
    $region10: #{tpu_custom_call.1} parent=1 // pred_check
      _
    $region11: #{tpu_custom_call.1} parent=1 // pred_check_branch
      %45 = sbr.rel (0) target = $region13
    $region12: #{tpu_custom_call.1} parent=1 // pred_region
      _
    $region13: #{tpu_custom_call.1} parent=1 // pred_fallthru
      _
    // Predicated region
    $region14: #{tpu_custom_call.1} parent=1 // pred_check
      _
    $region15: #{tpu_custom_call.1} parent=1 // pred_check_branch
      %47 = sbr.rel (0) target = $region17
    $region16: #{tpu_custom_call.1} parent=1 // pred_region
      %s49 = ssub.s32 6144, 6144
      %50 = vsyncadd [#allocation6], %s49
      %s51 = sshll.u32 [#allocation7], 4
      %s52 = int_to_ptr.vmem [resolvable:$true] %s51
      %57 = dma.hbm_to_vmem [thread:$0]  %s3, 6144, %s52, [#allocation6], 384, 384, 24
    $region17: #{tpu_custom_call.1} parent=1 // pred_fallthru
      _
    // Predicated region
    $region18: #{tpu_custom_call.1} parent=1 // pred_check
      _
    $region19: #{tpu_custom_call.1} parent=1 // pred_check_branch
      %59 = sbr.rel (0) target = $region21
    $region20: #{tpu_custom_call.1} parent=1 // pred_region
      _
    $region21: #{tpu_custom_call.1} parent=1 // pred_fallthru
      _
    // Predicated region
    $region22: #{tpu_custom_call.1} parent=1 // pred_check
      _
    $region23: #{tpu_custom_call.1} parent=1 // pred_check_branch
      %61 = sbr.rel (0) target = $region25
    $region24: #{tpu_custom_call.1} parent=1 // pred_region
      %s63 = ssub.s32 6144, 6144
      %64 = vsyncadd [#allocation9], %s63
      %s65 = sshll.u32 [#allocation8], 4
      %s66 = int_to_ptr.vmem [resolvable:$true] %s65
      %71 = dma.hbm_to_vmem [thread:$0]  %s5, 6144, %s66, [#allocation9], 384, 384, 24
    $region25: #{tpu_custom_call.1} parent=1 // pred_fallthru
      _
    // Predicated region
    $region26: #{tpu_custom_call.1} parent=1 // pred_check
      _
    $region27: #{tpu_custom_call.1} parent=1 // pred_check_branch
      %73 = sbr.rel (0) target = $region29
    $region28: #{tpu_custom_call.1} parent=1 // pred_region
      _
    $region29: #{tpu_custom_call.1} parent=1 // pred_fallthru
      _
    // Predicated region
    $region30: #{tpu_custom_call.1} parent=1 // pred_check
      _
    $region31: #{tpu_custom_call.1} parent=1 // pred_check_branch
      %75 = sbr.rel (0) target = $region33
    $region32: #{tpu_custom_call.1} parent=1 // pred_region
      _
    $region33: #{tpu_custom_call.1} parent=1 // pred_fallthru
      _
    // Predicated region
    $region34: #{tpu_custom_call.1} parent=1 // pred_check
      _
    $region35: #{tpu_custom_call.1} parent=1 // pred_check_branch
      %77 = sbr.rel (0) target = $region37
    $region36: #{tpu_custom_call.1} parent=1 // pred_region
      _
    $region37: #{tpu_custom_call.1} parent=1 // pred_fallthru
      _
    // Predicated region
    $region38: #{tpu_custom_call.1} parent=1 // pred_check
      _
    $region39: #{tpu_custom_call.1} parent=1 // pred_check_branch
      %79 = sbr.rel (0) target = $region41
    $region40: #{tpu_custom_call.1} parent=1 // pred_region
      _
    $region41: #{tpu_custom_call.1} parent=1 // pred_fallthru
      _
    // Predicated region
    $region42: #{tpu_custom_call.1} parent=1 // pred_check
      _
    $region43: #{tpu_custom_call.1} parent=1 // pred_check_branch
      %81 = sbr.rel (0) target = $region45
    $region44: #{tpu_custom_call.1} parent=1 // pred_region
      _
    $region45: #{tpu_custom_call.1} parent=1 // pred_fallthru
      _
    // Predicated region
    $region46: #{tpu_custom_call.1} parent=1 // pred_check
      _
    $region47: #{tpu_custom_call.1} parent=1 // pred_check_branch
      %83 = sbr.rel (0) target = $region49
    $region48: #{tpu_custom_call.1} parent=1 // pred_region
      %84 = dma.done [#allocation3], 1536
    $region49: #{tpu_custom_call.1} parent=1 // pred_fallthru
      _
    // Predicated region
    $region50: #{tpu_custom_call.1} parent=1 // pred_check
      _
    $region51: #{tpu_custom_call.1} parent=1 // pred_check_branch
      %86 = sbr.rel (0) target = $region53
    $region52: #{tpu_custom_call.1} parent=1 // pred_region
      %87 = dma.done [#allocation6], 1536
    $region53: #{tpu_custom_call.1} parent=1 // pred_fallthru
      _
    // Predicated region
    $region54: #{tpu_custom_call.1} parent=1 // pred_check
      _
    $region55: #{tpu_custom_call.1} parent=1 // pred_check_branch
      %89 = sbr.rel (0) target = $region57
    $region56: #{tpu_custom_call.1} parent=1 // pred_region
      %90 = dma.done [#allocation6], 6144
    $region57: #{tpu_custom_call.1} parent=1 // pred_fallthru
      _
    // Predicated region
    $region58: #{tpu_custom_call.1} parent=1 // pred_check
      _
    $region59: #{tpu_custom_call.1} parent=1 // pred_check_branch
      %92 = sbr.rel (0) target = $region61
    $region60: #{tpu_custom_call.1} parent=1 // pred_region
      %93 = dma.done [#allocation9], 6144
    $region61: #{tpu_custom_call.1} parent=1 // pred_fallthru
      _
    %v94 = vld [vmem:[#allocation2] sm:$0xff]
    %v95 = vld [vmem:[#allocation2 + $0x8] sm:$0xff]
    %v96 = vld [vmem:[#allocation2 + $0x10] sm:$0xff]
    %v97 = vld [vmem:[#allocation2 + $0x18] sm:$0xff]
    %v98 = vld [vmem:[#allocation2 + $0x20] sm:$0xff]
    %v99 = vld [vmem:[#allocation2 + $0x28] sm:$0xff]
    %v100 = vld [vmem:[#allocation2 + $0x30] sm:$0xff]
    %v101 = vld [vmem:[#allocation2 + $0x38] sm:$0xff]
    %v102 = vld [vmem:[#allocation2 + $0x40] sm:$0xff]
    %v103 = vld [vmem:[#allocation2 + $0x48] sm:$0xff]
    %v104 = vld [vmem:[#allocation2 + $0x50] sm:$0xff]
    %v105 = vld [vmem:[#allocation2 + $0x58] sm:$0xff]
    %v106 = vld [vmem:[#allocation7] sm:$0xff]
    %v107 = vld [vmem:[#allocation7 + $0x8] sm:$0xff]
    %v108 = vld [vmem:[#allocation7 + $0x10] sm:$0xff]
    %v109 = vld [vmem:[#allocation7 + $0x18] sm:$0xff]
    %v110 = vld [vmem:[#allocation7 + $0x20] sm:$0xff]
    %v111 = vld [vmem:[#allocation7 + $0x28] sm:$0xff]
    %v112 = vld [vmem:[#allocation7 + $0x30] sm:$0xff]
    %v113 = vld [vmem:[#allocation7 + $0x38] sm:$0xff]
    %v114 = vld [vmem:[#allocation7 + $0x40] sm:$0xff]
    %v115 = vld [vmem:[#allocation7 + $0x48] sm:$0xff]
    %v116 = vld [vmem:[#allocation7 + $0x50] sm:$0xff]
    %v117 = vld [vmem:[#allocation7 + $0x58] sm:$0xff]
    %v118 = vld [vmem:[#allocation7 + $0x60] sm:$0xff]
    %v119 = vld [vmem:[#allocation7 + $0x68] sm:$0xff]
    %v120 = vld [vmem:[#allocation7 + $0x70] sm:$0xff]
    %v121 = vld [vmem:[#allocation7 + $0x78] sm:$0xff]
    %v122 = vld [vmem:[#allocation7 + $0x80] sm:$0xff]
    %v123 = vld [vmem:[#allocation7 + $0x88] sm:$0xff]
    %v124 = vld [vmem:[#allocation7 + $0x90] sm:$0xff]
    %v125 = vld [vmem:[#allocation7 + $0x98] sm:$0xff]
    %v126 = vld [vmem:[#allocation7 + $0xa0] sm:$0xff]
    %v127 = vld [vmem:[#allocation7 + $0xa8] sm:$0xff]
    %v128 = vld [vmem:[#allocation7 + $0xb0] sm:$0xff]
    %v129 = vld [vmem:[#allocation7 + $0xb8] sm:$0xff]
    %v130 = vld [vmem:[#allocation7 + $0xc0] sm:$0xff]
    %v131 = vld [vmem:[#allocation7 + $0xc8] sm:$0xff]
    %v132 = vld [vmem:[#allocation7 + $0xd0] sm:$0xff]
    %v133 = vld [vmem:[#allocation7 + $0xd8] sm:$0xff]
    %v134 = vld [vmem:[#allocation7 + $0xe0] sm:$0xff]
    %v135 = vld [vmem:[#allocation7 + $0xe8] sm:$0xff]
    %v136 = vld [vmem:[#allocation7 + $0xf0] sm:$0xff]
    %v137 = vld [vmem:[#allocation7 + $0xf8] sm:$0xff]
    %v138 = vld [vmem:[#allocation7 + $0x100] sm:$0xff]
    %v139 = vld [vmem:[#allocation7 + $0x108] sm:$0xff]
    %v140 = vld [vmem:[#allocation7 + $0x110] sm:$0xff]
    %v141 = vld [vmem:[#allocation7 + $0x118] sm:$0xff]
    %v142 = vld [vmem:[#allocation7 + $0x120] sm:$0xff]
    %v143 = vld [vmem:[#allocation7 + $0x128] sm:$0xff]
    %v144 = vld [vmem:[#allocation7 + $0x130] sm:$0xff]
    %v145 = vld [vmem:[#allocation7 + $0x138] sm:$0xff]
    %v146 = vld [vmem:[#allocation7 + $0x140] sm:$0xff]
    %v147 = vld [vmem:[#allocation7 + $0x148] sm:$0xff]
    %v148 = vld [vmem:[#allocation7 + $0x150] sm:$0xff]
    %v149 = vld [vmem:[#allocation7 + $0x158] sm:$0xff]
    %v150 = vld [vmem:[#allocation7 + $0x160] sm:$0xff]
    %v151 = vld [vmem:[#allocation7 + $0x168] sm:$0xff]
    %v152 = vld [vmem:[#allocation7 + $0x170] sm:$0xff]
    %v153 = vld [vmem:[#allocation7 + $0x178] sm:$0xff]
    %v154 = vld [vmem:[%s4] sm:$0x7]
    %v156 = vlaneseq
    %v157 = vshrl.u32 %v156, 7
    %v158 = vsub.s32 0, %v157
    %v159 = vrot.slane %v154, %v158
    %v160 = vlaneseq
    %v161 = vshrl.u32 %v160, 7
    %v162 = vsub.s32 1, %v161
    %v163 = vrot.slane %v154, %v162
    %v164 = vlaneseq
    %v165 = vshrl.u32 %v164, 7
    %v166 = vsub.s32 2, %v165
    %v167 = vrot.slane %v154, %v166
    %171 = vmatprep.subr.mxu0 %v107
    %172 = vmatpush1.msra.mxu0 %v106
    %173 = vmatprep.subr.mxu0 %v110
    %174 = vmatpush1.msra.mxu0 %v109
    %175 = vmatprep.subr.mxu0 %v113
    %176 = vmatpush1.msra.mxu0 %v112
    %177 = vmatprep.subr.mxu0 %v116
    %178 = vmatpush1.msra.mxu0 %v115
    %179 = vmatprep.subr.mxu0 %v119
    %180 = vmatpush1.msra.mxu0 %v118
    %181 = vmatprep.subr.mxu0 %v122
    %182 = vmatpush1.msra.mxu0 %v121
    %183 = vmatprep.subr.mxu0 %v125
    %184 = vmatpush1.msra.mxu0 %v124
    %185 = vmatprep.subr.mxu0 %v128
    %186 = vmatpush1.msra.mxu0 %v127
    %187 = vmatprep.subr.mxu0 %v131
    %188 = vmatpush1.msra.mxu0 %v130
    %189 = vmatprep.subr.mxu0 %v134
    %190 = vmatpush1.msra.mxu0 %v133
    %191 = vmatprep.subr.mxu0 %v137
    %192 = vmatpush1.msra.mxu0 %v136
    %193 = vmatprep.subr.mxu0 %v140
    %194 = vmatpush1.msra.mxu0 %v139
    %195 = vmatprep.subr.mxu0 %v143
    %196 = vmatpush1.msra.mxu0 %v142
    %197 = vmatprep.subr.mxu0 %v146
    %198 = vmatpush1.msra.mxu0 %v145
    %199 = vmatprep.subr.mxu0 %v149
    %200 = vmatpush1.msra.mxu0 %v148
    %201 = vmatprep.subr.mxu0 %v152
    %202 = vmatpush1.msra.mxu0 %v151
    %203 = vmatprep.subr.mxu0 0.0
    %204 = vmatpush1.msra.mxu0 0.0
    %205 = vmatprep.subr.mxu0 0.0
    %206 = vmatpush1.msra.mxu0 0.0
    %207 = vmatprep.subr.mxu0 0.0
    %208 = vmatpush1.msra.mxu0 0.0
    %209 = vmatprep.subr.mxu0 0.0
    %210 = vmatpush1.msra.mxu0 0.0
    %211 = vmatprep.subr.mxu0 0.0
    %212 = vmatpush1.msra.mxu0 0.0
    %213 = vmatprep.subr.mxu0 0.0
    %214 = vmatpush1.msra.mxu0 0.0
    %215 = vmatprep.subr.mxu0 0.0
    %216 = vmatpush1.msra.mxu0 0.0
    %217 = vmatprep.subr.mxu0 0.0
    %218 = vmatpush1.msra.mxu0 0.0
    %219 = vmatprep.subr.mxu0 0.0
    %220 = vmatpush1.msra.mxu0 0.0
    %221 = vmatprep.subr.mxu0 0.0
    %222 = vmatpush1.msra.mxu0 0.0
    %223 = vmatprep.subr.mxu0 0.0
    %224 = vmatpush1.msra.mxu0 0.0
    %225 = vmatprep.subr.mxu0 0.0
    %226 = vmatpush1.msra.mxu0 0.0
    %227 = vmatprep.subr.mxu0 0.0
    %228 = vmatpush1.msra.mxu0 0.0
    %229 = vmatprep.subr.mxu0 0.0
    %230 = vmatpush1.msra.mxu0 0.0
    %231 = vmatprep.subr.mxu0 0.0
    %232 = vmatpush1.msra.mxu0 0.0
    %233 = vmatprep.subr.mxu0 0.0
    %234 = vmatpush1.msra.mxu0 0.0
    %235 = vmatprep.mubr.f32.mxu0 0.0
    %236 = vmatmul.mubr.f32.gmra.mrb[0].mxu0 %v94
    %v237 = vpop.f32.mrb[0].mxu0
    %v238 = vadd.f32 %v159, %v237
    %v239 = vpop.f32.mrb[0].mxu0
    %v240 = vadd.f32 %v163, %v239
    %241 = vmatprep.mubr.f32.mxu0 0.0
    %242 = vmatmul.mubr.f32.gmra.mrb[0].mxu0 %v95
    %v243 = vpop.f32.mrb[0].mxu0
    %v244 = vadd.f32 %v159, %v243
    %v245 = vpop.f32.mrb[0].mxu0
    %v246 = vadd.f32 %v163, %v245
    %247 = vmatprep.mubr.f32.mxu0 0.0
    %248 = vmatmul.mubr.f32.gmra.mrb[0].mxu0 %v96
    %v249 = vpop.f32.mrb[0].mxu0
    %v250 = vadd.f32 %v159, %v249
    %v251 = vpop.f32.mrb[0].mxu0
    %v252 = vadd.f32 %v163, %v251
    %253 = vmatprep.mubr.f32.mxu0 0.0
    %254 = vmatmul.mubr.f32.gmra.mrb[0].mxu0 %v97
    %v255 = vpop.f32.mrb[0].mxu0
    %v256 = vadd.f32 %v159, %v255
    %v257 = vpop.f32.mrb[0].mxu0
    %v258 = vadd.f32 %v163, %v257
    %259 = vmatprep.mubr.f32.mxu0 0.0
    %260 = vmatmul.mubr.f32.gmra.mrb[0].mxu0 %v98
    %v261 = vpop.f32.mrb[0].mxu0
    %v262 = vadd.f32 %v159, %v261
    %v263 = vpop.f32.mrb[0].mxu0
    %v264 = vadd.f32 %v163, %v263
    %265 = vmatprep.mubr.f32.mxu0 0.0
    %266 = vmatmul.mubr.f32.gmra.mrb[0].mxu0 %v99
    %v267 = vpop.f32.mrb[0].mxu0
    %v268 = vadd.f32 %v159, %v267
    %v269 = vpop.f32.mrb[0].mxu0
    %v270 = vadd.f32 %v163, %v269
    %271 = vmatprep.mubr.f32.mxu0 0.0
    %272 = vmatmul.mubr.f32.gmra.mrb[0].mxu0 %v100
    %v273 = vpop.f32.mrb[0].mxu0
    %v274 = vadd.f32 %v159, %v273
    %v275 = vpop.f32.mrb[0].mxu0
    %v276 = vadd.f32 %v163, %v275
    %277 = vmatprep.mubr.f32.mxu0 0.0
    %278 = vmatmul.mubr.f32.gmra.mrb[0].mxu0 %v101
    %v279 = vpop.f32.mrb[0].mxu0
    %v280 = vadd.f32 %v159, %v279
    %v281 = vpop.f32.mrb[0].mxu0
    %v282 = vadd.f32 %v163, %v281
    %283 = vmatprep.mubr.f32.mxu0 0.0
    %284 = vmatmul.mubr.f32.gmra.mrb[0].mxu0 %v102
    %v285 = vpop.f32.mrb[0].mxu0
    %v286 = vadd.f32 %v159, %v285
    %v287 = vpop.f32.mrb[0].mxu0
    %v288 = vadd.f32 %v163, %v287
    %289 = vmatprep.mubr.f32.mxu0 0.0
    %290 = vmatmul.mubr.f32.gmra.mrb[0].mxu0 %v103
    %v291 = vpop.f32.mrb[0].mxu0
    %v292 = vadd.f32 %v159, %v291
    %v293 = vpop.f32.mrb[0].mxu0
    %v294 = vadd.f32 %v163, %v293
    %295 = vmatprep.mubr.f32.mxu0 0.0
    %296 = vmatmul.mubr.f32.gmra.mrb[0].mxu0 %v104
    %v297 = vpop.f32.mrb[0].mxu0
    %v298 = vadd.f32 %v159, %v297
    %v299 = vpop.f32.mrb[0].mxu0
    %v300 = vadd.f32 %v163, %v299
    %301 = vmatprep.mubr.f32.mxu0 0.0
    %302 = vmatmul.mubr.f32.gmra.mrb[0].mxu0 %v105
    %v303 = vpop.f32.mrb[0].mxu0
    %v304 = vadd.f32 %v159, %v303
    %v305 = vpop.f32.mrb[0].mxu0
    %v306 = vadd.f32 %v163, %v305
    %307 = vdwg.mxu0
    %308 = vmatprep.subr.mxu0 0.0
    %309 = vmatpush1.msra.mxu0 %v108
    %310 = vmatprep.subr.mxu0 0.0
    %311 = vmatpush1.msra.mxu0 %v111
    %312 = vmatprep.subr.mxu0 0.0
    %313 = vmatpush1.msra.mxu0 %v114
    %314 = vmatprep.subr.mxu0 0.0
    %315 = vmatpush1.msra.mxu0 %v117
    %316 = vmatprep.subr.mxu0 0.0
    %317 = vmatpush1.msra.mxu0 %v120
    %318 = vmatprep.subr.mxu0 0.0
    %319 = vmatpush1.msra.mxu0 %v123
    %320 = vmatprep.subr.mxu0 0.0
    %321 = vmatpush1.msra.mxu0 %v126
    %322 = vmatprep.subr.mxu0 0.0
    %323 = vmatpush1.msra.mxu0 %v129
    %324 = vmatprep.subr.mxu0 0.0
    %325 = vmatpush1.msra.mxu0 %v132
    %326 = vmatprep.subr.mxu0 0.0
    %327 = vmatpush1.msra.mxu0 %v135
    %328 = vmatprep.subr.mxu0 0.0
    %329 = vmatpush1.msra.mxu0 %v138
    %330 = vmatprep.subr.mxu0 0.0
    %331 = vmatpush1.msra.mxu0 %v141
    %332 = vmatprep.subr.mxu0 0.0
    %333 = vmatpush1.msra.mxu0 %v144
    %334 = vmatprep.subr.mxu0 0.0
    %335 = vmatpush1.msra.mxu0 %v147
    %336 = vmatprep.subr.mxu0 0.0
    %337 = vmatpush1.msra.mxu0 %v150
    %338 = vmatprep.subr.mxu0 0.0
    %339 = vmatpush1.msra.mxu0 %v153
    %340 = vmatprep.subr.mxu0 0.0
    %341 = vmatpush1.msra.mxu0 0.0
    %342 = vmatprep.subr.mxu0 0.0
    %343 = vmatpush1.msra.mxu0 0.0
    %344 = vmatprep.subr.mxu0 0.0
    %345 = vmatpush1.msra.mxu0 0.0
    %346 = vmatprep.subr.mxu0 0.0
    %347 = vmatpush1.msra.mxu0 0.0
    %348 = vmatprep.subr.mxu0 0.0
    %349 = vmatpush1.msra.mxu0 0.0
    %350 = vmatprep.subr.mxu0 0.0
    %351 = vmatpush1.msra.mxu0 0.0
    %352 = vmatprep.subr.mxu0 0.0
    %353 = vmatpush1.msra.mxu0 0.0
    %354 = vmatprep.subr.mxu0 0.0
    %355 = vmatpush1.msra.mxu0 0.0
    %356 = vmatprep.subr.mxu0 0.0
    %357 = vmatpush1.msra.mxu0 0.0
    %358 = vmatprep.subr.mxu0 0.0
    %359 = vmatpush1.msra.mxu0 0.0
    %360 = vmatprep.subr.mxu0 0.0
    %361 = vmatpush1.msra.mxu0 0.0
    %362 = vmatprep.subr.mxu0 0.0
    %363 = vmatpush1.msra.mxu0 0.0
    %364 = vmatprep.subr.mxu0 0.0
    %365 = vmatpush1.msra.mxu0 0.0
    %366 = vmatprep.subr.mxu0 0.0
    %367 = vmatpush1.msra.mxu0 0.0
    %368 = vmatprep.subr.mxu0 0.0
    %369 = vmatpush1.msra.mxu0 0.0
    %370 = vmatprep.subr.mxu0 0.0
    %371 = vmatpush1.msra.mxu0 0.0
    %372 = vmatprep.mubr.f32.mxu0 0.0
    %373 = vmatmul.mubr.f32.gmra.mrb[0].mxu0 %v94
    %v374 = vpop.f32.mrb[0].mxu0
    %v375 = vadd.f32 %v167, %v374
    %v376 = vpop.f32.mrb[0].mxu0
    %377 = vmatprep.mubr.f32.mxu0 0.0
    %378 = vmatmul.mubr.f32.gmra.mrb[0].mxu0 %v95
    %v379 = vpop.f32.mrb[0].mxu0
    %v380 = vadd.f32 %v167, %v379
    %v381 = vpop.f32.mrb[0].mxu0
    %382 = vmatprep.mubr.f32.mxu0 0.0
    %383 = vmatmul.mubr.f32.gmra.mrb[0].mxu0 %v96
    %v384 = vpop.f32.mrb[0].mxu0
    %v385 = vadd.f32 %v167, %v384
    %v386 = vpop.f32.mrb[0].mxu0
    %387 = vmatprep.mubr.f32.mxu0 0.0
    %388 = vmatmul.mubr.f32.gmra.mrb[0].mxu0 %v97
    %v389 = vpop.f32.mrb[0].mxu0
    %v390 = vadd.f32 %v167, %v389
    %v391 = vpop.f32.mrb[0].mxu0
    %392 = vmatprep.mubr.f32.mxu0 0.0
    %393 = vmatmul.mubr.f32.gmra.mrb[0].mxu0 %v98
    %v394 = vpop.f32.mrb[0].mxu0
    %v395 = vadd.f32 %v167, %v394
    %v396 = vpop.f32.mrb[0].mxu0
    %397 = vmatprep.mubr.f32.mxu0 0.0
    %398 = vmatmul.mubr.f32.gmra.mrb[0].mxu0 %v99
    %v399 = vpop.f32.mrb[0].mxu0
    %v400 = vadd.f32 %v167, %v399
    %v401 = vpop.f32.mrb[0].mxu0
    %402 = vmatprep.mubr.f32.mxu0 0.0
    %403 = vmatmul.mubr.f32.gmra.mrb[0].mxu0 %v100
    %v404 = vpop.f32.mrb[0].mxu0
    %v405 = vadd.f32 %v167, %v404
    %v406 = vpop.f32.mrb[0].mxu0
    %407 = vmatprep.mubr.f32.mxu0 0.0
    %408 = vmatmul.mubr.f32.gmra.mrb[0].mxu0 %v101
    %v409 = vpop.f32.mrb[0].mxu0
    %v410 = vadd.f32 %v167, %v409
    %v411 = vpop.f32.mrb[0].mxu0
    %412 = vmatprep.mubr.f32.mxu0 0.0
    %413 = vmatmul.mubr.f32.gmra.mrb[0].mxu0 %v102
    %v414 = vpop.f32.mrb[0].mxu0
    %v415 = vadd.f32 %v167, %v414
    %v416 = vpop.f32.mrb[0].mxu0
    %417 = vmatprep.mubr.f32.mxu0 0.0
    %418 = vmatmul.mubr.f32.gmra.mrb[0].mxu0 %v103
    %v419 = vpop.f32.mrb[0].mxu0
    %v420 = vadd.f32 %v167, %v419
    %v421 = vpop.f32.mrb[0].mxu0
    %422 = vmatprep.mubr.f32.mxu0 0.0
    %423 = vmatmul.mubr.f32.gmra.mrb[0].mxu0 %v104
    %v424 = vpop.f32.mrb[0].mxu0
    %v425 = vadd.f32 %v167, %v424
    %v426 = vpop.f32.mrb[0].mxu0
    %427 = vmatprep.mubr.f32.mxu0 0.0
    %428 = vmatmul.mubr.f32.gmra.mrb[0].mxu0 %v105
    %v429 = vpop.f32.mrb[0].mxu0
    %v430 = vadd.f32 %v167, %v429
    %v431 = vpop.f32.mrb[0].mxu0
    %432 = vdwg.mxu0
    %v433 = vld [vmem:[#allocation8] sm:$0xff]
    %v434 = vld [vmem:[#allocation8 + $0x8] sm:$0xff]
    %v435 = vld [vmem:[#allocation8 + $0x10] sm:$0xff]
    %v436 = vld [vmem:[#allocation8 + $0x18] sm:$0xff]
    %v437 = vld [vmem:[#allocation8 + $0x20] sm:$0xff]
    %v438 = vld [vmem:[#allocation8 + $0x28] sm:$0xff]
    %v439 = vld [vmem:[#allocation8 + $0x30] sm:$0xff]
    %v440 = vld [vmem:[#allocation8 + $0x38] sm:$0xff]
    %v441 = vld [vmem:[#allocation8 + $0x40] sm:$0xff]
    %v442 = vld [vmem:[#allocation8 + $0x48] sm:$0xff]
    %v443 = vld [vmem:[#allocation8 + $0x50] sm:$0xff]
    %v444 = vld [vmem:[#allocation8 + $0x58] sm:$0xff]
    %v445 = vld [vmem:[#allocation8 + $0x60] sm:$0xff]
    %v446 = vld [vmem:[#allocation8 + $0x68] sm:$0xff]
    %v447 = vld [vmem:[#allocation8 + $0x70] sm:$0xff]
    %v448 = vld [vmem:[#allocation8 + $0x78] sm:$0xff]
    %v449 = vld [vmem:[#allocation8 + $0x80] sm:$0xff]
    %v450 = vld [vmem:[#allocation8 + $0x88] sm:$0xff]
    %v451 = vld [vmem:[#allocation8 + $0x90] sm:$0xff]
    %v452 = vld [vmem:[#allocation8 + $0x98] sm:$0xff]
    %v453 = vld [vmem:[#allocation8 + $0xa0] sm:$0xff]
    %v454 = vld [vmem:[#allocation8 + $0xa8] sm:$0xff]
    %v455 = vld [vmem:[#allocation8 + $0xb0] sm:$0xff]
    %v456 = vld [vmem:[#allocation8 + $0xb8] sm:$0xff]
    %v457 = vld [vmem:[#allocation8 + $0xc0] sm:$0xff]
    %v458 = vld [vmem:[#allocation8 + $0xc8] sm:$0xff]
    %v459 = vld [vmem:[#allocation8 + $0xd0] sm:$0xff]
    %v460 = vld [vmem:[#allocation8 + $0xd8] sm:$0xff]
    %v461 = vld [vmem:[#allocation8 + $0xe0] sm:$0xff]
    %v462 = vld [vmem:[#allocation8 + $0xe8] sm:$0xff]
    %v463 = vld [vmem:[#allocation8 + $0xf0] sm:$0xff]
    %v464 = vld [vmem:[#allocation8 + $0xf8] sm:$0xff]
    %v465 = vld [vmem:[#allocation8 + $0x100] sm:$0xff]
    %v466 = vld [vmem:[#allocation8 + $0x108] sm:$0xff]
    %v467 = vld [vmem:[#allocation8 + $0x110] sm:$0xff]
    %v468 = vld [vmem:[#allocation8 + $0x118] sm:$0xff]
    %v469 = vld [vmem:[#allocation8 + $0x120] sm:$0xff]
    %v470 = vld [vmem:[#allocation8 + $0x128] sm:$0xff]
    %v471 = vld [vmem:[#allocation8 + $0x130] sm:$0xff]
    %v472 = vld [vmem:[#allocation8 + $0x138] sm:$0xff]
    %v473 = vld [vmem:[#allocation8 + $0x140] sm:$0xff]
    %v474 = vld [vmem:[#allocation8 + $0x148] sm:$0xff]
    %v475 = vld [vmem:[#allocation8 + $0x150] sm:$0xff]
    %v476 = vld [vmem:[#allocation8 + $0x158] sm:$0xff]
    %v477 = vld [vmem:[#allocation8 + $0x160] sm:$0xff]
    %v478 = vld [vmem:[#allocation8 + $0x168] sm:$0xff]
    %v479 = vld [vmem:[#allocation8 + $0x170] sm:$0xff]
    %v480 = vld [vmem:[#allocation8 + $0x178] sm:$0xff]
    %v481 = vld [vmem:[%s6] sm:$0x1]
    %v483 = vlaneseq
    %v484 = vshrl.u32 %v483, 7
    %v485 = vsub.s32 0, %v484
    %v486 = vrot.slane %v481, %v485
    %v488 = vld [vmem:[%s2] sm:$0xff]
    %489 = vmatprep.subr.mxu0 %v434
    %490 = vmatpush1.msra.mxu0 %v433
    %491 = vmatprep.subr.mxu0 %v437
    %492 = vmatpush1.msra.mxu0 %v436
    %493 = vmatprep.subr.mxu0 %v440
    %494 = vmatpush1.msra.mxu0 %v439
    %495 = vmatprep.subr.mxu0 %v443
    %496 = vmatpush1.msra.mxu0 %v442
    %497 = vmatprep.subr.mxu0 %v446
    %498 = vmatpush1.msra.mxu0 %v445
    %499 = vmatprep.subr.mxu0 %v449
    %500 = vmatpush1.msra.mxu0 %v448
    %501 = vmatprep.subr.mxu0 %v452
    %502 = vmatpush1.msra.mxu0 %v451
    %503 = vmatprep.subr.mxu0 %v455
    %504 = vmatpush1.msra.mxu0 %v454
    %505 = vmatprep.subr.mxu0 %v458
    %506 = vmatpush1.msra.mxu0 %v457
    %507 = vmatprep.subr.mxu0 %v461
    %508 = vmatpush1.msra.mxu0 %v460
    %509 = vmatprep.subr.mxu0 %v464
    %510 = vmatpush1.msra.mxu0 %v463
    %511 = vmatprep.subr.mxu0 %v467
    %512 = vmatpush1.msra.mxu0 %v466
    %513 = vmatprep.subr.mxu0 %v470
    %514 = vmatpush1.msra.mxu0 %v469
    %515 = vmatprep.subr.mxu0 %v473
    %516 = vmatpush1.msra.mxu0 %v472
    %517 = vmatprep.subr.mxu0 %v476
    %518 = vmatpush1.msra.mxu0 %v475
    %519 = vmatprep.subr.mxu0 %v479
    %520 = vmatpush1.msra.mxu0 %v478
    %521 = vmatprep.subr.mxu0 0.0
    %522 = vmatpush1.msra.mxu0 0.0
    %523 = vmatprep.subr.mxu0 0.0
    %524 = vmatpush1.msra.mxu0 0.0
    %525 = vmatprep.subr.mxu0 0.0
    %526 = vmatpush1.msra.mxu0 0.0
    %527 = vmatprep.subr.mxu0 0.0
    %528 = vmatpush1.msra.mxu0 0.0
    %529 = vmatprep.subr.mxu0 0.0
    %530 = vmatpush1.msra.mxu0 0.0
    %531 = vmatprep.subr.mxu0 0.0
    %532 = vmatpush1.msra.mxu0 0.0
    %533 = vmatprep.subr.mxu0 0.0
    %534 = vmatpush1.msra.mxu0 0.0
    %535 = vmatprep.subr.mxu0 0.0
    %536 = vmatpush1.msra.mxu0 0.0
    %537 = vmatprep.subr.mxu0 0.0
    %538 = vmatpush1.msra.mxu0 0.0
    %539 = vmatprep.subr.mxu0 0.0
    %540 = vmatpush1.msra.mxu0 0.0
    %541 = vmatprep.subr.mxu0 0.0
    %542 = vmatpush1.msra.mxu0 0.0
    %543 = vmatprep.subr.mxu0 0.0
    %544 = vmatpush1.msra.mxu0 0.0
    %545 = vmatprep.subr.mxu0 0.0
    %546 = vmatpush1.msra.mxu0 0.0
    %547 = vmatprep.subr.mxu0 0.0
    %548 = vmatpush1.msra.mxu0 0.0
    %549 = vmatprep.subr.mxu0 0.0
    %550 = vmatpush1.msra.mxu0 0.0
    %551 = vmatprep.subr.mxu0 0.0
    %552 = vmatpush1.msra.mxu0 0.0
    %553 = vmatprep.mubr.f32.mxu0 0.0
    %554 = vmatmul.mubr.f32.gmra.mrb[0].mxu0 %v488
    %v555 = vpop.f32.mrb[0].mxu0
    %v556 = vadd.f32 0.0, %v555
    %v557 = vpop.f32.mrb[0].mxu0
    %v558 = vadd.f32 0.0, %v557
    %559 = vdwg.mxu0
    %560 = vmatprep.subr.mxu0 0.0
    %561 = vmatpush1.msra.mxu0 %v435
    %562 = vmatprep.subr.mxu0 0.0
    %563 = vmatpush1.msra.mxu0 %v438
    %564 = vmatprep.subr.mxu0 0.0
    %565 = vmatpush1.msra.mxu0 %v441
    %566 = vmatprep.subr.mxu0 0.0
    %567 = vmatpush1.msra.mxu0 %v444
    %568 = vmatprep.subr.mxu0 0.0
    %569 = vmatpush1.msra.mxu0 %v447
    %570 = vmatprep.subr.mxu0 0.0
    %571 = vmatpush1.msra.mxu0 %v450
    %572 = vmatprep.subr.mxu0 0.0
    %573 = vmatpush1.msra.mxu0 %v453
    %574 = vmatprep.subr.mxu0 0.0
    %575 = vmatpush1.msra.mxu0 %v456
    %576 = vmatprep.subr.mxu0 0.0
    %577 = vmatpush1.msra.mxu0 %v459
    %578 = vmatprep.subr.mxu0 0.0
    %579 = vmatpush1.msra.mxu0 %v462
    %580 = vmatprep.subr.mxu0 0.0
    %581 = vmatpush1.msra.mxu0 %v465
    %582 = vmatprep.subr.mxu0 0.0
    %583 = vmatpush1.msra.mxu0 %v468
    %584 = vmatprep.subr.mxu0 0.0
    %585 = vmatpush1.msra.mxu0 %v471
    %586 = vmatprep.subr.mxu0 0.0
    %587 = vmatpush1.msra.mxu0 %v474
    %588 = vmatprep.subr.mxu0 0.0
    %589 = vmatpush1.msra.mxu0 %v477
    %590 = vmatprep.subr.mxu0 0.0
    %591 = vmatpush1.msra.mxu0 %v480
    %592 = vmatprep.subr.mxu0 0.0
    %593 = vmatpush1.msra.mxu0 0.0
    %594 = vmatprep.subr.mxu0 0.0
    %595 = vmatpush1.msra.mxu0 0.0
    %596 = vmatprep.subr.mxu0 0.0
    %597 = vmatpush1.msra.mxu0 0.0
    %598 = vmatprep.subr.mxu0 0.0
    %599 = vmatpush1.msra.mxu0 0.0
    %600 = vmatprep.subr.mxu0 0.0
    %601 = vmatpush1.msra.mxu0 0.0
    %602 = vmatprep.subr.mxu0 0.0
    %603 = vmatpush1.msra.mxu0 0.0
    %604 = vmatprep.subr.mxu0 0.0
    %605 = vmatpush1.msra.mxu0 0.0
    %606 = vmatprep.subr.mxu0 0.0
    %607 = vmatpush1.msra.mxu0 0.0
    %608 = vmatprep.subr.mxu0 0.0
    %609 = vmatpush1.msra.mxu0 0.0
    %610 = vmatprep.subr.mxu0 0.0
    %611 = vmatpush1.msra.mxu0 0.0
    %612 = vmatprep.subr.mxu0 0.0
    %613 = vmatpush1.msra.mxu0 0.0
    %614 = vmatprep.subr.mxu0 0.0
    %615 = vmatpush1.msra.mxu0 0.0
    %616 = vmatprep.subr.mxu0 0.0
    %617 = vmatpush1.msra.mxu0 0.0
    %618 = vmatprep.subr.mxu0 0.0
    %619 = vmatpush1.msra.mxu0 0.0
    %620 = vmatprep.subr.mxu0 0.0
    %621 = vmatpush1.msra.mxu0 0.0
    %622 = vmatprep.subr.mxu0 0.0
    %623 = vmatpush1.msra.mxu0 0.0
    %624 = vmatprep.mubr.f32.mxu0 0.0
    %625 = vmatmul.mubr.f32.gmra.mrb[0].mxu0 %v488
    %v626 = vpop.f32.mrb[0].mxu0
    %v627 = vadd.f32 0.0, %v626
    %v628 = vpop.f32.mrb[0].mxu0
    %629 = vdwg.mxu0
    %v630 = vadd.f32 %v238, %v556
    %v631 = vadd.f32 %v240, %v558
    %v632 = vmul.f32 %v630, 0.5
    %v633 = vmul.f32 %v631, 0.5
    %v634 = vtanh.pop %v632
    %v635 = vtanh.pop %v633
    %v636 = vmul.f32 %v634, 0.5
    %v637 = vmul.f32 %v635, 0.5
    %v638 = vadd.f32 %v636, 0.5
    %v639 = vadd.f32 %v637, 0.5
    %v640 = vadd.f32 %v627, %v486
    %v641 = vmul.f32 %v638, %v640
    %v642 = vadd.f32 %v375, %v641
    %v643 = vtanh.pop %v642
    %v644 = vsub.f32 1.0, %v639
    %v645 = vmul.f32 %v644, %v643
    %v646 = vmul.f32 %v639, %v488
    %v647 = vadd.f32 %v645, %v646
    %v648 = vld [vmem:[#allocation5] sm:$0xff]
    %vm649 = vcmp.ne.f32.partialorder %v648, 0.0
    %v650 = vsel %vm649, %v647, %v488
    %651 = vmatprep.subr.mxu0 %v434
    %652 = vmatpush1.msra.mxu0 %v433
    %653 = vmatprep.subr.mxu0 %v437
    %654 = vmatpush1.msra.mxu0 %v436
    %655 = vmatprep.subr.mxu0 %v440
    %656 = vmatpush1.msra.mxu0 %v439
    %657 = vmatprep.subr.mxu0 %v443
    %658 = vmatpush1.msra.mxu0 %v442
    %659 = vmatprep.subr.mxu0 %v446
    %660 = vmatpush1.msra.mxu0 %v445
    %661 = vmatprep.subr.mxu0 %v449
    %662 = vmatpush1.msra.mxu0 %v448
    %663 = vmatprep.subr.mxu0 %v452
    %664 = vmatpush1.msra.mxu0 %v451
    %665 = vmatprep.subr.mxu0 %v455
    %666 = vmatpush1.msra.mxu0 %v454
    %667 = vmatprep.subr.mxu0 %v458
    %668 = vmatpush1.msra.mxu0 %v457
    %669 = vmatprep.subr.mxu0 %v461
    %670 = vmatpush1.msra.mxu0 %v460
    %671 = vmatprep.subr.mxu0 %v464
    %672 = vmatpush1.msra.mxu0 %v463
    %673 = vmatprep.subr.mxu0 %v467
    %674 = vmatpush1.msra.mxu0 %v466
    %675 = vmatprep.subr.mxu0 %v470
    %676 = vmatpush1.msra.mxu0 %v469
    %677 = vmatprep.subr.mxu0 %v473
    %678 = vmatpush1.msra.mxu0 %v472
    %679 = vmatprep.subr.mxu0 %v476
    %680 = vmatpush1.msra.mxu0 %v475
    %681 = vmatprep.subr.mxu0 %v479
    %682 = vmatpush1.msra.mxu0 %v478
    %683 = vmatprep.subr.mxu0 0.0
    %684 = vmatpush1.msra.mxu0 0.0
    %685 = vmatprep.subr.mxu0 0.0
    %686 = vmatpush1.msra.mxu0 0.0
    %687 = vmatprep.subr.mxu0 0.0
    %688 = vmatpush1.msra.mxu0 0.0
    %689 = vmatprep.subr.mxu0 0.0
    %690 = vmatpush1.msra.mxu0 0.0
    %691 = vmatprep.subr.mxu0 0.0
    %692 = vmatpush1.msra.mxu0 0.0
    %693 = vmatprep.subr.mxu0 0.0
    %694 = vmatpush1.msra.mxu0 0.0
    %695 = vmatprep.subr.mxu0 0.0
    %696 = vmatpush1.msra.mxu0 0.0
    %697 = vmatprep.subr.mxu0 0.0
    %698 = vmatpush1.msra.mxu0 0.0
    %699 = vmatprep.subr.mxu0 0.0
    %700 = vmatpush1.msra.mxu0 0.0
    %701 = vmatprep.subr.mxu0 0.0
    %702 = vmatpush1.msra.mxu0 0.0
    %703 = vmatprep.subr.mxu0 0.0
    %704 = vmatpush1.msra.mxu0 0.0
    %705 = vmatprep.subr.mxu0 0.0
    %706 = vmatpush1.msra.mxu0 0.0
    %707 = vmatprep.subr.mxu0 0.0
    %708 = vmatpush1.msra.mxu0 0.0
    %709 = vmatprep.subr.mxu0 0.0
    %710 = vmatpush1.msra.mxu0 0.0
    %711 = vmatprep.subr.mxu0 0.0
    %712 = vmatpush1.msra.mxu0 0.0
    %713 = vmatprep.subr.mxu0 0.0
    %714 = vmatpush1.msra.mxu0 0.0
    %715 = vmatprep.mubr.f32.mxu0 0.0
    %716 = vmatmul.mubr.f32.gmra.mrb[0].mxu0 %v650
    %v717 = vpop.f32.mrb[0].mxu0
    %v718 = vadd.f32 0.0, %v717
    %v719 = vpop.f32.mrb[0].mxu0
    %v720 = vadd.f32 0.0, %v719
    %721 = vdwg.mxu0
    %722 = vmatprep.subr.mxu0 0.0
    %723 = vmatpush1.msra.mxu0 %v435
    %724 = vmatprep.subr.mxu0 0.0
    %725 = vmatpush1.msra.mxu0 %v438
    %726 = vmatprep.subr.mxu0 0.0
    %727 = vmatpush1.msra.mxu0 %v441
    %728 = vmatprep.subr.mxu0 0.0
    %729 = vmatpush1.msra.mxu0 %v444
    %730 = vmatprep.subr.mxu0 0.0
    %731 = vmatpush1.msra.mxu0 %v447
    %732 = vmatprep.subr.mxu0 0.0
    %733 = vmatpush1.msra.mxu0 %v450
    %734 = vmatprep.subr.mxu0 0.0
    %735 = vmatpush1.msra.mxu0 %v453
    %736 = vmatprep.subr.mxu0 0.0
    %737 = vmatpush1.msra.mxu0 %v456
    %738 = vmatprep.subr.mxu0 0.0
    %739 = vmatpush1.msra.mxu0 %v459
    %740 = vmatprep.subr.mxu0 0.0
    %741 = vmatpush1.msra.mxu0 %v462
    %742 = vmatprep.subr.mxu0 0.0
    %743 = vmatpush1.msra.mxu0 %v465
    %744 = vmatprep.subr.mxu0 0.0
    %745 = vmatpush1.msra.mxu0 %v468
    %746 = vmatprep.subr.mxu0 0.0
    %747 = vmatpush1.msra.mxu0 %v471
    %748 = vmatprep.subr.mxu0 0.0
    %749 = vmatpush1.msra.mxu0 %v474
    %750 = vmatprep.subr.mxu0 0.0
    %751 = vmatpush1.msra.mxu0 %v477
    %752 = vmatprep.subr.mxu0 0.0
    %753 = vmatpush1.msra.mxu0 %v480
    %754 = vmatprep.subr.mxu0 0.0
    %755 = vmatpush1.msra.mxu0 0.0
    %756 = vmatprep.subr.mxu0 0.0
    %757 = vmatpush1.msra.mxu0 0.0
    %758 = vmatprep.subr.mxu0 0.0
    %759 = vmatpush1.msra.mxu0 0.0
    %760 = vmatprep.subr.mxu0 0.0
    %761 = vmatpush1.msra.mxu0 0.0
    %762 = vmatprep.subr.mxu0 0.0
    %763 = vmatpush1.msra.mxu0 0.0
    %764 = vmatprep.subr.mxu0 0.0
    %765 = vmatpush1.msra.mxu0 0.0
    %766 = vmatprep.subr.mxu0 0.0
    %767 = vmatpush1.msra.mxu0 0.0
    %768 = vmatprep.subr.mxu0 0.0
    %769 = vmatpush1.msra.mxu0 0.0
    %770 = vmatprep.subr.mxu0 0.0
    %771 = vmatpush1.msra.mxu0 0.0
    %772 = vmatprep.subr.mxu0 0.0
    %773 = vmatpush1.msra.mxu0 0.0
    %774 = vmatprep.subr.mxu0 0.0
    %775 = vmatpush1.msra.mxu0 0.0
    %776 = vmatprep.subr.mxu0 0.0
    %777 = vmatpush1.msra.mxu0 0.0
    %778 = vmatprep.subr.mxu0 0.0
    %779 = vmatpush1.msra.mxu0 0.0
    %780 = vmatprep.subr.mxu0 0.0
    %781 = vmatpush1.msra.mxu0 0.0
    %782 = vmatprep.subr.mxu0 0.0
    %783 = vmatpush1.msra.mxu0 0.0
    %784 = vmatprep.subr.mxu0 0.0
    %785 = vmatpush1.msra.mxu0 0.0
    %786 = vmatprep.mubr.f32.mxu0 0.0
    %787 = vmatmul.mubr.f32.gmra.mrb[0].mxu0 %v650
    %v788 = vpop.f32.mrb[0].mxu0
    %v789 = vadd.f32 0.0, %v788
    %v790 = vpop.f32.mrb[0].mxu0
    %791 = vdwg.mxu0
    %v792 = vadd.f32 %v244, %v718
    %v793 = vadd.f32 %v246, %v720
    %v794 = vmul.f32 %v792, 0.5
    %v795 = vmul.f32 %v793, 0.5
    %v796 = vtanh.pop %v794
    %v797 = vtanh.pop %v795
    %v798 = vmul.f32 %v796, 0.5
    %v799 = vmul.f32 %v797, 0.5
    %v800 = vadd.f32 %v798, 0.5
    %v801 = vadd.f32 %v799, 0.5
    %v802 = vadd.f32 %v789, %v486
    %v803 = vmul.f32 %v800, %v802
    %v804 = vadd.f32 %v380, %v803
    %v805 = vtanh.pop %v804
    %v806 = vsub.f32 1.0, %v801
    %v807 = vmul.f32 %v806, %v805
    %v808 = vmul.f32 %v801, %v650
    %v809 = vadd.f32 %v807, %v808
    %v810 = vld [vmem:[#allocation5 + $0x8] sm:$0xff]
    %vm811 = vcmp.ne.f32.partialorder %v810, 0.0
    %v812 = vsel %vm811, %v809, %v650
    %813 = vmatprep.subr.mxu0 %v434
    %814 = vmatpush1.msra.mxu0 %v433
    %815 = vmatprep.subr.mxu0 %v437
    %816 = vmatpush1.msra.mxu0 %v436
    %817 = vmatprep.subr.mxu0 %v440
    %818 = vmatpush1.msra.mxu0 %v439
    %819 = vmatprep.subr.mxu0 %v443
    %820 = vmatpush1.msra.mxu0 %v442
    %821 = vmatprep.subr.mxu0 %v446
    %822 = vmatpush1.msra.mxu0 %v445
    %823 = vmatprep.subr.mxu0 %v449
    %824 = vmatpush1.msra.mxu0 %v448
    %825 = vmatprep.subr.mxu0 %v452
    %826 = vmatpush1.msra.mxu0 %v451
    %827 = vmatprep.subr.mxu0 %v455
    %828 = vmatpush1.msra.mxu0 %v454
    %829 = vmatprep.subr.mxu0 %v458
    %830 = vmatpush1.msra.mxu0 %v457
    %831 = vmatprep.subr.mxu0 %v461
    %832 = vmatpush1.msra.mxu0 %v460
    %833 = vmatprep.subr.mxu0 %v464
    %834 = vmatpush1.msra.mxu0 %v463
    %835 = vmatprep.subr.mxu0 %v467
    %836 = vmatpush1.msra.mxu0 %v466
    %837 = vmatprep.subr.mxu0 %v470
    %838 = vmatpush1.msra.mxu0 %v469
    %839 = vmatprep.subr.mxu0 %v473
    %840 = vmatpush1.msra.mxu0 %v472
    %841 = vmatprep.subr.mxu0 %v476
    %842 = vmatpush1.msra.mxu0 %v475
    %843 = vmatprep.subr.mxu0 %v479
    %844 = vmatpush1.msra.mxu0 %v478
    %845 = vmatprep.subr.mxu0 0.0
    %846 = vmatpush1.msra.mxu0 0.0
    %847 = vmatprep.subr.mxu0 0.0
    %848 = vmatpush1.msra.mxu0 0.0
    %849 = vmatprep.subr.mxu0 0.0
    %850 = vmatpush1.msra.mxu0 0.0
    %851 = vmatprep.subr.mxu0 0.0
    %852 = vmatpush1.msra.mxu0 0.0
    %853 = vmatprep.subr.mxu0 0.0
    %854 = vmatpush1.msra.mxu0 0.0
    %855 = vmatprep.subr.mxu0 0.0
    %856 = vmatpush1.msra.mxu0 0.0
    %857 = vmatprep.subr.mxu0 0.0
    %858 = vmatpush1.msra.mxu0 0.0
    %859 = vmatprep.subr.mxu0 0.0
    %860 = vmatpush1.msra.mxu0 0.0
    %861 = vmatprep.subr.mxu0 0.0
    %862 = vmatpush1.msra.mxu0 0.0
    %863 = vmatprep.subr.mxu0 0.0
    %864 = vmatpush1.msra.mxu0 0.0
    %865 = vmatprep.subr.mxu0 0.0
    %866 = vmatpush1.msra.mxu0 0.0
    %867 = vmatprep.subr.mxu0 0.0
    %868 = vmatpush1.msra.mxu0 0.0
    %869 = vmatprep.subr.mxu0 0.0
    %870 = vmatpush1.msra.mxu0 0.0
    %871 = vmatprep.subr.mxu0 0.0
    %872 = vmatpush1.msra.mxu0 0.0
    %873 = vmatprep.subr.mxu0 0.0
    %874 = vmatpush1.msra.mxu0 0.0
    %875 = vmatprep.subr.mxu0 0.0
    %876 = vmatpush1.msra.mxu0 0.0
    %877 = vmatprep.mubr.f32.mxu0 0.0
    %878 = vmatmul.mubr.f32.gmra.mrb[0].mxu0 %v812
    %v879 = vpop.f32.mrb[0].mxu0
    %v880 = vadd.f32 0.0, %v879
    %v881 = vpop.f32.mrb[0].mxu0
    %v882 = vadd.f32 0.0, %v881
    %883 = vdwg.mxu0
    %884 = vmatprep.subr.mxu0 0.0
    %885 = vmatpush1.msra.mxu0 %v435
    %886 = vmatprep.subr.mxu0 0.0
    %887 = vmatpush1.msra.mxu0 %v438
    %888 = vmatprep.subr.mxu0 0.0
    %889 = vmatpush1.msra.mxu0 %v441
    %890 = vmatprep.subr.mxu0 0.0
    %891 = vmatpush1.msra.mxu0 %v444
    %892 = vmatprep.subr.mxu0 0.0
    %893 = vmatpush1.msra.mxu0 %v447
    %894 = vmatprep.subr.mxu0 0.0
    %895 = vmatpush1.msra.mxu0 %v450
    %896 = vmatprep.subr.mxu0 0.0
    %897 = vmatpush1.msra.mxu0 %v453
    %898 = vmatprep.subr.mxu0 0.0
    %899 = vmatpush1.msra.mxu0 %v456
    %900 = vmatprep.subr.mxu0 0.0
    %901 = vmatpush1.msra.mxu0 %v459
    %902 = vmatprep.subr.mxu0 0.0
    %903 = vmatpush1.msra.mxu0 %v462
    %904 = vmatprep.subr.mxu0 0.0
    %905 = vmatpush1.msra.mxu0 %v465
    %906 = vmatprep.subr.mxu0 0.0
    %907 = vmatpush1.msra.mxu0 %v468
    %908 = vmatprep.subr.mxu0 0.0
    %909 = vmatpush1.msra.mxu0 %v471
    %910 = vmatprep.subr.mxu0 0.0
    %911 = vmatpush1.msra.mxu0 %v474
    %912 = vmatprep.subr.mxu0 0.0
    %913 = vmatpush1.msra.mxu0 %v477
    %914 = vmatprep.subr.mxu0 0.0
    %915 = vmatpush1.msra.mxu0 %v480
    %916 = vmatprep.subr.mxu0 0.0
    %917 = vmatpush1.msra.mxu0 0.0
    %918 = vmatprep.subr.mxu0 0.0
    %919 = vmatpush1.msra.mxu0 0.0
    %920 = vmatprep.subr.mxu0 0.0
    %921 = vmatpush1.msra.mxu0 0.0
    %922 = vmatprep.subr.mxu0 0.0
    %923 = vmatpush1.msra.mxu0 0.0
    %924 = vmatprep.subr.mxu0 0.0
    %925 = vmatpush1.msra.mxu0 0.0
    %926 = vmatprep.subr.mxu0 0.0
    %927 = vmatpush1.msra.mxu0 0.0
    %928 = vmatprep.subr.mxu0 0.0
    %929 = vmatpush1.msra.mxu0 0.0
    %930 = vmatprep.subr.mxu0 0.0
    %931 = vmatpush1.msra.mxu0 0.0
    %932 = vmatprep.subr.mxu0 0.0
    %933 = vmatpush1.msra.mxu0 0.0
    %934 = vmatprep.subr.mxu0 0.0
    %935 = vmatpush1.msra.mxu0 0.0
    %936 = vmatprep.subr.mxu0 0.0
    %937 = vmatpush1.msra.mxu0 0.0
    %938 = vmatprep.subr.mxu0 0.0
    %939 = vmatpush1.msra.mxu0 0.0
    %940 = vmatprep.subr.mxu0 0.0
    %941 = vmatpush1.msra.mxu0 0.0
    %942 = vmatprep.subr.mxu0 0.0
    %943 = vmatpush1.msra.mxu0 0.0
    %944 = vmatprep.subr.mxu0 0.0
    %945 = vmatpush1.msra.mxu0 0.0
    %946 = vmatprep.subr.mxu0 0.0
    %947 = vmatpush1.msra.mxu0 0.0
    %948 = vmatprep.mubr.f32.mxu0 0.0
    %949 = vmatmul.mubr.f32.gmra.mrb[0].mxu0 %v812
    %v950 = vpop.f32.mrb[0].mxu0
    %v951 = vadd.f32 0.0, %v950
    %v952 = vpop.f32.mrb[0].mxu0
    %953 = vdwg.mxu0
    %v954 = vadd.f32 %v250, %v880
    %v955 = vadd.f32 %v252, %v882
    %v956 = vmul.f32 %v954, 0.5
    %v957 = vmul.f32 %v955, 0.5
    %v958 = vtanh.pop %v956
    %v959 = vtanh.pop %v957
    %v960 = vmul.f32 %v958, 0.5
    %v961 = vmul.f32 %v959, 0.5
    %v962 = vadd.f32 %v960, 0.5
    %v963 = vadd.f32 %v961, 0.5
    %v964 = vadd.f32 %v951, %v486
    %v965 = vmul.f32 %v962, %v964
    %v966 = vadd.f32 %v385, %v965
    %v967 = vtanh.pop %v966
    %v968 = vsub.f32 1.0, %v963
    %v969 = vmul.f32 %v968, %v967
    %v970 = vmul.f32 %v963, %v812
    %v971 = vadd.f32 %v969, %v970
    %v972 = vld [vmem:[#allocation5 + $0x10] sm:$0xff]
    %vm973 = vcmp.ne.f32.partialorder %v972, 0.0
    %v974 = vsel %vm973, %v971, %v812
    %975 = vmatprep.subr.mxu0 %v434
    %976 = vmatpush1.msra.mxu0 %v433
    %977 = vmatprep.subr.mxu0 %v437
    %978 = vmatpush1.msra.mxu0 %v436
    %979 = vmatprep.subr.mxu0 %v440
    %980 = vmatpush1.msra.mxu0 %v439
    %981 = vmatprep.subr.mxu0 %v443
    %982 = vmatpush1.msra.mxu0 %v442
    %983 = vmatprep.subr.mxu0 %v446
    %984 = vmatpush1.msra.mxu0 %v445
    %985 = vmatprep.subr.mxu0 %v449
    %986 = vmatpush1.msra.mxu0 %v448
    %987 = vmatprep.subr.mxu0 %v452
    %988 = vmatpush1.msra.mxu0 %v451
    %989 = vmatprep.subr.mxu0 %v455
    %990 = vmatpush1.msra.mxu0 %v454
    %991 = vmatprep.subr.mxu0 %v458
    %992 = vmatpush1.msra.mxu0 %v457
    %993 = vmatprep.subr.mxu0 %v461
    %994 = vmatpush1.msra.mxu0 %v460
    %995 = vmatprep.subr.mxu0 %v464
    %996 = vmatpush1.msra.mxu0 %v463
    %997 = vmatprep.subr.mxu0 %v467
    %998 = vmatpush1.msra.mxu0 %v466
    %999 = vmatprep.subr.mxu0 %v470
    %1000 = vmatpush1.msra.mxu0 %v469
    %1001 = vmatprep.subr.mxu0 %v473
    %1002 = vmatpush1.msra.mxu0 %v472
    %1003 = vmatprep.subr.mxu0 %v476
    %1004 = vmatpush1.msra.mxu0 %v475
    %1005 = vmatprep.subr.mxu0 %v479
    %1006 = vmatpush1.msra.mxu0 %v478
    %1007 = vmatprep.subr.mxu0 0.0
    %1008 = vmatpush1.msra.mxu0 0.0
    %1009 = vmatprep.subr.mxu0 0.0
    %1010 = vmatpush1.msra.mxu0 0.0
    %1011 = vmatprep.subr.mxu0 0.0
    %1012 = vmatpush1.msra.mxu0 0.0
    %1013 = vmatprep.subr.mxu0 0.0
    %1014 = vmatpush1.msra.mxu0 0.0
    %1015 = vmatprep.subr.mxu0 0.0
    %1016 = vmatpush1.msra.mxu0 0.0
    %1017 = vmatprep.subr.mxu0 0.0
    %1018 = vmatpush1.msra.mxu0 0.0
    %1019 = vmatprep.subr.mxu0 0.0
    %1020 = vmatpush1.msra.mxu0 0.0
    %1021 = vmatprep.subr.mxu0 0.0
    %1022 = vmatpush1.msra.mxu0 0.0
    %1023 = vmatprep.subr.mxu0 0.0
    %1024 = vmatpush1.msra.mxu0 0.0
    %1025 = vmatprep.subr.mxu0 0.0
    %1026 = vmatpush1.msra.mxu0 0.0
    %1027 = vmatprep.subr.mxu0 0.0
    %1028 = vmatpush1.msra.mxu0 0.0
    %1029 = vmatprep.subr.mxu0 0.0
    %1030 = vmatpush1.msra.mxu0 0.0
    %1031 = vmatprep.subr.mxu0 0.0
    %1032 = vmatpush1.msra.mxu0 0.0
    %1033 = vmatprep.subr.mxu0 0.0
    %1034 = vmatpush1.msra.mxu0 0.0
    %1035 = vmatprep.subr.mxu0 0.0
    %1036 = vmatpush1.msra.mxu0 0.0
    %1037 = vmatprep.subr.mxu0 0.0
    %1038 = vmatpush1.msra.mxu0 0.0
    %1039 = vmatprep.mubr.f32.mxu0 0.0
    %1040 = vmatmul.mubr.f32.gmra.mrb[0].mxu0 %v974
    %v1041 = vpop.f32.mrb[0].mxu0
    %v1042 = vadd.f32 0.0, %v1041
    %v1043 = vpop.f32.mrb[0].mxu0
    %v1044 = vadd.f32 0.0, %v1043
    %1045 = vdwg.mxu0
    %1046 = vmatprep.subr.mxu0 0.0
    %1047 = vmatpush1.msra.mxu0 %v435
    %1048 = vmatprep.subr.mxu0 0.0
    %1049 = vmatpush1.msra.mxu0 %v438
    %1050 = vmatprep.subr.mxu0 0.0
    %1051 = vmatpush1.msra.mxu0 %v441
    %1052 = vmatprep.subr.mxu0 0.0
    %1053 = vmatpush1.msra.mxu0 %v444
    %1054 = vmatprep.subr.mxu0 0.0
    %1055 = vmatpush1.msra.mxu0 %v447
    %1056 = vmatprep.subr.mxu0 0.0
    %1057 = vmatpush1.msra.mxu0 %v450
    %1058 = vmatprep.subr.mxu0 0.0
    %1059 = vmatpush1.msra.mxu0 %v453
    %1060 = vmatprep.subr.mxu0 0.0
    %1061 = vmatpush1.msra.mxu0 %v456
    %1062 = vmatprep.subr.mxu0 0.0
    %1063 = vmatpush1.msra.mxu0 %v459
    %1064 = vmatprep.subr.mxu0 0.0
    %1065 = vmatpush1.msra.mxu0 %v462
    %1066 = vmatprep.subr.mxu0 0.0
    %1067 = vmatpush1.msra.mxu0 %v465
    %1068 = vmatprep.subr.mxu0 0.0
    %1069 = vmatpush1.msra.mxu0 %v468
    %1070 = vmatprep.subr.mxu0 0.0
    %1071 = vmatpush1.msra.mxu0 %v471
    %1072 = vmatprep.subr.mxu0 0.0
    %1073 = vmatpush1.msra.mxu0 %v474
    %1074 = vmatprep.subr.mxu0 0.0
    %1075 = vmatpush1.msra.mxu0 %v477
    %1076 = vmatprep.subr.mxu0 0.0
    %1077 = vmatpush1.msra.mxu0 %v480
    %1078 = vmatprep.subr.mxu0 0.0
    %1079 = vmatpush1.msra.mxu0 0.0
    %1080 = vmatprep.subr.mxu0 0.0
    %1081 = vmatpush1.msra.mxu0 0.0
    %1082 = vmatprep.subr.mxu0 0.0
    %1083 = vmatpush1.msra.mxu0 0.0
    %1084 = vmatprep.subr.mxu0 0.0
    %1085 = vmatpush1.msra.mxu0 0.0
    %1086 = vmatprep.subr.mxu0 0.0
    %1087 = vmatpush1.msra.mxu0 0.0
    %1088 = vmatprep.subr.mxu0 0.0
    %1089 = vmatpush1.msra.mxu0 0.0
    %1090 = vmatprep.subr.mxu0 0.0
    %1091 = vmatpush1.msra.mxu0 0.0
    %1092 = vmatprep.subr.mxu0 0.0
    %1093 = vmatpush1.msra.mxu0 0.0
    %1094 = vmatprep.subr.mxu0 0.0
    %1095 = vmatpush1.msra.mxu0 0.0
    %1096 = vmatprep.subr.mxu0 0.0
    %1097 = vmatpush1.msra.mxu0 0.0
    %1098 = vmatprep.subr.mxu0 0.0
    %1099 = vmatpush1.msra.mxu0 0.0
    %1100 = vmatprep.subr.mxu0 0.0
    %1101 = vmatpush1.msra.mxu0 0.0
    %1102 = vmatprep.subr.mxu0 0.0
    %1103 = vmatpush1.msra.mxu0 0.0
    %1104 = vmatprep.subr.mxu0 0.0
    %1105 = vmatpush1.msra.mxu0 0.0
    %1106 = vmatprep.subr.mxu0 0.0
    %1107 = vmatpush1.msra.mxu0 0.0
    %1108 = vmatprep.subr.mxu0 0.0
    %1109 = vmatpush1.msra.mxu0 0.0
    %1110 = vmatprep.mubr.f32.mxu0 0.0
    %1111 = vmatmul.mubr.f32.gmra.mrb[0].mxu0 %v974
    %v1112 = vpop.f32.mrb[0].mxu0
    %v1113 = vadd.f32 0.0, %v1112
    %v1114 = vpop.f32.mrb[0].mxu0
    %1115 = vdwg.mxu0
    %v1116 = vadd.f32 %v256, %v1042
    %v1117 = vadd.f32 %v258, %v1044
    %v1118 = vmul.f32 %v1116, 0.5
    %v1119 = vmul.f32 %v1117, 0.5
    %v1120 = vtanh.pop %v1118
    %v1121 = vtanh.pop %v1119
    %v1122 = vmul.f32 %v1120, 0.5
    %v1123 = vmul.f32 %v1121, 0.5
    %v1124 = vadd.f32 %v1122, 0.5
    %v1125 = vadd.f32 %v1123, 0.5
    %v1126 = vadd.f32 %v1113, %v486
    %v1127 = vmul.f32 %v1124, %v1126
    %v1128 = vadd.f32 %v390, %v1127
    %v1129 = vtanh.pop %v1128
    %v1130 = vsub.f32 1.0, %v1125
    %v1131 = vmul.f32 %v1130, %v1129
    %v1132 = vmul.f32 %v1125, %v974
    %v1133 = vadd.f32 %v1131, %v1132
    %v1134 = vld [vmem:[#allocation5 + $0x18] sm:$0xff]
    %vm1135 = vcmp.ne.f32.partialorder %v1134, 0.0
    %v1136 = vsel %vm1135, %v1133, %v974
    %1137 = vmatprep.subr.mxu0 %v434
    %1138 = vmatpush1.msra.mxu0 %v433
    %1139 = vmatprep.subr.mxu0 %v437
    %1140 = vmatpush1.msra.mxu0 %v436
    %1141 = vmatprep.subr.mxu0 %v440
    %1142 = vmatpush1.msra.mxu0 %v439
    %1143 = vmatprep.subr.mxu0 %v443
    %1144 = vmatpush1.msra.mxu0 %v442
    %1145 = vmatprep.subr.mxu0 %v446
    %1146 = vmatpush1.msra.mxu0 %v445
    %1147 = vmatprep.subr.mxu0 %v449
    %1148 = vmatpush1.msra.mxu0 %v448
    %1149 = vmatprep.subr.mxu0 %v452
    %1150 = vmatpush1.msra.mxu0 %v451
    %1151 = vmatprep.subr.mxu0 %v455
    %1152 = vmatpush1.msra.mxu0 %v454
    %1153 = vmatprep.subr.mxu0 %v458
    %1154 = vmatpush1.msra.mxu0 %v457
    %1155 = vmatprep.subr.mxu0 %v461
    %1156 = vmatpush1.msra.mxu0 %v460
    %1157 = vmatprep.subr.mxu0 %v464
    %1158 = vmatpush1.msra.mxu0 %v463
    %1159 = vmatprep.subr.mxu0 %v467
    %1160 = vmatpush1.msra.mxu0 %v466
    %1161 = vmatprep.subr.mxu0 %v470
    %1162 = vmatpush1.msra.mxu0 %v469
    %1163 = vmatprep.subr.mxu0 %v473
    %1164 = vmatpush1.msra.mxu0 %v472
    %1165 = vmatprep.subr.mxu0 %v476
    %1166 = vmatpush1.msra.mxu0 %v475
    %1167 = vmatprep.subr.mxu0 %v479
    %1168 = vmatpush1.msra.mxu0 %v478
    %1169 = vmatprep.subr.mxu0 0.0
    %1170 = vmatpush1.msra.mxu0 0.0
    %1171 = vmatprep.subr.mxu0 0.0
    %1172 = vmatpush1.msra.mxu0 0.0
    %1173 = vmatprep.subr.mxu0 0.0
    %1174 = vmatpush1.msra.mxu0 0.0
    %1175 = vmatprep.subr.mxu0 0.0
    %1176 = vmatpush1.msra.mxu0 0.0
    %1177 = vmatprep.subr.mxu0 0.0
    %1178 = vmatpush1.msra.mxu0 0.0
    %1179 = vmatprep.subr.mxu0 0.0
    %1180 = vmatpush1.msra.mxu0 0.0
    %1181 = vmatprep.subr.mxu0 0.0
    %1182 = vmatpush1.msra.mxu0 0.0
    %1183 = vmatprep.subr.mxu0 0.0
    %1184 = vmatpush1.msra.mxu0 0.0
    %1185 = vmatprep.subr.mxu0 0.0
    %1186 = vmatpush1.msra.mxu0 0.0
    %1187 = vmatprep.subr.mxu0 0.0
    %1188 = vmatpush1.msra.mxu0 0.0
    %1189 = vmatprep.subr.mxu0 0.0
    %1190 = vmatpush1.msra.mxu0 0.0
    %1191 = vmatprep.subr.mxu0 0.0
    %1192 = vmatpush1.msra.mxu0 0.0
    %1193 = vmatprep.subr.mxu0 0.0
    %1194 = vmatpush1.msra.mxu0 0.0
    %1195 = vmatprep.subr.mxu0 0.0
    %1196 = vmatpush1.msra.mxu0 0.0
    %1197 = vmatprep.subr.mxu0 0.0
    %1198 = vmatpush1.msra.mxu0 0.0
    %1199 = vmatprep.subr.mxu0 0.0
    %1200 = vmatpush1.msra.mxu0 0.0
    %1201 = vmatprep.mubr.f32.mxu0 0.0
    %1202 = vmatmul.mubr.f32.gmra.mrb[0].mxu0 %v1136
    %v1203 = vpop.f32.mrb[0].mxu0
    %v1204 = vadd.f32 0.0, %v1203
    %v1205 = vpop.f32.mrb[0].mxu0
    %v1206 = vadd.f32 0.0, %v1205
    %1207 = vdwg.mxu0
    %1208 = vmatprep.subr.mxu0 0.0
    %1209 = vmatpush1.msra.mxu0 %v435
    %1210 = vmatprep.subr.mxu0 0.0
    %1211 = vmatpush1.msra.mxu0 %v438
    %1212 = vmatprep.subr.mxu0 0.0
    %1213 = vmatpush1.msra.mxu0 %v441
    %1214 = vmatprep.subr.mxu0 0.0
    %1215 = vmatpush1.msra.mxu0 %v444
    %1216 = vmatprep.subr.mxu0 0.0
    %1217 = vmatpush1.msra.mxu0 %v447
    %1218 = vmatprep.subr.mxu0 0.0
    %1219 = vmatpush1.msra.mxu0 %v450
    %1220 = vmatprep.subr.mxu0 0.0
    %1221 = vmatpush1.msra.mxu0 %v453
    %1222 = vmatprep.subr.mxu0 0.0
    %1223 = vmatpush1.msra.mxu0 %v456
    %1224 = vmatprep.subr.mxu0 0.0
    %1225 = vmatpush1.msra.mxu0 %v459
    %1226 = vmatprep.subr.mxu0 0.0
    %1227 = vmatpush1.msra.mxu0 %v462
    %1228 = vmatprep.subr.mxu0 0.0
    %1229 = vmatpush1.msra.mxu0 %v465
    %1230 = vmatprep.subr.mxu0 0.0
    %1231 = vmatpush1.msra.mxu0 %v468
    %1232 = vmatprep.subr.mxu0 0.0
    %1233 = vmatpush1.msra.mxu0 %v471
    %1234 = vmatprep.subr.mxu0 0.0
    %1235 = vmatpush1.msra.mxu0 %v474
    %1236 = vmatprep.subr.mxu0 0.0
    %1237 = vmatpush1.msra.mxu0 %v477
    %1238 = vmatprep.subr.mxu0 0.0
    %1239 = vmatpush1.msra.mxu0 %v480
    %1240 = vmatprep.subr.mxu0 0.0
    %1241 = vmatpush1.msra.mxu0 0.0
    %1242 = vmatprep.subr.mxu0 0.0
    %1243 = vmatpush1.msra.mxu0 0.0
    %1244 = vmatprep.subr.mxu0 0.0
    %1245 = vmatpush1.msra.mxu0 0.0
    %1246 = vmatprep.subr.mxu0 0.0
    %1247 = vmatpush1.msra.mxu0 0.0
    %1248 = vmatprep.subr.mxu0 0.0
    %1249 = vmatpush1.msra.mxu0 0.0
    %1250 = vmatprep.subr.mxu0 0.0
    %1251 = vmatpush1.msra.mxu0 0.0
    %1252 = vmatprep.subr.mxu0 0.0
    %1253 = vmatpush1.msra.mxu0 0.0
    %1254 = vmatprep.subr.mxu0 0.0
    %1255 = vmatpush1.msra.mxu0 0.0
    %1256 = vmatprep.subr.mxu0 0.0
    %1257 = vmatpush1.msra.mxu0 0.0
    %1258 = vmatprep.subr.mxu0 0.0
    %1259 = vmatpush1.msra.mxu0 0.0
    %1260 = vmatprep.subr.mxu0 0.0
    %1261 = vmatpush1.msra.mxu0 0.0
    %1262 = vmatprep.subr.mxu0 0.0
    %1263 = vmatpush1.msra.mxu0 0.0
    %1264 = vmatprep.subr.mxu0 0.0
    %1265 = vmatpush1.msra.mxu0 0.0
    %1266 = vmatprep.subr.mxu0 0.0
    %1267 = vmatpush1.msra.mxu0 0.0
    %1268 = vmatprep.subr.mxu0 0.0
    %1269 = vmatpush1.msra.mxu0 0.0
    %1270 = vmatprep.subr.mxu0 0.0
    %1271 = vmatpush1.msra.mxu0 0.0
    %1272 = vmatprep.mubr.f32.mxu0 0.0
    %1273 = vmatmul.mubr.f32.gmra.mrb[0].mxu0 %v1136
    %v1274 = vpop.f32.mrb[0].mxu0
    %v1275 = vadd.f32 0.0, %v1274
    %v1276 = vpop.f32.mrb[0].mxu0
    %1277 = vdwg.mxu0
    %v1278 = vadd.f32 %v262, %v1204
    %v1279 = vadd.f32 %v264, %v1206
    %v1280 = vmul.f32 %v1278, 0.5
    %v1281 = vmul.f32 %v1279, 0.5
    %v1282 = vtanh.pop %v1280
    %v1283 = vtanh.pop %v1281
    %v1284 = vmul.f32 %v1282, 0.5
    %v1285 = vmul.f32 %v1283, 0.5
    %v1286 = vadd.f32 %v1284, 0.5
    %v1287 = vadd.f32 %v1285, 0.5
    %v1288 = vadd.f32 %v1275, %v486
    %v1289 = vmul.f32 %v1286, %v1288
    %v1290 = vadd.f32 %v395, %v1289
    %v1291 = vtanh.pop %v1290
    %v1292 = vsub.f32 1.0, %v1287
    %v1293 = vmul.f32 %v1292, %v1291
    %v1294 = vmul.f32 %v1287, %v1136
    %v1295 = vadd.f32 %v1293, %v1294
    %v1296 = vld [vmem:[#allocation5 + $0x20] sm:$0xff]
    %vm1297 = vcmp.ne.f32.partialorder %v1296, 0.0
    %v1298 = vsel %vm1297, %v1295, %v1136
    %1299 = vmatprep.subr.mxu0 %v434
    %1300 = vmatpush1.msra.mxu0 %v433
    %1301 = vmatprep.subr.mxu0 %v437
    %1302 = vmatpush1.msra.mxu0 %v436
    %1303 = vmatprep.subr.mxu0 %v440
    %1304 = vmatpush1.msra.mxu0 %v439
    %1305 = vmatprep.subr.mxu0 %v443
    %1306 = vmatpush1.msra.mxu0 %v442
    %1307 = vmatprep.subr.mxu0 %v446
    %1308 = vmatpush1.msra.mxu0 %v445
    %1309 = vmatprep.subr.mxu0 %v449
    %1310 = vmatpush1.msra.mxu0 %v448
    %1311 = vmatprep.subr.mxu0 %v452
    %1312 = vmatpush1.msra.mxu0 %v451
    %1313 = vmatprep.subr.mxu0 %v455
    %1314 = vmatpush1.msra.mxu0 %v454
    %1315 = vmatprep.subr.mxu0 %v458
    %1316 = vmatpush1.msra.mxu0 %v457
    %1317 = vmatprep.subr.mxu0 %v461
    %1318 = vmatpush1.msra.mxu0 %v460
    %1319 = vmatprep.subr.mxu0 %v464
    %1320 = vmatpush1.msra.mxu0 %v463
    %1321 = vmatprep.subr.mxu0 %v467
    %1322 = vmatpush1.msra.mxu0 %v466
    %1323 = vmatprep.subr.mxu0 %v470
    %1324 = vmatpush1.msra.mxu0 %v469
    %1325 = vmatprep.subr.mxu0 %v473
    %1326 = vmatpush1.msra.mxu0 %v472
    %1327 = vmatprep.subr.mxu0 %v476
    %1328 = vmatpush1.msra.mxu0 %v475
    %1329 = vmatprep.subr.mxu0 %v479
    %1330 = vmatpush1.msra.mxu0 %v478
    %1331 = vmatprep.subr.mxu0 0.0
    %1332 = vmatpush1.msra.mxu0 0.0
    %1333 = vmatprep.subr.mxu0 0.0
    %1334 = vmatpush1.msra.mxu0 0.0
    %1335 = vmatprep.subr.mxu0 0.0
    %1336 = vmatpush1.msra.mxu0 0.0
    %1337 = vmatprep.subr.mxu0 0.0
    %1338 = vmatpush1.msra.mxu0 0.0
    %1339 = vmatprep.subr.mxu0 0.0
    %1340 = vmatpush1.msra.mxu0 0.0
    %1341 = vmatprep.subr.mxu0 0.0
    %1342 = vmatpush1.msra.mxu0 0.0
    %1343 = vmatprep.subr.mxu0 0.0
    %1344 = vmatpush1.msra.mxu0 0.0
    %1345 = vmatprep.subr.mxu0 0.0
    %1346 = vmatpush1.msra.mxu0 0.0
    %1347 = vmatprep.subr.mxu0 0.0
    %1348 = vmatpush1.msra.mxu0 0.0
    %1349 = vmatprep.subr.mxu0 0.0
    %1350 = vmatpush1.msra.mxu0 0.0
    %1351 = vmatprep.subr.mxu0 0.0
    %1352 = vmatpush1.msra.mxu0 0.0
    %1353 = vmatprep.subr.mxu0 0.0
    %1354 = vmatpush1.msra.mxu0 0.0
    %1355 = vmatprep.subr.mxu0 0.0
    %1356 = vmatpush1.msra.mxu0 0.0
    %1357 = vmatprep.subr.mxu0 0.0
    %1358 = vmatpush1.msra.mxu0 0.0
    %1359 = vmatprep.subr.mxu0 0.0
    %1360 = vmatpush1.msra.mxu0 0.0
    %1361 = vmatprep.subr.mxu0 0.0
    %1362 = vmatpush1.msra.mxu0 0.0
    %1363 = vmatprep.mubr.f32.mxu0 0.0
    %1364 = vmatmul.mubr.f32.gmra.mrb[0].mxu0 %v1298
    %v1365 = vpop.f32.mrb[0].mxu0
    %v1366 = vadd.f32 0.0, %v1365
    %v1367 = vpop.f32.mrb[0].mxu0
    %v1368 = vadd.f32 0.0, %v1367
    %1369 = vdwg.mxu0
    %1370 = vmatprep.subr.mxu0 0.0
    %1371 = vmatpush1.msra.mxu0 %v435
    %1372 = vmatprep.subr.mxu0 0.0
    %1373 = vmatpush1.msra.mxu0 %v438
    %1374 = vmatprep.subr.mxu0 0.0
    %1375 = vmatpush1.msra.mxu0 %v441
    %1376 = vmatprep.subr.mxu0 0.0
    %1377 = vmatpush1.msra.mxu0 %v444
    %1378 = vmatprep.subr.mxu0 0.0
    %1379 = vmatpush1.msra.mxu0 %v447
    %1380 = vmatprep.subr.mxu0 0.0
    %1381 = vmatpush1.msra.mxu0 %v450
    %1382 = vmatprep.subr.mxu0 0.0
    %1383 = vmatpush1.msra.mxu0 %v453
    %1384 = vmatprep.subr.mxu0 0.0
    %1385 = vmatpush1.msra.mxu0 %v456
    %1386 = vmatprep.subr.mxu0 0.0
    %1387 = vmatpush1.msra.mxu0 %v459
    %1388 = vmatprep.subr.mxu0 0.0
    %1389 = vmatpush1.msra.mxu0 %v462
    %1390 = vmatprep.subr.mxu0 0.0
    %1391 = vmatpush1.msra.mxu0 %v465
    %1392 = vmatprep.subr.mxu0 0.0
    %1393 = vmatpush1.msra.mxu0 %v468
    %1394 = vmatprep.subr.mxu0 0.0
    %1395 = vmatpush1.msra.mxu0 %v471
    %1396 = vmatprep.subr.mxu0 0.0
    %1397 = vmatpush1.msra.mxu0 %v474
    %1398 = vmatprep.subr.mxu0 0.0
    %1399 = vmatpush1.msra.mxu0 %v477
    %1400 = vmatprep.subr.mxu0 0.0
    %1401 = vmatpush1.msra.mxu0 %v480
    %1402 = vmatprep.subr.mxu0 0.0
    %1403 = vmatpush1.msra.mxu0 0.0
    %1404 = vmatprep.subr.mxu0 0.0
    %1405 = vmatpush1.msra.mxu0 0.0
    %1406 = vmatprep.subr.mxu0 0.0
    %1407 = vmatpush1.msra.mxu0 0.0
    %1408 = vmatprep.subr.mxu0 0.0
    %1409 = vmatpush1.msra.mxu0 0.0
    %1410 = vmatprep.subr.mxu0 0.0
    %1411 = vmatpush1.msra.mxu0 0.0
    %1412 = vmatprep.subr.mxu0 0.0
    %1413 = vmatpush1.msra.mxu0 0.0
    %1414 = vmatprep.subr.mxu0 0.0
    %1415 = vmatpush1.msra.mxu0 0.0
    %1416 = vmatprep.subr.mxu0 0.0
    %1417 = vmatpush1.msra.mxu0 0.0
    %1418 = vmatprep.subr.mxu0 0.0
    %1419 = vmatpush1.msra.mxu0 0.0
    %1420 = vmatprep.subr.mxu0 0.0
    %1421 = vmatpush1.msra.mxu0 0.0
    %1422 = vmatprep.subr.mxu0 0.0
    %1423 = vmatpush1.msra.mxu0 0.0
    %1424 = vmatprep.subr.mxu0 0.0
    %1425 = vmatpush1.msra.mxu0 0.0
    %1426 = vmatprep.subr.mxu0 0.0
    %1427 = vmatpush1.msra.mxu0 0.0
    %1428 = vmatprep.subr.mxu0 0.0
    %1429 = vmatpush1.msra.mxu0 0.0
    %1430 = vmatprep.subr.mxu0 0.0
    %1431 = vmatpush1.msra.mxu0 0.0
    %1432 = vmatprep.subr.mxu0 0.0
    %1433 = vmatpush1.msra.mxu0 0.0
    %1434 = vmatprep.mubr.f32.mxu0 0.0
    %1435 = vmatmul.mubr.f32.gmra.mrb[0].mxu0 %v1298
    %v1436 = vpop.f32.mrb[0].mxu0
    %v1437 = vadd.f32 0.0, %v1436
    %v1438 = vpop.f32.mrb[0].mxu0
    %1439 = vdwg.mxu0
    %v1440 = vadd.f32 %v268, %v1366
    %v1441 = vadd.f32 %v270, %v1368
    %v1442 = vmul.f32 %v1440, 0.5
    %v1443 = vmul.f32 %v1441, 0.5
    %v1444 = vtanh.pop %v1442
    %v1445 = vtanh.pop %v1443
    %v1446 = vmul.f32 %v1444, 0.5
    %v1447 = vmul.f32 %v1445, 0.5
    %v1448 = vadd.f32 %v1446, 0.5
    %v1449 = vadd.f32 %v1447, 0.5
    %v1450 = vadd.f32 %v1437, %v486
    %v1451 = vmul.f32 %v1448, %v1450
    %v1452 = vadd.f32 %v400, %v1451
    %v1453 = vtanh.pop %v1452
    %v1454 = vsub.f32 1.0, %v1449
    %v1455 = vmul.f32 %v1454, %v1453
    %v1456 = vmul.f32 %v1449, %v1298
    %v1457 = vadd.f32 %v1455, %v1456
    %v1458 = vld [vmem:[#allocation5 + $0x28] sm:$0xff]
    %vm1459 = vcmp.ne.f32.partialorder %v1458, 0.0
    %v1460 = vsel %vm1459, %v1457, %v1298
    %1461 = vmatprep.subr.mxu0 %v434
    %1462 = vmatpush1.msra.mxu0 %v433
    %1463 = vmatprep.subr.mxu0 %v437
    %1464 = vmatpush1.msra.mxu0 %v436
    %1465 = vmatprep.subr.mxu0 %v440
    %1466 = vmatpush1.msra.mxu0 %v439
    %1467 = vmatprep.subr.mxu0 %v443
    %1468 = vmatpush1.msra.mxu0 %v442
    %1469 = vmatprep.subr.mxu0 %v446
    %1470 = vmatpush1.msra.mxu0 %v445
    %1471 = vmatprep.subr.mxu0 %v449
    %1472 = vmatpush1.msra.mxu0 %v448
    %1473 = vmatprep.subr.mxu0 %v452
    %1474 = vmatpush1.msra.mxu0 %v451
    %1475 = vmatprep.subr.mxu0 %v455
    %1476 = vmatpush1.msra.mxu0 %v454
    %1477 = vmatprep.subr.mxu0 %v458
    %1478 = vmatpush1.msra.mxu0 %v457
    %1479 = vmatprep.subr.mxu0 %v461
    %1480 = vmatpush1.msra.mxu0 %v460
    %1481 = vmatprep.subr.mxu0 %v464
    %1482 = vmatpush1.msra.mxu0 %v463
    %1483 = vmatprep.subr.mxu0 %v467
    %1484 = vmatpush1.msra.mxu0 %v466
    %1485 = vmatprep.subr.mxu0 %v470
    %1486 = vmatpush1.msra.mxu0 %v469
    %1487 = vmatprep.subr.mxu0 %v473
    %1488 = vmatpush1.msra.mxu0 %v472
    %1489 = vmatprep.subr.mxu0 %v476
    %1490 = vmatpush1.msra.mxu0 %v475
    %1491 = vmatprep.subr.mxu0 %v479
    %1492 = vmatpush1.msra.mxu0 %v478
    %1493 = vmatprep.subr.mxu0 0.0
    %1494 = vmatpush1.msra.mxu0 0.0
    %1495 = vmatprep.subr.mxu0 0.0
    %1496 = vmatpush1.msra.mxu0 0.0
    %1497 = vmatprep.subr.mxu0 0.0
    %1498 = vmatpush1.msra.mxu0 0.0
    %1499 = vmatprep.subr.mxu0 0.0
    %1500 = vmatpush1.msra.mxu0 0.0
    %1501 = vmatprep.subr.mxu0 0.0
    %1502 = vmatpush1.msra.mxu0 0.0
    %1503 = vmatprep.subr.mxu0 0.0
    %1504 = vmatpush1.msra.mxu0 0.0
    %1505 = vmatprep.subr.mxu0 0.0
    %1506 = vmatpush1.msra.mxu0 0.0
    %1507 = vmatprep.subr.mxu0 0.0
    %1508 = vmatpush1.msra.mxu0 0.0
    %1509 = vmatprep.subr.mxu0 0.0
    %1510 = vmatpush1.msra.mxu0 0.0
    %1511 = vmatprep.subr.mxu0 0.0
    %1512 = vmatpush1.msra.mxu0 0.0
    %1513 = vmatprep.subr.mxu0 0.0
    %1514 = vmatpush1.msra.mxu0 0.0
    %1515 = vmatprep.subr.mxu0 0.0
    %1516 = vmatpush1.msra.mxu0 0.0
    %1517 = vmatprep.subr.mxu0 0.0
    %1518 = vmatpush1.msra.mxu0 0.0
    %1519 = vmatprep.subr.mxu0 0.0
    %1520 = vmatpush1.msra.mxu0 0.0
    %1521 = vmatprep.subr.mxu0 0.0
    %1522 = vmatpush1.msra.mxu0 0.0
    %1523 = vmatprep.subr.mxu0 0.0
    %1524 = vmatpush1.msra.mxu0 0.0
    %1525 = vmatprep.mubr.f32.mxu0 0.0
    %1526 = vmatmul.mubr.f32.gmra.mrb[0].mxu0 %v1460
    %v1527 = vpop.f32.mrb[0].mxu0
    %v1528 = vadd.f32 0.0, %v1527
    %v1529 = vpop.f32.mrb[0].mxu0
    %v1530 = vadd.f32 0.0, %v1529
    %1531 = vdwg.mxu0
    %1532 = vmatprep.subr.mxu0 0.0
    %1533 = vmatpush1.msra.mxu0 %v435
    %1534 = vmatprep.subr.mxu0 0.0
    %1535 = vmatpush1.msra.mxu0 %v438
    %1536 = vmatprep.subr.mxu0 0.0
    %1537 = vmatpush1.msra.mxu0 %v441
    %1538 = vmatprep.subr.mxu0 0.0
    %1539 = vmatpush1.msra.mxu0 %v444
    %1540 = vmatprep.subr.mxu0 0.0
    %1541 = vmatpush1.msra.mxu0 %v447
    %1542 = vmatprep.subr.mxu0 0.0
    %1543 = vmatpush1.msra.mxu0 %v450
    %1544 = vmatprep.subr.mxu0 0.0
    %1545 = vmatpush1.msra.mxu0 %v453
    %1546 = vmatprep.subr.mxu0 0.0
    %1547 = vmatpush1.msra.mxu0 %v456
    %1548 = vmatprep.subr.mxu0 0.0
    %1549 = vmatpush1.msra.mxu0 %v459
    %1550 = vmatprep.subr.mxu0 0.0
    %1551 = vmatpush1.msra.mxu0 %v462
    %1552 = vmatprep.subr.mxu0 0.0
    %1553 = vmatpush1.msra.mxu0 %v465
    %1554 = vmatprep.subr.mxu0 0.0
    %1555 = vmatpush1.msra.mxu0 %v468
    %1556 = vmatprep.subr.mxu0 0.0
    %1557 = vmatpush1.msra.mxu0 %v471
    %1558 = vmatprep.subr.mxu0 0.0
    %1559 = vmatpush1.msra.mxu0 %v474
    %1560 = vmatprep.subr.mxu0 0.0
    %1561 = vmatpush1.msra.mxu0 %v477
    %1562 = vmatprep.subr.mxu0 0.0
    %1563 = vmatpush1.msra.mxu0 %v480
    %1564 = vmatprep.subr.mxu0 0.0
    %1565 = vmatpush1.msra.mxu0 0.0
    %1566 = vmatprep.subr.mxu0 0.0
    %1567 = vmatpush1.msra.mxu0 0.0
    %1568 = vmatprep.subr.mxu0 0.0
    %1569 = vmatpush1.msra.mxu0 0.0
    %1570 = vmatprep.subr.mxu0 0.0
    %1571 = vmatpush1.msra.mxu0 0.0
    %1572 = vmatprep.subr.mxu0 0.0
    %1573 = vmatpush1.msra.mxu0 0.0
    %1574 = vmatprep.subr.mxu0 0.0
    %1575 = vmatpush1.msra.mxu0 0.0
    %1576 = vmatprep.subr.mxu0 0.0
    %1577 = vmatpush1.msra.mxu0 0.0
    %1578 = vmatprep.subr.mxu0 0.0
    %1579 = vmatpush1.msra.mxu0 0.0
    %1580 = vmatprep.subr.mxu0 0.0
    %1581 = vmatpush1.msra.mxu0 0.0
    %1582 = vmatprep.subr.mxu0 0.0
    %1583 = vmatpush1.msra.mxu0 0.0
    %1584 = vmatprep.subr.mxu0 0.0
    %1585 = vmatpush1.msra.mxu0 0.0
    %1586 = vmatprep.subr.mxu0 0.0
    %1587 = vmatpush1.msra.mxu0 0.0
    %1588 = vmatprep.subr.mxu0 0.0
    %1589 = vmatpush1.msra.mxu0 0.0
    %1590 = vmatprep.subr.mxu0 0.0
    %1591 = vmatpush1.msra.mxu0 0.0
    %1592 = vmatprep.subr.mxu0 0.0
    %1593 = vmatpush1.msra.mxu0 0.0
    %1594 = vmatprep.subr.mxu0 0.0
    %1595 = vmatpush1.msra.mxu0 0.0
    %1596 = vmatprep.mubr.f32.mxu0 0.0
    %1597 = vmatmul.mubr.f32.gmra.mrb[0].mxu0 %v1460
    %v1598 = vpop.f32.mrb[0].mxu0
    %v1599 = vadd.f32 0.0, %v1598
    %v1600 = vpop.f32.mrb[0].mxu0
    %1601 = vdwg.mxu0
    %v1602 = vadd.f32 %v274, %v1528
    %v1603 = vadd.f32 %v276, %v1530
    %v1604 = vmul.f32 %v1602, 0.5
    %v1605 = vmul.f32 %v1603, 0.5
    %v1606 = vtanh.pop %v1604
    %v1607 = vtanh.pop %v1605
    %v1608 = vmul.f32 %v1606, 0.5
    %v1609 = vmul.f32 %v1607, 0.5
    %v1610 = vadd.f32 %v1608, 0.5
    %v1611 = vadd.f32 %v1609, 0.5
    %v1612 = vadd.f32 %v1599, %v486
    %v1613 = vmul.f32 %v1610, %v1612
    %v1614 = vadd.f32 %v405, %v1613
    %v1615 = vtanh.pop %v1614
    %v1616 = vsub.f32 1.0, %v1611
    %v1617 = vmul.f32 %v1616, %v1615
    %v1618 = vmul.f32 %v1611, %v1460
    %v1619 = vadd.f32 %v1617, %v1618
    %v1620 = vld [vmem:[#allocation5 + $0x30] sm:$0xff]
    %vm1621 = vcmp.ne.f32.partialorder %v1620, 0.0
    %v1622 = vsel %vm1621, %v1619, %v1460
    %1623 = vmatprep.subr.mxu0 %v434
    %1624 = vmatpush1.msra.mxu0 %v433
    %1625 = vmatprep.subr.mxu0 %v437
    %1626 = vmatpush1.msra.mxu0 %v436
    %1627 = vmatprep.subr.mxu0 %v440
    %1628 = vmatpush1.msra.mxu0 %v439
    %1629 = vmatprep.subr.mxu0 %v443
    %1630 = vmatpush1.msra.mxu0 %v442
    %1631 = vmatprep.subr.mxu0 %v446
    %1632 = vmatpush1.msra.mxu0 %v445
    %1633 = vmatprep.subr.mxu0 %v449
    %1634 = vmatpush1.msra.mxu0 %v448
    %1635 = vmatprep.subr.mxu0 %v452
    %1636 = vmatpush1.msra.mxu0 %v451
    %1637 = vmatprep.subr.mxu0 %v455
    %1638 = vmatpush1.msra.mxu0 %v454
    %1639 = vmatprep.subr.mxu0 %v458
    %1640 = vmatpush1.msra.mxu0 %v457
    %1641 = vmatprep.subr.mxu0 %v461
    %1642 = vmatpush1.msra.mxu0 %v460
    %1643 = vmatprep.subr.mxu0 %v464
    %1644 = vmatpush1.msra.mxu0 %v463
    %1645 = vmatprep.subr.mxu0 %v467
    %1646 = vmatpush1.msra.mxu0 %v466
    %1647 = vmatprep.subr.mxu0 %v470
    %1648 = vmatpush1.msra.mxu0 %v469
    %1649 = vmatprep.subr.mxu0 %v473
    %1650 = vmatpush1.msra.mxu0 %v472
    %1651 = vmatprep.subr.mxu0 %v476
    %1652 = vmatpush1.msra.mxu0 %v475
    %1653 = vmatprep.subr.mxu0 %v479
    %1654 = vmatpush1.msra.mxu0 %v478
    %1655 = vmatprep.subr.mxu0 0.0
    %1656 = vmatpush1.msra.mxu0 0.0
    %1657 = vmatprep.subr.mxu0 0.0
    %1658 = vmatpush1.msra.mxu0 0.0
    %1659 = vmatprep.subr.mxu0 0.0
    %1660 = vmatpush1.msra.mxu0 0.0
    %1661 = vmatprep.subr.mxu0 0.0
    %1662 = vmatpush1.msra.mxu0 0.0
    %1663 = vmatprep.subr.mxu0 0.0
    %1664 = vmatpush1.msra.mxu0 0.0
    %1665 = vmatprep.subr.mxu0 0.0
    %1666 = vmatpush1.msra.mxu0 0.0
    %1667 = vmatprep.subr.mxu0 0.0
    %1668 = vmatpush1.msra.mxu0 0.0
    %1669 = vmatprep.subr.mxu0 0.0
    %1670 = vmatpush1.msra.mxu0 0.0
    %1671 = vmatprep.subr.mxu0 0.0
    %1672 = vmatpush1.msra.mxu0 0.0
    %1673 = vmatprep.subr.mxu0 0.0
    %1674 = vmatpush1.msra.mxu0 0.0
    %1675 = vmatprep.subr.mxu0 0.0
    %1676 = vmatpush1.msra.mxu0 0.0
    %1677 = vmatprep.subr.mxu0 0.0
    %1678 = vmatpush1.msra.mxu0 0.0
    %1679 = vmatprep.subr.mxu0 0.0
    %1680 = vmatpush1.msra.mxu0 0.0
    %1681 = vmatprep.subr.mxu0 0.0
    %1682 = vmatpush1.msra.mxu0 0.0
    %1683 = vmatprep.subr.mxu0 0.0
    %1684 = vmatpush1.msra.mxu0 0.0
    %1685 = vmatprep.subr.mxu0 0.0
    %1686 = vmatpush1.msra.mxu0 0.0
    %1687 = vmatprep.mubr.f32.mxu0 0.0
    %1688 = vmatmul.mubr.f32.gmra.mrb[0].mxu0 %v1622
    %v1689 = vpop.f32.mrb[0].mxu0
    %v1690 = vadd.f32 0.0, %v1689
    %v1691 = vpop.f32.mrb[0].mxu0
    %v1692 = vadd.f32 0.0, %v1691
    %1693 = vdwg.mxu0
    %1694 = vmatprep.subr.mxu0 0.0
    %1695 = vmatpush1.msra.mxu0 %v435
    %1696 = vmatprep.subr.mxu0 0.0
    %1697 = vmatpush1.msra.mxu0 %v438
    %1698 = vmatprep.subr.mxu0 0.0
    %1699 = vmatpush1.msra.mxu0 %v441
    %1700 = vmatprep.subr.mxu0 0.0
    %1701 = vmatpush1.msra.mxu0 %v444
    %1702 = vmatprep.subr.mxu0 0.0
    %1703 = vmatpush1.msra.mxu0 %v447
    %1704 = vmatprep.subr.mxu0 0.0
    %1705 = vmatpush1.msra.mxu0 %v450
    %1706 = vmatprep.subr.mxu0 0.0
    %1707 = vmatpush1.msra.mxu0 %v453
    %1708 = vmatprep.subr.mxu0 0.0
    %1709 = vmatpush1.msra.mxu0 %v456
    %1710 = vmatprep.subr.mxu0 0.0
    %1711 = vmatpush1.msra.mxu0 %v459
    %1712 = vmatprep.subr.mxu0 0.0
    %1713 = vmatpush1.msra.mxu0 %v462
    %1714 = vmatprep.subr.mxu0 0.0
    %1715 = vmatpush1.msra.mxu0 %v465
    %1716 = vmatprep.subr.mxu0 0.0
    %1717 = vmatpush1.msra.mxu0 %v468
    %1718 = vmatprep.subr.mxu0 0.0
    %1719 = vmatpush1.msra.mxu0 %v471
    %1720 = vmatprep.subr.mxu0 0.0
    %1721 = vmatpush1.msra.mxu0 %v474
    %1722 = vmatprep.subr.mxu0 0.0
    %1723 = vmatpush1.msra.mxu0 %v477
    %1724 = vmatprep.subr.mxu0 0.0
    %1725 = vmatpush1.msra.mxu0 %v480
    %1726 = vmatprep.subr.mxu0 0.0
    %1727 = vmatpush1.msra.mxu0 0.0
    %1728 = vmatprep.subr.mxu0 0.0
    %1729 = vmatpush1.msra.mxu0 0.0
    %1730 = vmatprep.subr.mxu0 0.0
    %1731 = vmatpush1.msra.mxu0 0.0
    %1732 = vmatprep.subr.mxu0 0.0
    %1733 = vmatpush1.msra.mxu0 0.0
    %1734 = vmatprep.subr.mxu0 0.0
    %1735 = vmatpush1.msra.mxu0 0.0
    %1736 = vmatprep.subr.mxu0 0.0
    %1737 = vmatpush1.msra.mxu0 0.0
    %1738 = vmatprep.subr.mxu0 0.0
    %1739 = vmatpush1.msra.mxu0 0.0
    %1740 = vmatprep.subr.mxu0 0.0
    %1741 = vmatpush1.msra.mxu0 0.0
    %1742 = vmatprep.subr.mxu0 0.0
    %1743 = vmatpush1.msra.mxu0 0.0
    %1744 = vmatprep.subr.mxu0 0.0
    %1745 = vmatpush1.msra.mxu0 0.0
    %1746 = vmatprep.subr.mxu0 0.0
    %1747 = vmatpush1.msra.mxu0 0.0
    %1748 = vmatprep.subr.mxu0 0.0
    %1749 = vmatpush1.msra.mxu0 0.0
    %1750 = vmatprep.subr.mxu0 0.0
    %1751 = vmatpush1.msra.mxu0 0.0
    %1752 = vmatprep.subr.mxu0 0.0
    %1753 = vmatpush1.msra.mxu0 0.0
    %1754 = vmatprep.subr.mxu0 0.0
    %1755 = vmatpush1.msra.mxu0 0.0
    %1756 = vmatprep.subr.mxu0 0.0
    %1757 = vmatpush1.msra.mxu0 0.0
    %1758 = vmatprep.mubr.f32.mxu0 0.0
    %1759 = vmatmul.mubr.f32.gmra.mrb[0].mxu0 %v1622
    %v1760 = vpop.f32.mrb[0].mxu0
    %v1761 = vadd.f32 0.0, %v1760
    %v1762 = vpop.f32.mrb[0].mxu0
    %1763 = vdwg.mxu0
    %v1764 = vadd.f32 %v280, %v1690
    %v1765 = vadd.f32 %v282, %v1692
    %v1766 = vmul.f32 %v1764, 0.5
    %v1767 = vmul.f32 %v1765, 0.5
    %v1768 = vtanh.pop %v1766
    %v1769 = vtanh.pop %v1767
    %v1770 = vmul.f32 %v1768, 0.5
    %v1771 = vmul.f32 %v1769, 0.5
    %v1772 = vadd.f32 %v1770, 0.5
    %v1773 = vadd.f32 %v1771, 0.5
    %v1774 = vadd.f32 %v1761, %v486
    %v1775 = vmul.f32 %v1772, %v1774
    %v1776 = vadd.f32 %v410, %v1775
    %v1777 = vtanh.pop %v1776
    %v1778 = vsub.f32 1.0, %v1773
    %v1779 = vmul.f32 %v1778, %v1777
    %v1780 = vmul.f32 %v1773, %v1622
    %v1781 = vadd.f32 %v1779, %v1780
    %v1782 = vld [vmem:[#allocation5 + $0x38] sm:$0xff]
    %vm1783 = vcmp.ne.f32.partialorder %v1782, 0.0
    %v1784 = vsel %vm1783, %v1781, %v1622
    %1785 = vmatprep.subr.mxu0 %v434
    %1786 = vmatpush1.msra.mxu0 %v433
    %1787 = vmatprep.subr.mxu0 %v437
    %1788 = vmatpush1.msra.mxu0 %v436
    %1789 = vmatprep.subr.mxu0 %v440
    %1790 = vmatpush1.msra.mxu0 %v439
    %1791 = vmatprep.subr.mxu0 %v443
    %1792 = vmatpush1.msra.mxu0 %v442
    %1793 = vmatprep.subr.mxu0 %v446
    %1794 = vmatpush1.msra.mxu0 %v445
    %1795 = vmatprep.subr.mxu0 %v449
    %1796 = vmatpush1.msra.mxu0 %v448
    %1797 = vmatprep.subr.mxu0 %v452
    %1798 = vmatpush1.msra.mxu0 %v451
    %1799 = vmatprep.subr.mxu0 %v455
    %1800 = vmatpush1.msra.mxu0 %v454
    %1801 = vmatprep.subr.mxu0 %v458
    %1802 = vmatpush1.msra.mxu0 %v457
    %1803 = vmatprep.subr.mxu0 %v461
    %1804 = vmatpush1.msra.mxu0 %v460
    %1805 = vmatprep.subr.mxu0 %v464
    %1806 = vmatpush1.msra.mxu0 %v463
    %1807 = vmatprep.subr.mxu0 %v467
    %1808 = vmatpush1.msra.mxu0 %v466
    %1809 = vmatprep.subr.mxu0 %v470
    %1810 = vmatpush1.msra.mxu0 %v469
    %1811 = vmatprep.subr.mxu0 %v473
    %1812 = vmatpush1.msra.mxu0 %v472
    %1813 = vmatprep.subr.mxu0 %v476
    %1814 = vmatpush1.msra.mxu0 %v475
    %1815 = vmatprep.subr.mxu0 %v479
    %1816 = vmatpush1.msra.mxu0 %v478
    %1817 = vmatprep.subr.mxu0 0.0
    %1818 = vmatpush1.msra.mxu0 0.0
    %1819 = vmatprep.subr.mxu0 0.0
    %1820 = vmatpush1.msra.mxu0 0.0
    %1821 = vmatprep.subr.mxu0 0.0
    %1822 = vmatpush1.msra.mxu0 0.0
    %1823 = vmatprep.subr.mxu0 0.0
    %1824 = vmatpush1.msra.mxu0 0.0
    %1825 = vmatprep.subr.mxu0 0.0
    %1826 = vmatpush1.msra.mxu0 0.0
    %1827 = vmatprep.subr.mxu0 0.0
    %1828 = vmatpush1.msra.mxu0 0.0
    %1829 = vmatprep.subr.mxu0 0.0
    %1830 = vmatpush1.msra.mxu0 0.0
    %1831 = vmatprep.subr.mxu0 0.0
    %1832 = vmatpush1.msra.mxu0 0.0
    %1833 = vmatprep.subr.mxu0 0.0
    %1834 = vmatpush1.msra.mxu0 0.0
    %1835 = vmatprep.subr.mxu0 0.0
    %1836 = vmatpush1.msra.mxu0 0.0
    %1837 = vmatprep.subr.mxu0 0.0
    %1838 = vmatpush1.msra.mxu0 0.0
    %1839 = vmatprep.subr.mxu0 0.0
    %1840 = vmatpush1.msra.mxu0 0.0
    %1841 = vmatprep.subr.mxu0 0.0
    %1842 = vmatpush1.msra.mxu0 0.0
    %1843 = vmatprep.subr.mxu0 0.0
    %1844 = vmatpush1.msra.mxu0 0.0
    %1845 = vmatprep.subr.mxu0 0.0
    %1846 = vmatpush1.msra.mxu0 0.0
    %1847 = vmatprep.subr.mxu0 0.0
    %1848 = vmatpush1.msra.mxu0 0.0
    %1849 = vmatprep.mubr.f32.mxu0 0.0
    %1850 = vmatmul.mubr.f32.gmra.mrb[0].mxu0 %v1784
    %v1851 = vpop.f32.mrb[0].mxu0
    %v1852 = vadd.f32 0.0, %v1851
    %v1853 = vpop.f32.mrb[0].mxu0
    %v1854 = vadd.f32 0.0, %v1853
    %1855 = vdwg.mxu0
    %1856 = vmatprep.subr.mxu0 0.0
    %1857 = vmatpush1.msra.mxu0 %v435
    %1858 = vmatprep.subr.mxu0 0.0
    %1859 = vmatpush1.msra.mxu0 %v438
    %1860 = vmatprep.subr.mxu0 0.0
    %1861 = vmatpush1.msra.mxu0 %v441
    %1862 = vmatprep.subr.mxu0 0.0
    %1863 = vmatpush1.msra.mxu0 %v444
    %1864 = vmatprep.subr.mxu0 0.0
    %1865 = vmatpush1.msra.mxu0 %v447
    %1866 = vmatprep.subr.mxu0 0.0
    %1867 = vmatpush1.msra.mxu0 %v450
    %1868 = vmatprep.subr.mxu0 0.0
    %1869 = vmatpush1.msra.mxu0 %v453
    %1870 = vmatprep.subr.mxu0 0.0
    %1871 = vmatpush1.msra.mxu0 %v456
    %1872 = vmatprep.subr.mxu0 0.0
    %1873 = vmatpush1.msra.mxu0 %v459
    %1874 = vmatprep.subr.mxu0 0.0
    %1875 = vmatpush1.msra.mxu0 %v462
    %1876 = vmatprep.subr.mxu0 0.0
    %1877 = vmatpush1.msra.mxu0 %v465
    %1878 = vmatprep.subr.mxu0 0.0
    %1879 = vmatpush1.msra.mxu0 %v468
    %1880 = vmatprep.subr.mxu0 0.0
    %1881 = vmatpush1.msra.mxu0 %v471
    %1882 = vmatprep.subr.mxu0 0.0
    %1883 = vmatpush1.msra.mxu0 %v474
    %1884 = vmatprep.subr.mxu0 0.0
    %1885 = vmatpush1.msra.mxu0 %v477
    %1886 = vmatprep.subr.mxu0 0.0
    %1887 = vmatpush1.msra.mxu0 %v480
    %1888 = vmatprep.subr.mxu0 0.0
    %1889 = vmatpush1.msra.mxu0 0.0
    %1890 = vmatprep.subr.mxu0 0.0
    %1891 = vmatpush1.msra.mxu0 0.0
    %1892 = vmatprep.subr.mxu0 0.0
    %1893 = vmatpush1.msra.mxu0 0.0
    %1894 = vmatprep.subr.mxu0 0.0
    %1895 = vmatpush1.msra.mxu0 0.0
    %1896 = vmatprep.subr.mxu0 0.0
    %1897 = vmatpush1.msra.mxu0 0.0
    %1898 = vmatprep.subr.mxu0 0.0
    %1899 = vmatpush1.msra.mxu0 0.0
    %1900 = vmatprep.subr.mxu0 0.0
    %1901 = vmatpush1.msra.mxu0 0.0
    %1902 = vmatprep.subr.mxu0 0.0
    %1903 = vmatpush1.msra.mxu0 0.0
    %1904 = vmatprep.subr.mxu0 0.0
    %1905 = vmatpush1.msra.mxu0 0.0
    %1906 = vmatprep.subr.mxu0 0.0
    %1907 = vmatpush1.msra.mxu0 0.0
    %1908 = vmatprep.subr.mxu0 0.0
    %1909 = vmatpush1.msra.mxu0 0.0
    %1910 = vmatprep.subr.mxu0 0.0
    %1911 = vmatpush1.msra.mxu0 0.0
    %1912 = vmatprep.subr.mxu0 0.0
    %1913 = vmatpush1.msra.mxu0 0.0
    %1914 = vmatprep.subr.mxu0 0.0
    %1915 = vmatpush1.msra.mxu0 0.0
    %1916 = vmatprep.subr.mxu0 0.0
    %1917 = vmatpush1.msra.mxu0 0.0
    %1918 = vmatprep.subr.mxu0 0.0
    %1919 = vmatpush1.msra.mxu0 0.0
    %1920 = vmatprep.mubr.f32.mxu0 0.0
    %1921 = vmatmul.mubr.f32.gmra.mrb[0].mxu0 %v1784
    %v1922 = vpop.f32.mrb[0].mxu0
    %v1923 = vadd.f32 0.0, %v1922
    %v1924 = vpop.f32.mrb[0].mxu0
    %1925 = vdwg.mxu0
    %v1926 = vadd.f32 %v286, %v1852
    %v1927 = vadd.f32 %v288, %v1854
    %v1928 = vmul.f32 %v1926, 0.5
    %v1929 = vmul.f32 %v1927, 0.5
    %v1930 = vtanh.pop %v1928
    %v1931 = vtanh.pop %v1929
    %v1932 = vmul.f32 %v1930, 0.5
    %v1933 = vmul.f32 %v1931, 0.5
    %v1934 = vadd.f32 %v1932, 0.5
    %v1935 = vadd.f32 %v1933, 0.5
    %v1936 = vadd.f32 %v1923, %v486
    %v1937 = vmul.f32 %v1934, %v1936
    %v1938 = vadd.f32 %v415, %v1937
    %v1939 = vtanh.pop %v1938
    %v1940 = vsub.f32 1.0, %v1935
    %v1941 = vmul.f32 %v1940, %v1939
    %v1942 = vmul.f32 %v1935, %v1784
    %v1943 = vadd.f32 %v1941, %v1942
    %v1944 = vld [vmem:[#allocation5 + $0x40] sm:$0xff]
    %vm1945 = vcmp.ne.f32.partialorder %v1944, 0.0
    %v1946 = vsel %vm1945, %v1943, %v1784
    %1947 = vmatprep.subr.mxu0 %v434
    %1948 = vmatpush1.msra.mxu0 %v433
    %1949 = vmatprep.subr.mxu0 %v437
    %1950 = vmatpush1.msra.mxu0 %v436
    %1951 = vmatprep.subr.mxu0 %v440
    %1952 = vmatpush1.msra.mxu0 %v439
    %1953 = vmatprep.subr.mxu0 %v443
    %1954 = vmatpush1.msra.mxu0 %v442
    %1955 = vmatprep.subr.mxu0 %v446
    %1956 = vmatpush1.msra.mxu0 %v445
    %1957 = vmatprep.subr.mxu0 %v449
    %1958 = vmatpush1.msra.mxu0 %v448
    %1959 = vmatprep.subr.mxu0 %v452
    %1960 = vmatpush1.msra.mxu0 %v451
    %1961 = vmatprep.subr.mxu0 %v455
    %1962 = vmatpush1.msra.mxu0 %v454
    %1963 = vmatprep.subr.mxu0 %v458
    %1964 = vmatpush1.msra.mxu0 %v457
    %1965 = vmatprep.subr.mxu0 %v461
    %1966 = vmatpush1.msra.mxu0 %v460
    %1967 = vmatprep.subr.mxu0 %v464
    %1968 = vmatpush1.msra.mxu0 %v463
    %1969 = vmatprep.subr.mxu0 %v467
    %1970 = vmatpush1.msra.mxu0 %v466
    %1971 = vmatprep.subr.mxu0 %v470
    %1972 = vmatpush1.msra.mxu0 %v469
    %1973 = vmatprep.subr.mxu0 %v473
    %1974 = vmatpush1.msra.mxu0 %v472
    %1975 = vmatprep.subr.mxu0 %v476
    %1976 = vmatpush1.msra.mxu0 %v475
    %1977 = vmatprep.subr.mxu0 %v479
    %1978 = vmatpush1.msra.mxu0 %v478
    %1979 = vmatprep.subr.mxu0 0.0
    %1980 = vmatpush1.msra.mxu0 0.0
    %1981 = vmatprep.subr.mxu0 0.0
    %1982 = vmatpush1.msra.mxu0 0.0
    %1983 = vmatprep.subr.mxu0 0.0
    %1984 = vmatpush1.msra.mxu0 0.0
    %1985 = vmatprep.subr.mxu0 0.0
    %1986 = vmatpush1.msra.mxu0 0.0
    %1987 = vmatprep.subr.mxu0 0.0
    %1988 = vmatpush1.msra.mxu0 0.0
    %1989 = vmatprep.subr.mxu0 0.0
    %1990 = vmatpush1.msra.mxu0 0.0
    %1991 = vmatprep.subr.mxu0 0.0
    %1992 = vmatpush1.msra.mxu0 0.0
    %1993 = vmatprep.subr.mxu0 0.0
    %1994 = vmatpush1.msra.mxu0 0.0
    %1995 = vmatprep.subr.mxu0 0.0
    %1996 = vmatpush1.msra.mxu0 0.0
    %1997 = vmatprep.subr.mxu0 0.0
    %1998 = vmatpush1.msra.mxu0 0.0
    %1999 = vmatprep.subr.mxu0 0.0
    %2000 = vmatpush1.msra.mxu0 0.0
    %2001 = vmatprep.subr.mxu0 0.0
    %2002 = vmatpush1.msra.mxu0 0.0
    %2003 = vmatprep.subr.mxu0 0.0
    %2004 = vmatpush1.msra.mxu0 0.0
    %2005 = vmatprep.subr.mxu0 0.0
    %2006 = vmatpush1.msra.mxu0 0.0
    %2007 = vmatprep.subr.mxu0 0.0
    %2008 = vmatpush1.msra.mxu0 0.0
    %2009 = vmatprep.subr.mxu0 0.0
    %2010 = vmatpush1.msra.mxu0 0.0
    %2011 = vmatprep.mubr.f32.mxu0 0.0
    %2012 = vmatmul.mubr.f32.gmra.mrb[0].mxu0 %v1946
    %v2013 = vpop.f32.mrb[0].mxu0
    %v2014 = vadd.f32 0.0, %v2013
    %v2015 = vpop.f32.mrb[0].mxu0
    %v2016 = vadd.f32 0.0, %v2015
    %2017 = vdwg.mxu0
    %2018 = vmatprep.subr.mxu0 0.0
    %2019 = vmatpush1.msra.mxu0 %v435
    %2020 = vmatprep.subr.mxu0 0.0
    %2021 = vmatpush1.msra.mxu0 %v438
    %2022 = vmatprep.subr.mxu0 0.0
    %2023 = vmatpush1.msra.mxu0 %v441
    %2024 = vmatprep.subr.mxu0 0.0
    %2025 = vmatpush1.msra.mxu0 %v444
    %2026 = vmatprep.subr.mxu0 0.0
    %2027 = vmatpush1.msra.mxu0 %v447
    %2028 = vmatprep.subr.mxu0 0.0
    %2029 = vmatpush1.msra.mxu0 %v450
    %2030 = vmatprep.subr.mxu0 0.0
    %2031 = vmatpush1.msra.mxu0 %v453
    %2032 = vmatprep.subr.mxu0 0.0
    %2033 = vmatpush1.msra.mxu0 %v456
    %2034 = vmatprep.subr.mxu0 0.0
    %2035 = vmatpush1.msra.mxu0 %v459
    %2036 = vmatprep.subr.mxu0 0.0
    %2037 = vmatpush1.msra.mxu0 %v462
    %2038 = vmatprep.subr.mxu0 0.0
    %2039 = vmatpush1.msra.mxu0 %v465
    %2040 = vmatprep.subr.mxu0 0.0
    %2041 = vmatpush1.msra.mxu0 %v468
    %2042 = vmatprep.subr.mxu0 0.0
    %2043 = vmatpush1.msra.mxu0 %v471
    %2044 = vmatprep.subr.mxu0 0.0
    %2045 = vmatpush1.msra.mxu0 %v474
    %2046 = vmatprep.subr.mxu0 0.0
    %2047 = vmatpush1.msra.mxu0 %v477
    %2048 = vmatprep.subr.mxu0 0.0
    %2049 = vmatpush1.msra.mxu0 %v480
    %2050 = vmatprep.subr.mxu0 0.0
    %2051 = vmatpush1.msra.mxu0 0.0
    %2052 = vmatprep.subr.mxu0 0.0
    %2053 = vmatpush1.msra.mxu0 0.0
    %2054 = vmatprep.subr.mxu0 0.0
    %2055 = vmatpush1.msra.mxu0 0.0
    %2056 = vmatprep.subr.mxu0 0.0
    %2057 = vmatpush1.msra.mxu0 0.0
    %2058 = vmatprep.subr.mxu0 0.0
    %2059 = vmatpush1.msra.mxu0 0.0
    %2060 = vmatprep.subr.mxu0 0.0
    %2061 = vmatpush1.msra.mxu0 0.0
    %2062 = vmatprep.subr.mxu0 0.0
    %2063 = vmatpush1.msra.mxu0 0.0
    %2064 = vmatprep.subr.mxu0 0.0
    %2065 = vmatpush1.msra.mxu0 0.0
    %2066 = vmatprep.subr.mxu0 0.0
    %2067 = vmatpush1.msra.mxu0 0.0
    %2068 = vmatprep.subr.mxu0 0.0
    %2069 = vmatpush1.msra.mxu0 0.0
    %2070 = vmatprep.subr.mxu0 0.0
    %2071 = vmatpush1.msra.mxu0 0.0
    %2072 = vmatprep.subr.mxu0 0.0
    %2073 = vmatpush1.msra.mxu0 0.0
    %2074 = vmatprep.subr.mxu0 0.0
    %2075 = vmatpush1.msra.mxu0 0.0
    %2076 = vmatprep.subr.mxu0 0.0
    %2077 = vmatpush1.msra.mxu0 0.0
    %2078 = vmatprep.subr.mxu0 0.0
    %2079 = vmatpush1.msra.mxu0 0.0
    %2080 = vmatprep.subr.mxu0 0.0
    %2081 = vmatpush1.msra.mxu0 0.0
    %2082 = vmatprep.mubr.f32.mxu0 0.0
    %2083 = vmatmul.mubr.f32.gmra.mrb[0].mxu0 %v1946
    %v2084 = vpop.f32.mrb[0].mxu0
    %v2085 = vadd.f32 0.0, %v2084
    %v2086 = vpop.f32.mrb[0].mxu0
    %2087 = vdwg.mxu0
    %v2088 = vadd.f32 %v292, %v2014
    %v2089 = vadd.f32 %v294, %v2016
    %v2090 = vmul.f32 %v2088, 0.5
    %v2091 = vmul.f32 %v2089, 0.5
    %v2092 = vtanh.pop %v2090
    %v2093 = vtanh.pop %v2091
    %v2094 = vmul.f32 %v2092, 0.5
    %v2095 = vmul.f32 %v2093, 0.5
    %v2096 = vadd.f32 %v2094, 0.5
    %v2097 = vadd.f32 %v2095, 0.5
    %v2098 = vadd.f32 %v2085, %v486
    %v2099 = vmul.f32 %v2096, %v2098
    %v2100 = vadd.f32 %v420, %v2099
    %v2101 = vtanh.pop %v2100
    %v2102 = vsub.f32 1.0, %v2097
    %v2103 = vmul.f32 %v2102, %v2101
    %v2104 = vmul.f32 %v2097, %v1946
    %v2105 = vadd.f32 %v2103, %v2104
    %v2106 = vld [vmem:[#allocation5 + $0x48] sm:$0xff]
    %vm2107 = vcmp.ne.f32.partialorder %v2106, 0.0
    %v2108 = vsel %vm2107, %v2105, %v1946
    %2109 = vmatprep.subr.mxu0 %v434
    %2110 = vmatpush1.msra.mxu0 %v433
    %2111 = vmatprep.subr.mxu0 %v437
    %2112 = vmatpush1.msra.mxu0 %v436
    %2113 = vmatprep.subr.mxu0 %v440
    %2114 = vmatpush1.msra.mxu0 %v439
    %2115 = vmatprep.subr.mxu0 %v443
    %2116 = vmatpush1.msra.mxu0 %v442
    %2117 = vmatprep.subr.mxu0 %v446
    %2118 = vmatpush1.msra.mxu0 %v445
    %2119 = vmatprep.subr.mxu0 %v449
    %2120 = vmatpush1.msra.mxu0 %v448
    %2121 = vmatprep.subr.mxu0 %v452
    %2122 = vmatpush1.msra.mxu0 %v451
    %2123 = vmatprep.subr.mxu0 %v455
    %2124 = vmatpush1.msra.mxu0 %v454
    %2125 = vmatprep.subr.mxu0 %v458
    %2126 = vmatpush1.msra.mxu0 %v457
    %2127 = vmatprep.subr.mxu0 %v461
    %2128 = vmatpush1.msra.mxu0 %v460
    %2129 = vmatprep.subr.mxu0 %v464
    %2130 = vmatpush1.msra.mxu0 %v463
    %2131 = vmatprep.subr.mxu0 %v467
    %2132 = vmatpush1.msra.mxu0 %v466
    %2133 = vmatprep.subr.mxu0 %v470
    %2134 = vmatpush1.msra.mxu0 %v469
    %2135 = vmatprep.subr.mxu0 %v473
    %2136 = vmatpush1.msra.mxu0 %v472
    %2137 = vmatprep.subr.mxu0 %v476
    %2138 = vmatpush1.msra.mxu0 %v475
    %2139 = vmatprep.subr.mxu0 %v479
    %2140 = vmatpush1.msra.mxu0 %v478
    %2141 = vmatprep.subr.mxu0 0.0
    %2142 = vmatpush1.msra.mxu0 0.0
    %2143 = vmatprep.subr.mxu0 0.0
    %2144 = vmatpush1.msra.mxu0 0.0
    %2145 = vmatprep.subr.mxu0 0.0
    %2146 = vmatpush1.msra.mxu0 0.0
    %2147 = vmatprep.subr.mxu0 0.0
    %2148 = vmatpush1.msra.mxu0 0.0
    %2149 = vmatprep.subr.mxu0 0.0
    %2150 = vmatpush1.msra.mxu0 0.0
    %2151 = vmatprep.subr.mxu0 0.0
    %2152 = vmatpush1.msra.mxu0 0.0
    %2153 = vmatprep.subr.mxu0 0.0
    %2154 = vmatpush1.msra.mxu0 0.0
    %2155 = vmatprep.subr.mxu0 0.0
    %2156 = vmatpush1.msra.mxu0 0.0
    %2157 = vmatprep.subr.mxu0 0.0
    %2158 = vmatpush1.msra.mxu0 0.0
    %2159 = vmatprep.subr.mxu0 0.0
    %2160 = vmatpush1.msra.mxu0 0.0
    %2161 = vmatprep.subr.mxu0 0.0
    %2162 = vmatpush1.msra.mxu0 0.0
    %2163 = vmatprep.subr.mxu0 0.0
    %2164 = vmatpush1.msra.mxu0 0.0
    %2165 = vmatprep.subr.mxu0 0.0
    %2166 = vmatpush1.msra.mxu0 0.0
    %2167 = vmatprep.subr.mxu0 0.0
    %2168 = vmatpush1.msra.mxu0 0.0
    %2169 = vmatprep.subr.mxu0 0.0
    %2170 = vmatpush1.msra.mxu0 0.0
    %2171 = vmatprep.subr.mxu0 0.0
    %2172 = vmatpush1.msra.mxu0 0.0
    %2173 = vmatprep.mubr.f32.mxu0 0.0
    %2174 = vmatmul.mubr.f32.gmra.mrb[0].mxu0 %v2108
    %v2175 = vpop.f32.mrb[0].mxu0
    %v2176 = vadd.f32 0.0, %v2175
    %v2177 = vpop.f32.mrb[0].mxu0
    %v2178 = vadd.f32 0.0, %v2177
    %2179 = vdwg.mxu0
    %2180 = vmatprep.subr.mxu0 0.0
    %2181 = vmatpush1.msra.mxu0 %v435
    %2182 = vmatprep.subr.mxu0 0.0
    %2183 = vmatpush1.msra.mxu0 %v438
    %2184 = vmatprep.subr.mxu0 0.0
    %2185 = vmatpush1.msra.mxu0 %v441
    %2186 = vmatprep.subr.mxu0 0.0
    %2187 = vmatpush1.msra.mxu0 %v444
    %2188 = vmatprep.subr.mxu0 0.0
    %2189 = vmatpush1.msra.mxu0 %v447
    %2190 = vmatprep.subr.mxu0 0.0
    %2191 = vmatpush1.msra.mxu0 %v450
    %2192 = vmatprep.subr.mxu0 0.0
    %2193 = vmatpush1.msra.mxu0 %v453
    %2194 = vmatprep.subr.mxu0 0.0
    %2195 = vmatpush1.msra.mxu0 %v456
    %2196 = vmatprep.subr.mxu0 0.0
    %2197 = vmatpush1.msra.mxu0 %v459
    %2198 = vmatprep.subr.mxu0 0.0
    %2199 = vmatpush1.msra.mxu0 %v462
    %2200 = vmatprep.subr.mxu0 0.0
    %2201 = vmatpush1.msra.mxu0 %v465
    %2202 = vmatprep.subr.mxu0 0.0
    %2203 = vmatpush1.msra.mxu0 %v468
    %2204 = vmatprep.subr.mxu0 0.0
    %2205 = vmatpush1.msra.mxu0 %v471
    %2206 = vmatprep.subr.mxu0 0.0
    %2207 = vmatpush1.msra.mxu0 %v474
    %2208 = vmatprep.subr.mxu0 0.0
    %2209 = vmatpush1.msra.mxu0 %v477
    %2210 = vmatprep.subr.mxu0 0.0
    %2211 = vmatpush1.msra.mxu0 %v480
    %2212 = vmatprep.subr.mxu0 0.0
    %2213 = vmatpush1.msra.mxu0 0.0
    %2214 = vmatprep.subr.mxu0 0.0
    %2215 = vmatpush1.msra.mxu0 0.0
    %2216 = vmatprep.subr.mxu0 0.0
    %2217 = vmatpush1.msra.mxu0 0.0
    %2218 = vmatprep.subr.mxu0 0.0
    %2219 = vmatpush1.msra.mxu0 0.0
    %2220 = vmatprep.subr.mxu0 0.0
    %2221 = vmatpush1.msra.mxu0 0.0
    %2222 = vmatprep.subr.mxu0 0.0
    %2223 = vmatpush1.msra.mxu0 0.0
    %2224 = vmatprep.subr.mxu0 0.0
    %2225 = vmatpush1.msra.mxu0 0.0
    %2226 = vmatprep.subr.mxu0 0.0
    %2227 = vmatpush1.msra.mxu0 0.0
    %2228 = vmatprep.subr.mxu0 0.0
    %2229 = vmatpush1.msra.mxu0 0.0
    %2230 = vmatprep.subr.mxu0 0.0
    %2231 = vmatpush1.msra.mxu0 0.0
    %2232 = vmatprep.subr.mxu0 0.0
    %2233 = vmatpush1.msra.mxu0 0.0
    %2234 = vmatprep.subr.mxu0 0.0
    %2235 = vmatpush1.msra.mxu0 0.0
    %2236 = vmatprep.subr.mxu0 0.0
    %2237 = vmatpush1.msra.mxu0 0.0
    %2238 = vmatprep.subr.mxu0 0.0
    %2239 = vmatpush1.msra.mxu0 0.0
    %2240 = vmatprep.subr.mxu0 0.0
    %2241 = vmatpush1.msra.mxu0 0.0
    %2242 = vmatprep.subr.mxu0 0.0
    %2243 = vmatpush1.msra.mxu0 0.0
    %2244 = vmatprep.mubr.f32.mxu0 0.0
    %2245 = vmatmul.mubr.f32.gmra.mrb[0].mxu0 %v2108
    %v2246 = vpop.f32.mrb[0].mxu0
    %v2247 = vadd.f32 0.0, %v2246
    %v2248 = vpop.f32.mrb[0].mxu0
    %2249 = vdwg.mxu0
    %v2250 = vadd.f32 %v298, %v2176
    %v2251 = vadd.f32 %v300, %v2178
    %v2252 = vmul.f32 %v2250, 0.5
    %v2253 = vmul.f32 %v2251, 0.5
    %v2254 = vtanh.pop %v2252
    %v2255 = vtanh.pop %v2253
    %v2256 = vmul.f32 %v2254, 0.5
    %v2257 = vmul.f32 %v2255, 0.5
    %v2258 = vadd.f32 %v2256, 0.5
    %v2259 = vadd.f32 %v2257, 0.5
    %v2260 = vadd.f32 %v2247, %v486
    %v2261 = vmul.f32 %v2258, %v2260
    %v2262 = vadd.f32 %v425, %v2261
    %v2263 = vtanh.pop %v2262
    %v2264 = vsub.f32 1.0, %v2259
    %v2265 = vmul.f32 %v2264, %v2263
    %v2266 = vmul.f32 %v2259, %v2108
    %v2267 = vadd.f32 %v2265, %v2266
    %v2268 = vld [vmem:[#allocation5 + $0x50] sm:$0xff]
    %vm2269 = vcmp.ne.f32.partialorder %v2268, 0.0
    %v2270 = vsel %vm2269, %v2267, %v2108
    %2271 = vmatprep.subr.mxu0 %v434
    %2272 = vmatpush1.msra.mxu0 %v433
    %2273 = vmatprep.subr.mxu0 %v437
    %2274 = vmatpush1.msra.mxu0 %v436
    %2275 = vmatprep.subr.mxu0 %v440
    %2276 = vmatpush1.msra.mxu0 %v439
    %2277 = vmatprep.subr.mxu0 %v443
    %2278 = vmatpush1.msra.mxu0 %v442
    %2279 = vmatprep.subr.mxu0 %v446
    %2280 = vmatpush1.msra.mxu0 %v445
    %2281 = vmatprep.subr.mxu0 %v449
    %2282 = vmatpush1.msra.mxu0 %v448
    %2283 = vmatprep.subr.mxu0 %v452
    %2284 = vmatpush1.msra.mxu0 %v451
    %2285 = vmatprep.subr.mxu0 %v455
    %2286 = vmatpush1.msra.mxu0 %v454
    %2287 = vmatprep.subr.mxu0 %v458
    %2288 = vmatpush1.msra.mxu0 %v457
    %2289 = vmatprep.subr.mxu0 %v461
    %2290 = vmatpush1.msra.mxu0 %v460
    %2291 = vmatprep.subr.mxu0 %v464
    %2292 = vmatpush1.msra.mxu0 %v463
    %2293 = vmatprep.subr.mxu0 %v467
    %2294 = vmatpush1.msra.mxu0 %v466
    %2295 = vmatprep.subr.mxu0 %v470
    %2296 = vmatpush1.msra.mxu0 %v469
    %2297 = vmatprep.subr.mxu0 %v473
    %2298 = vmatpush1.msra.mxu0 %v472
    %2299 = vmatprep.subr.mxu0 %v476
    %2300 = vmatpush1.msra.mxu0 %v475
    %2301 = vmatprep.subr.mxu0 %v479
    %2302 = vmatpush1.msra.mxu0 %v478
    %2303 = vmatprep.subr.mxu0 0.0
    %2304 = vmatpush1.msra.mxu0 0.0
    %2305 = vmatprep.subr.mxu0 0.0
    %2306 = vmatpush1.msra.mxu0 0.0
    %2307 = vmatprep.subr.mxu0 0.0
    %2308 = vmatpush1.msra.mxu0 0.0
    %2309 = vmatprep.subr.mxu0 0.0
    %2310 = vmatpush1.msra.mxu0 0.0
    %2311 = vmatprep.subr.mxu0 0.0
    %2312 = vmatpush1.msra.mxu0 0.0
    %2313 = vmatprep.subr.mxu0 0.0
    %2314 = vmatpush1.msra.mxu0 0.0
    %2315 = vmatprep.subr.mxu0 0.0
    %2316 = vmatpush1.msra.mxu0 0.0
    %2317 = vmatprep.subr.mxu0 0.0
    %2318 = vmatpush1.msra.mxu0 0.0
    %2319 = vmatprep.subr.mxu0 0.0
    %2320 = vmatpush1.msra.mxu0 0.0
    %2321 = vmatprep.subr.mxu0 0.0
    %2322 = vmatpush1.msra.mxu0 0.0
    %2323 = vmatprep.subr.mxu0 0.0
    %2324 = vmatpush1.msra.mxu0 0.0
    %2325 = vmatprep.subr.mxu0 0.0
    %2326 = vmatpush1.msra.mxu0 0.0
    %2327 = vmatprep.subr.mxu0 0.0
    %2328 = vmatpush1.msra.mxu0 0.0
    %2329 = vmatprep.subr.mxu0 0.0
    %2330 = vmatpush1.msra.mxu0 0.0
    %2331 = vmatprep.subr.mxu0 0.0
    %2332 = vmatpush1.msra.mxu0 0.0
    %2333 = vmatprep.subr.mxu0 0.0
    %2334 = vmatpush1.msra.mxu0 0.0
    %2335 = vmatprep.mubr.f32.mxu0 0.0
    %2336 = vmatmul.mubr.f32.gmra.mrb[0].mxu0 %v2270
    %v2337 = vpop.f32.mrb[0].mxu0
    %v2338 = vadd.f32 0.0, %v2337
    %v2339 = vpop.f32.mrb[0].mxu0
    %v2340 = vadd.f32 0.0, %v2339
    %2341 = vdwg.mxu0
    %2342 = vmatprep.subr.mxu0 0.0
    %2343 = vmatpush1.msra.mxu0 %v435
    %2344 = vmatprep.subr.mxu0 0.0
    %2345 = vmatpush1.msra.mxu0 %v438
    %2346 = vmatprep.subr.mxu0 0.0
    %2347 = vmatpush1.msra.mxu0 %v441
    %2348 = vmatprep.subr.mxu0 0.0
    %2349 = vmatpush1.msra.mxu0 %v444
    %2350 = vmatprep.subr.mxu0 0.0
    %2351 = vmatpush1.msra.mxu0 %v447
    %2352 = vmatprep.subr.mxu0 0.0
    %2353 = vmatpush1.msra.mxu0 %v450
    %2354 = vmatprep.subr.mxu0 0.0
    %2355 = vmatpush1.msra.mxu0 %v453
    %2356 = vmatprep.subr.mxu0 0.0
    %2357 = vmatpush1.msra.mxu0 %v456
    %2358 = vmatprep.subr.mxu0 0.0
    %2359 = vmatpush1.msra.mxu0 %v459
    %2360 = vmatprep.subr.mxu0 0.0
    %2361 = vmatpush1.msra.mxu0 %v462
    %2362 = vmatprep.subr.mxu0 0.0
    %2363 = vmatpush1.msra.mxu0 %v465
    %2364 = vmatprep.subr.mxu0 0.0
    %2365 = vmatpush1.msra.mxu0 %v468
    %2366 = vmatprep.subr.mxu0 0.0
    %2367 = vmatpush1.msra.mxu0 %v471
    %2368 = vmatprep.subr.mxu0 0.0
    %2369 = vmatpush1.msra.mxu0 %v474
    %2370 = vmatprep.subr.mxu0 0.0
    %2371 = vmatpush1.msra.mxu0 %v477
    %2372 = vmatprep.subr.mxu0 0.0
    %2373 = vmatpush1.msra.mxu0 %v480
    %2374 = vmatprep.subr.mxu0 0.0
    %2375 = vmatpush1.msra.mxu0 0.0
    %2376 = vmatprep.subr.mxu0 0.0
    %2377 = vmatpush1.msra.mxu0 0.0
    %2378 = vmatprep.subr.mxu0 0.0
    %2379 = vmatpush1.msra.mxu0 0.0
    %2380 = vmatprep.subr.mxu0 0.0
    %2381 = vmatpush1.msra.mxu0 0.0
    %2382 = vmatprep.subr.mxu0 0.0
    %2383 = vmatpush1.msra.mxu0 0.0
    %2384 = vmatprep.subr.mxu0 0.0
    %2385 = vmatpush1.msra.mxu0 0.0
    %2386 = vmatprep.subr.mxu0 0.0
    %2387 = vmatpush1.msra.mxu0 0.0
    %2388 = vmatprep.subr.mxu0 0.0
    %2389 = vmatpush1.msra.mxu0 0.0
    %2390 = vmatprep.subr.mxu0 0.0
    %2391 = vmatpush1.msra.mxu0 0.0
    %2392 = vmatprep.subr.mxu0 0.0
    %2393 = vmatpush1.msra.mxu0 0.0
    %2394 = vmatprep.subr.mxu0 0.0
    %2395 = vmatpush1.msra.mxu0 0.0
    %2396 = vmatprep.subr.mxu0 0.0
    %2397 = vmatpush1.msra.mxu0 0.0
    %2398 = vmatprep.subr.mxu0 0.0
    %2399 = vmatpush1.msra.mxu0 0.0
    %2400 = vmatprep.subr.mxu0 0.0
    %2401 = vmatpush1.msra.mxu0 0.0
    %2402 = vmatprep.subr.mxu0 0.0
    %2403 = vmatpush1.msra.mxu0 0.0
    %2404 = vmatprep.subr.mxu0 0.0
    %2405 = vmatpush1.msra.mxu0 0.0
    %2406 = vmatprep.mubr.f32.mxu0 0.0
    %2407 = vmatmul.mubr.f32.gmra.mrb[0].mxu0 %v2270
    %v2408 = vpop.f32.mrb[0].mxu0
    %v2409 = vadd.f32 0.0, %v2408
    %v2410 = vpop.f32.mrb[0].mxu0
    %2411 = vdwg.mxu0
    %v2412 = vadd.f32 %v304, %v2338
    %v2413 = vadd.f32 %v306, %v2340
    %v2414 = vmul.f32 %v2412, 0.5
    %v2415 = vmul.f32 %v2413, 0.5
    %v2416 = vtanh.pop %v2414
    %v2417 = vtanh.pop %v2415
    %v2418 = vmul.f32 %v2416, 0.5
    %v2419 = vmul.f32 %v2417, 0.5
    %v2420 = vadd.f32 %v2418, 0.5
    %v2421 = vadd.f32 %v2419, 0.5
    %v2422 = vadd.f32 %v2409, %v486
    %v2423 = vmul.f32 %v2420, %v2422
    %v2424 = vadd.f32 %v430, %v2423
    %v2425 = vtanh.pop %v2424
    %v2426 = vsub.f32 1.0, %v2421
    %v2427 = vmul.f32 %v2426, %v2425
    %v2428 = vmul.f32 %v2421, %v2270
    %v2429 = vadd.f32 %v2427, %v2428
    %v2430 = vld [vmem:[#allocation5 + $0x58] sm:$0xff]
    %vm2431 = vcmp.ne.f32.partialorder %v2430, 0.0
    %v2432 = vsel %vm2431, %v2429, %v2270
    %2434 = vrot.lane.b32.xlu0 %v2432, 96
    %v2435 = vpop.permute.xlu0 %2434
    %v2437 = vadd.f32 %v2432, %v2435
    %2439 = vrot.lane.b32.xlu0 %v2437, 64
    %v2440 = vpop.permute.xlu0 %2439
    %v2442 = vmul.f32 %v2437, %v2440
    %v2443 = vld [vmem:[%s7] sm:$0xff]
    %v2444 = vld [vmem:[%s7 + $0x8] sm:$0xff]
    %v2445 = vld [vmem:[%s7 + $0x10] sm:$0xff]
    %v2446 = vld [vmem:[%s7 + $0x18] sm:$0xff]
    %v2447 = vld [vmem:[%s8] sm:$0x1]
    %v2449 = vlaneseq
    %v2450 = vshrl.u32 %v2449, 7
    %v2451 = vsub.s32 0, %v2450
    %v2452 = vrot.slane %v2447, %v2451
    %vm2454 = vcmask 261120
    %v2456 = vsel %vm2454, %v2442, 0
    %2458 = vmatprep.subr.mxu0 0.0
    %2459 = vmatpush1.msra.mxu0 %v2443
    %2460 = vmatprep.subr.mxu0 0.0
    %2461 = vmatpush1.msra.mxu0 %v2444
    %2462 = vmatprep.subr.mxu0 0.0
    %2463 = vmatpush1.msra.mxu0 %v2445
    %2464 = vmatprep.subr.mxu0 0.0
    %2465 = vmatpush1.msra.mxu0 %v2446
    %2466 = vmatprep.subr.mxu0 0.0
    %2467 = vmatpush1.msra.mxu0 0.0
    %2468 = vmatprep.subr.mxu0 0.0
    %2469 = vmatpush1.msra.mxu0 0.0
    %2470 = vmatprep.subr.mxu0 0.0
    %2471 = vmatpush1.msra.mxu0 0.0
    %2472 = vmatprep.subr.mxu0 0.0
    %2473 = vmatpush1.msra.mxu0 0.0
    %2474 = vmatprep.subr.mxu0 0.0
    %2475 = vmatpush1.msra.mxu0 0.0
    %2476 = vmatprep.subr.mxu0 0.0
    %2477 = vmatpush1.msra.mxu0 0.0
    %2478 = vmatprep.subr.mxu0 0.0
    %2479 = vmatpush1.msra.mxu0 0.0
    %2480 = vmatprep.subr.mxu0 0.0
    %2481 = vmatpush1.msra.mxu0 0.0
    %2482 = vmatprep.subr.mxu0 0.0
    %2483 = vmatpush1.msra.mxu0 0.0
    %2484 = vmatprep.subr.mxu0 0.0
    %2485 = vmatpush1.msra.mxu0 0.0
    %2486 = vmatprep.subr.mxu0 0.0
    %2487 = vmatpush1.msra.mxu0 0.0
    %2488 = vmatprep.subr.mxu0 0.0
    %2489 = vmatpush1.msra.mxu0 0.0
    %2490 = vmatprep.subr.mxu0 0.0
    %2491 = vmatpush1.msra.mxu0 0.0
    %2492 = vmatprep.subr.mxu0 0.0
    %2493 = vmatpush1.msra.mxu0 0.0
    %2494 = vmatprep.subr.mxu0 0.0
    %2495 = vmatpush1.msra.mxu0 0.0
    %2496 = vmatprep.subr.mxu0 0.0
    %2497 = vmatpush1.msra.mxu0 0.0
    %2498 = vmatprep.subr.mxu0 0.0
    %2499 = vmatpush1.msra.mxu0 0.0
    %2500 = vmatprep.subr.mxu0 0.0
    %2501 = vmatpush1.msra.mxu0 0.0
    %2502 = vmatprep.subr.mxu0 0.0
    %2503 = vmatpush1.msra.mxu0 0.0
    %2504 = vmatprep.subr.mxu0 0.0
    %2505 = vmatpush1.msra.mxu0 0.0
    %2506 = vmatprep.subr.mxu0 0.0
    %2507 = vmatpush1.msra.mxu0 0.0
    %2508 = vmatprep.subr.mxu0 0.0
    %2509 = vmatpush1.msra.mxu0 0.0
    %2510 = vmatprep.subr.mxu0 0.0
    %2511 = vmatpush1.msra.mxu0 0.0
    %2512 = vmatprep.subr.mxu0 0.0
    %2513 = vmatpush1.msra.mxu0 0.0
    %2514 = vmatprep.subr.mxu0 0.0
    %2515 = vmatpush1.msra.mxu0 0.0
    %2516 = vmatprep.subr.mxu0 0.0
    %2517 = vmatpush1.msra.mxu0 0.0
    %2518 = vmatprep.subr.mxu0 0.0
    %2519 = vmatpush1.msra.mxu0 0.0
    %2520 = vmatprep.subr.mxu0 0.0
    %2521 = vmatpush1.msra.mxu0 0.0
    %2522 = vmatprep.mubr.f32.mxu0 0.0
    %2523 = vmatmul.mubr.f32.gmra.mrb[0].mxu0 %v2456
    %v2524 = vpop.f32.mrb[0].mxu0
    %v2525 = vadd.f32 %v2452, %v2524
    %v2526 = vpop.f32.mrb[0].mxu0
    %2527 = vdwg.mxu0
    %v2528 = vmax.f32 %v2525, 0.0
    %v2529 = vld [vmem:[%s9] sm:$0xff]
    %v2530 = vld [vmem:[%s9 + $0x8] sm:$0xff]
    %v2531 = vld [vmem:[%s10] sm:$0x1]
    %v2533 = vlaneseq
    %v2534 = vshrl.u32 %v2533, 7
    %v2535 = vsub.s32 0, %v2534
    %v2536 = vrot.slane %v2531, %v2535
    %vm2538 = vcmask 130048
    %v2540 = vsel %vm2538, %v2528, 0
    %2542 = vmatprep.subr.mxu0 0.0
    %2543 = vmatpush1.msra.mxu0 %v2529
    %2544 = vmatprep.subr.mxu0 0.0
    %2545 = vmatpush1.msra.mxu0 %v2530
    %2546 = vmatprep.subr.mxu0 0.0
    %2547 = vmatpush1.msra.mxu0 0.0
    %2548 = vmatprep.subr.mxu0 0.0
    %2549 = vmatpush1.msra.mxu0 0.0
    %2550 = vmatprep.subr.mxu0 0.0
    %2551 = vmatpush1.msra.mxu0 0.0
    %2552 = vmatprep.subr.mxu0 0.0
    %2553 = vmatpush1.msra.mxu0 0.0
    %2554 = vmatprep.subr.mxu0 0.0
    %2555 = vmatpush1.msra.mxu0 0.0
    %2556 = vmatprep.subr.mxu0 0.0
    %2557 = vmatpush1.msra.mxu0 0.0
    %2558 = vmatprep.subr.mxu0 0.0
    %2559 = vmatpush1.msra.mxu0 0.0
    %2560 = vmatprep.subr.mxu0 0.0
    %2561 = vmatpush1.msra.mxu0 0.0
    %2562 = vmatprep.subr.mxu0 0.0
    %2563 = vmatpush1.msra.mxu0 0.0
    %2564 = vmatprep.subr.mxu0 0.0
    %2565 = vmatpush1.msra.mxu0 0.0
    %2566 = vmatprep.subr.mxu0 0.0
    %2567 = vmatpush1.msra.mxu0 0.0
    %2568 = vmatprep.subr.mxu0 0.0
    %2569 = vmatpush1.msra.mxu0 0.0
    %2570 = vmatprep.subr.mxu0 0.0
    %2571 = vmatpush1.msra.mxu0 0.0
    %2572 = vmatprep.subr.mxu0 0.0
    %2573 = vmatpush1.msra.mxu0 0.0
    %2574 = vmatprep.subr.mxu0 0.0
    %2575 = vmatpush1.msra.mxu0 0.0
    %2576 = vmatprep.subr.mxu0 0.0
    %2577 = vmatpush1.msra.mxu0 0.0
    %2578 = vmatprep.subr.mxu0 0.0
    %2579 = vmatpush1.msra.mxu0 0.0
    %2580 = vmatprep.subr.mxu0 0.0
    %2581 = vmatpush1.msra.mxu0 0.0
    %2582 = vmatprep.subr.mxu0 0.0
    %2583 = vmatpush1.msra.mxu0 0.0
    %2584 = vmatprep.subr.mxu0 0.0
    %2585 = vmatpush1.msra.mxu0 0.0
    %2586 = vmatprep.subr.mxu0 0.0
    %2587 = vmatpush1.msra.mxu0 0.0
    %2588 = vmatprep.subr.mxu0 0.0
    %2589 = vmatpush1.msra.mxu0 0.0
    %2590 = vmatprep.subr.mxu0 0.0
    %2591 = vmatpush1.msra.mxu0 0.0
    %2592 = vmatprep.subr.mxu0 0.0
    %2593 = vmatpush1.msra.mxu0 0.0
    %2594 = vmatprep.subr.mxu0 0.0
    %2595 = vmatpush1.msra.mxu0 0.0
    %2596 = vmatprep.subr.mxu0 0.0
    %2597 = vmatpush1.msra.mxu0 0.0
    %2598 = vmatprep.subr.mxu0 0.0
    %2599 = vmatpush1.msra.mxu0 0.0
    %2600 = vmatprep.subr.mxu0 0.0
    %2601 = vmatpush1.msra.mxu0 0.0
    %2602 = vmatprep.subr.mxu0 0.0
    %2603 = vmatpush1.msra.mxu0 0.0
    %2604 = vmatprep.subr.mxu0 0.0
    %2605 = vmatpush1.msra.mxu0 0.0
    %2606 = vmatprep.mubr.f32.mxu0 0.0
    %2607 = vmatmul.mubr.f32.gmra.mrb[0].mxu0 %v2540
    %v2608 = vpop.f32.mrb[0].mxu0
    %v2609 = vadd.f32 %v2536, %v2608
    %v2610 = vpop.f32.mrb[0].mxu0
    %2611 = vdwg.mxu0
    %2612 = vst [vmem:[#allocation10] sm:$0xff] %v2609
    // Predicated region
    $region62: #{tpu_custom_call.1} parent=1 // pred_check
      _
    $region63: #{tpu_custom_call.1} parent=1 // pred_check_branch
      %2614 = sbr.rel (0) target = $region65
    $region64: #{tpu_custom_call.1} parent=1 // pred_region
      %s2616 = ssub.s32 128, 128
      %2617 = vsyncadd [#allocation4], %s2616
      %s2619 = sshll.u32 [#allocation10], 4
      %s2620 = int_to_ptr.vmem [resolvable:$true] %s2619
      %2622 = dma.vmem_to_hbm [thread:$0]  %s2620, 128, %s11, [#allocation4]
    $region65: #{tpu_custom_call.1} parent=1 // pred_fallthru
      _
    // Predicated region
    $region66: #{tpu_custom_call.1} parent=1 // pred_check
      _
    $region67: #{tpu_custom_call.1} parent=1 // pred_check_branch
      %2624 = sbr.rel (0) target = $region69
    $region68: #{tpu_custom_call.1} parent=1 // pred_region
      %2625 = dma.done [#allocation4], 128
    $region69: #{tpu_custom_call.1} parent=1 // pred_fallthru
      _
    %2626 = vsyncpa [#allocation3], 1
    %2627 = vsyncpa [#allocation6], 1
    %2628 = vsyncpa [#allocation9], 1
    %2629 = vsyncpa [#allocation4], 1

</llo_original>
